<compile_context>
chip_gen: v5e
topology: v5e:2x2
jax: 0.10.0
libtpu: 0.0.40
codegen_flags: <defaults>
</compile_context>

<pallas_src>
import functools
import math

import jax
import jax.numpy as jnp
from jax.experimental import pallas as pl
from jax.experimental.pallas import tpu as pltpu


# ----------------------------------------------------------------------------
# In-kernel helpers
# ----------------------------------------------------------------------------

def _conv3x3_relu(pad_ref, w9_ref, mask_ref, *, W2, P2, A, chunk, write):
    """3x3 'same' conv + ReLU over a flat zero-padded bf16 buffer.

    pad_ref : (Cg, L2) bf16, (H2*W2) image at lane offset A, zero halos.
    w9_ref  : (9, Cout, Cg) bf16, taps ordered dy*3+dx.
    mask_ref: (2, P2) f32 — [0] kills x-1 row-wrap reads, [1] kills x+1.
    write(c0, value): store the (Cout, cs) f32 chunk at output lane offset c0.
    """
    cout = w9_ref.shape[1]
    for c0 in range(0, P2, chunk):                    # static lane tiling
        cs = min(chunk, P2 - c0)
        out = jnp.zeros((cout, cs), jnp.float32)
        for dx in range(3):
            acc = jnp.zeros((cout, cs), jnp.float32)
            for dy in range(3):
                s = A + c0 + (dy - 1) * W2 + (dx - 1)
                acc = acc + jnp.dot(w9_ref[dy * 3 + dx], pad_ref[:, s:s + cs],
                                    preferred_element_type=jnp.float32)
            if dx == 0:       # reading column x-1: invalid at x == 0
                acc = acc * mask_ref[0:1, c0:c0 + cs]
            elif dx == 2:     # reading column x+1: invalid at x == W2-1
                acc = acc * mask_ref[1:2, c0:c0 + cs]
            out = out + acc
        write(c0, jnp.maximum(out, 0.0))


def _upblock_kernel(exp_ref, ctr_ref, mask_ref, scat_ref, tw_ref, tb_ref,
                    w1_ref, w2_ref, o_ref, cat_pad, h1_pad,
                    *, H, W, A, chunk):
    f32, bf16 = jnp.float32, jnp.bfloat16
    W2, H2 = 2 * W, 2 * H
    P2 = H2 * W2
    Cin, L2 = cat_pad.shape
    Ct = tw_ref.shape[1]
    Cc = ctr_ref.shape[1]
    C1 = w1_ref.shape[1]

    # ---- zero only the halo lanes (interior is fully rewritten below).
    # Re-done every step: scratch is per-core and the parallel axis may be
    # split across TensorCores, so a program_id==0 guard would be unsafe.
    cat_pad[:, 0:A] = jnp.zeros((Cin, A), bf16)
    cat_pad[:, A + P2:L2] = jnp.zeros((Cin, L2 - A - P2), bf16)
    h1_pad[:, 0:A] = jnp.zeros((C1, A), bf16)
    h1_pad[:, A + P2:L2] = jnp.zeros((C1, L2 - A - P2), bf16)

    # ---- ConvTranspose2d(k=2, s=2) + bias, written straight into the fused
    #      concat buffer rows [0:Ct] (review: no dense scatter, no `up` temp).
    exp_bf = exp_ref[0].astype(bf16)                               # (Cin, H*W)
    subs = [jnp.dot(tw_ref[k], exp_bf,
                    preferred_element_type=f32).astype(bf16)
            for k in range(4)]                                     # (Ct, H*W)
    bias = tb_ref[...]                                             # (Ct, 1)
    for i in range(H):
        lo, hi = i * W, (i + 1) * W
        for dy in range(2):
            row = jnp.zeros((Ct, W2), f32)
            for dx in range(2):
                # column scatter j -> 2j+dx via tiny (W, 2W) 0/1 matrix
                row = row + jnp.dot(subs[2 * dy + dx][:, lo:hi], scat_ref[dx],
                                    preferred_element_type=f32)
            off = A + (2 * i + dy) * W2
            cat_pad[0:Ct, off:off + W2] = (row + bias).astype(bf16)

    # contractive half of the (never-materialized) torch.cat
    cat_pad[Ct:Ct + Cc, A:A + P2] = ctr_ref[0].astype(bf16)

    # ---- conv1 + ReLU  (single merged (Ct+Cc)-channel weight group) --------
    def write_h1(c0, v):
        h1_pad[:, A + c0:A + c0 + v.shape[1]] = v.astype(bf16)

    _conv3x3_relu(cat_pad, w1_ref, mask_ref, W2=W2, P2=P2, A=A, chunk=chunk,
                  write=write_h1)

    # ---- conv2 + ReLU --------------------------------------------------------
    def write_out(c0, v):
        o_ref[0, :, c0:c0 + v.shape[1]] = v

    _conv3x3_relu(h1_pad, w2_ref, mask_ref, W2=W2, P2=P2, A=A, chunk=chunk,
                  write=write_out)


# ----------------------------------------------------------------------------
# Wrapper (tiny weight repacks + free layout reshapes, one fused pallas_call)
# ----------------------------------------------------------------------------

def upblock_forward(params, expansive, contractive):
    """expansive: (N, Cin, H, W); contractive: (N, Cin-Cout, 2H, 2W); NCHW."""
    tw, tb = params["tw"], params["tb"]          # (Cin, Ct, 2, 2), (Ct,)
    w1, w2 = params["w1"], params["w2"]          # (C1, Cin, 3, 3), (C2, C1, 3, 3)

    N, Cin, H, W = expansive.shape
    Nc, Cc, Hc, Wc = contractive.shape
    Ct = tw.shape[1]
    C1, C2 = w1.shape[0], w2.shape[0]
    H2, W2 = 2 * H, 2 * W
    P, P2 = H * W, H2 * W2

    # TODO(synk): general F.pad alignment for diffX/diffY != 0; we require the
    # standard UNet case where contractive spatial == 2x expansive (pad no-op).
    assert (Hc, Wc) == (H2, W2) and Nc == N
    assert w1.shape[1] == Ct + Cc

    # Layout-only reshapes (zero-cost for contiguous NCHW).
    exp_flat = expansive.reshape(N, Cin, P)
    ctr_flat = contractive.reshape(N, Cc, P2)

    # Weight repacks: bf16 MXU operands, accumulation stays f32 in-kernel.
    bf16 = jnp.bfloat16
    tw4 = jnp.transpose(tw, (2, 3, 1, 0)).reshape(4, Ct, Cin).astype(bf16)
    tb2 = tb.reshape(Ct, 1).astype(jnp.float32)
    w19 = jnp.transpose(w1, (2, 3, 0, 1)).reshape(9, C1, Cin).astype(bf16)
    w29 = jnp.transpose(w2, (2, 3, 0, 1)).reshape(9, C2, C1).astype(bf16)

    # Kronecker-factored column scatter for the transposed conv:
    # low-res column j -> high-res column 2j+dx (tiny (W, 2W) 0/1 matrices
    # replacing the old O((H*W)^2) dense per-tap scatter matrices).
    j = jnp.arange(W, dtype=jnp.int32)[:, None]
    x = jnp.arange(W2, dtype=jnp.int32)[None, :]
    scat = jnp.stack([(2 * j + dx) == x for dx in range(2)]).astype(bf16)

    # Lane masks (hoisted out of the kernel) fixing the horizontal wrap-around
    # of the flattened-row layout.
    col = jnp.arange(P2, dtype=jnp.int32) % W2
    masks = jnp.stack([col != 0, col != W2 - 1]).astype(jnp.float32)

    # Flat zero-padded staging buffers: image at 128-aligned offset A with a
    # >= one-row (+1) halo of zeros on each side for the 3x3 taps.
    A = ((W2 + 1 + 127) // 128) * 128
    L2 = ((A + P2 + W2 + 1 + 127) // 128) * 128
    chunk = min(P2, 2048)          # lane tile for conv accumulators

    flops = 2 * N * (4 * Ct * Cin * P            # transposed-conv channel mix
                     + 4 * H * Ct * W * W2       # column scatters
                     + 9 * C1 * Cin * P2         # conv1
                     + 9 * C2 * C1 * P2)         # conv2
    bytes_accessed = (4 * (N * Cin * P + N * Cc * P2 + N * C2 * P2
                           + Ct + 2 * P2)
                      + 2 * (4 * Ct * Cin + 9 * C1 * Cin + 9 * C2 * C1
                             + 2 * W * W2))

    kern = functools.partial(_upblock_kernel, H=H, W=W, A=A, chunk=chunk)
    out_flat = pl.pallas_call(
        kern,
        out_shape=jax.ShapeDtypeStruct((N, C2, P2), jnp.float32),
        grid=(N,),
        in_specs=[
            pl.BlockSpec((1, Cin, P), lambda n: (n, 0, 0)),
            pl.BlockSpec((1, Cc, P2), lambda n: (n, 0, 0)),
            pl.BlockSpec((2, P2), lambda n: (0, 0)),
            pl.BlockSpec((2, W, W2), lambda n: (0, 0, 0)),
            pl.BlockSpec((4, Ct, Cin), lambda n: (0, 0, 0)),
            pl.BlockSpec((Ct, 1), lambda n: (0, 0)),
            pl.BlockSpec((9, C1, Cin), lambda n: (0, 0, 0)),
            pl.BlockSpec((9, C2, C1), lambda n: (0, 0, 0)),
        ],
        out_specs=pl.BlockSpec((1, C2, P2), lambda n: (n, 0, 0)),
        scratch_shapes=[
            pltpu.VMEM((Cin, L2), jnp.bfloat16),   # fused-concat conv1 input
            pltpu.VMEM((C1, L2), jnp.bfloat16),    # conv1 output / conv2 input
        ],
        compiler_params=pltpu.CompilerParams(
            dimension_semantics=("parallel",),       # both TCs on v7x
            vmem_limit_bytes=48 * 1024 * 1024),      # under v7x's 64 MiB VMEM
        cost_estimate=pl.CostEstimate(
            flops=flops, transcendentals=0, bytes_accessed=bytes_accessed),
    )(exp_flat, ctr_flat, masks, scat, tw4, tb2, w19, w29)

    return out_flat.reshape(N, C2, H2, W2)


# ----------------------------------------------------------------------------
# Plain-JAX reference (PyTorch conventions) for a self-check
# ----------------------------------------------------------------------------

def upblock_reference(params, expansive, contractive):
    tw, tb, w1, w2 = params["tw"], params["tb"], params["w1"], params["w2"]
    N, Cin, H, W = expansive.shape
    Ct = tw.shape[1]
    up = jnp.einsum("ncij,codx->noidjx", expansive, tw)
    up = up.reshape(N, Ct, 2 * H, 2 * W) + tb[None, :, None, None]
    x = jnp.concatenate([up, contractive], axis=1)
    dn = ("NCHW", "OIHW", "NCHW")
    x = jax.lax.conv_general_dilated(x, w1, (1, 1), ((1, 1), (1, 1)),
                                     dimension_numbers=dn)
    x = jnp.maximum(x, 0.0)
    x = jax.lax.conv_general_dilated(x, w2, (1, 1), ((1, 1), (1, 1)),
                                     dimension_numbers=dn)
    return jnp.maximum(x, 0.0)


# ----------------------------------------------------------------------------

if __name__ == "__main__":
    key = jax.random.PRNGKey(0)
    k1, k2, k3, k4, k5, k6 = jax.random.split(key, 6)

    in_channels, out_channels = 16, 8            # UpBlock(16, 8)
    N, H, W = 2, 8, 8                            # expansive spatial
    Cc = in_channels - out_channels              # skip-connection channels

    def he(k, shape, fan_in):
        return jax.random.normal(k, shape, jnp.float32) * math.sqrt(2.0 / fan_in)

    params = {
        "tw": he(k1, (in_channels, out_channels, 2, 2), 4 * in_channels),
        "tb": 0.01 * jax.random.normal(k2, (out_channels,), jnp.float32),
        "w1": he(k3, (out_channels, in_channels, 3, 3), 9 * in_channels),
        "w2": he(k4, (out_channels, out_channels, 3, 3), 9 * out_channels),
    }
    expansive = jax.random.normal(k5, (N, in_channels, H, W), jnp.float32)
    contractive = jax.random.normal(k6, (N, Cc, 2 * H, 2 * W), jnp.float32)

    out = jax.block_until_ready(
        jax.jit(upblock_forward)(params, expansive, contractive))
    assert out.shape == (N, out_channels, 2 * H, 2 * W), out.shape
    assert bool(jnp.all(jnp.isfinite(out)))

    ref = upblock_reference(params, expansive, contractive)
    assert bool(jnp.allclose(out, ref, atol=5e-2, rtol=5e-2)), \
        float(jnp.max(jnp.abs(out - ref)))
    print("KERNEL_OK")
</pallas_src>

<mosaic_0001>
module attributes {stable_mosaic.version = 11 : i64} {
  func.func @_upblock_kernel(%arg0: i32, %arg1: memref<1x16x64xf32, #tpu.memory_space<vmem>>, %arg2: memref<1x8x256xf32, #tpu.memory_space<vmem>>, %arg3: memref<2x256xf32, #tpu.memory_space<vmem>>, %arg4: memref<2x8x16xbf16, #tpu.memory_space<vmem>>, %arg5: memref<4x8x16xbf16, #tpu.memory_space<vmem>>, %arg6: memref<8x1xf32, #tpu.memory_space<vmem>>, %arg7: memref<9x8x16xbf16, #tpu.memory_space<vmem>>, %arg8: memref<9x8x8xbf16, #tpu.memory_space<vmem>>, %arg9: memref<1x8x256xf32, #tpu.memory_space<vmem>>, %arg10: memref<16x512xbf16, #tpu.memory_space<vmem>>, %arg11: memref<8x512xbf16, #tpu.memory_space<vmem>>) attributes {dimension_semantics = [#tpu.dimension_semantics<parallel>], iteration_bounds = array<i64: 2>, scalar_prefetch = 0 : i64, scratch_operands = 2 : i64, tpu.core_type = #tpu.core_type<tc>, window_params = [{transform_indices = @transform_0, window_bounds = array<i64: 1, 16, 64>}, {transform_indices = @transform_1, window_bounds = array<i64: 1, 8, 256>}, {pipeline_mode = #tpu.pipeline_mode<synchronous>, transform_indices = @transform_2, window_bounds = array<i64: 2, 256>}, {pipeline_mode = #tpu.pipeline_mode<synchronous>, transform_indices = @transform_3, window_bounds = array<i64: 2, 8, 16>}, {pipeline_mode = #tpu.pipeline_mode<synchronous>, transform_indices = @transform_4, window_bounds = array<i64: 4, 8, 16>}, {pipeline_mode = #tpu.pipeline_mode<synchronous>, transform_indices = @transform_5, window_bounds = array<i64: 8, 1>}, {pipeline_mode = #tpu.pipeline_mode<synchronous>, transform_indices = @transform_6, window_bounds = array<i64: 9, 8, 16>}, {pipeline_mode = #tpu.pipeline_mode<synchronous>, transform_indices = @transform_7, window_bounds = array<i64: 9, 8, 8>}, {transform_indices = @transform_8, window_bounds = array<i64: 1, 8, 256>}]} {
    %cst = arith.constant 0.000000e+00 : bf16
    %0 = vector.broadcast %cst : bf16 to vector<16x128xbf16>
    %c0 = arith.constant 0 : index
    %c0_0 = arith.constant 0 : index
    %1 = vector.load %arg10[%c0, %c0_0] : memref<16x512xbf16, #tpu.memory_space<vmem>>, vector<16x128xbf16>
    tpu.vector_store %arg10[%c0, %c0_0], %0 {strides = array<i32>} : memref<16x512xbf16, #tpu.memory_space<vmem>>, vector<16x128xbf16>,
    %cst_1 = arith.constant 0.000000e+00 : bf16
    %2 = vector.broadcast %cst_1 : bf16 to vector<16x128xbf16>
    %c0_2 = arith.constant 0 : index
    %c384 = arith.constant 384 : index
    %3 = vector.load %arg10[%c0_2, %c384] : memref<16x512xbf16, #tpu.memory_space<vmem>>, vector<16x128xbf16>
    tpu.vector_store %arg10[%c0_2, %c384], %2 {strides = array<i32>} : memref<16x512xbf16, #tpu.memory_space<vmem>>, vector<16x128xbf16>,
    %cst_3 = arith.constant 0.000000e+00 : bf16
    %4 = vector.broadcast %cst_3 : bf16 to vector<8x128xbf16>
    %c0_4 = arith.constant 0 : index
    %c0_5 = arith.constant 0 : index
    %5 = vector.load %arg11[%c0_4, %c0_5] : memref<8x512xbf16, #tpu.memory_space<vmem>>, vector<8x128xbf16>
    tpu.vector_store %arg11[%c0_4, %c0_5], %4 {strides = array<i32>} : memref<8x512xbf16, #tpu.memory_space<vmem>>, vector<8x128xbf16>,
    %cst_6 = arith.constant 0.000000e+00 : bf16
    %6 = vector.broadcast %cst_6 : bf16 to vector<8x128xbf16>
    %c0_7 = arith.constant 0 : index
    %c384_8 = arith.constant 384 : index
    %7 = vector.load %arg11[%c0_7, %c384_8] : memref<8x512xbf16, #tpu.memory_space<vmem>>, vector<8x128xbf16>
    tpu.vector_store %arg11[%c0_7, %c384_8], %6 {strides = array<i32>} : memref<8x512xbf16, #tpu.memory_space<vmem>>, vector<8x128xbf16>,
    %c0_9 = arith.constant 0 : index
    %c0_10 = arith.constant 0 : index
    %c0_11 = arith.constant 0 : index
    %8 = vector.load %arg1[%c0_9, %c0_10, %c0_11] : memref<1x16x64xf32, #tpu.memory_space<vmem>>, vector<1x16x64xf32>
    %9 = vector.shape_cast %8 : vector<1x16x64xf32> to vector<16x64xf32>
    %10 = arith.truncf %9 : vector<16x64xf32> to vector<16x64xbf16>
    %c0_12 = arith.constant 0 : index
    %c0_13 = arith.constant 0 : index
    %c0_14 = arith.constant 0 : index
    %11 = vector.load %arg5[%c0_12, %c0_13, %c0_14] : memref<4x8x16xbf16, #tpu.memory_space<vmem>>, vector<1x8x16xbf16>
    %12 = vector.shape_cast %11 : vector<1x8x16xbf16> to vector<8x16xbf16>
    %cst_15 = arith.constant dense<0.000000e+00> : vector<8x64xf32>
    %13 = tpu.matmul %12, %10, %cst_15 {dimension_numbers = #tpu.dot_dimension_numbers<[1], [0], [0], [1], [0, 0, 1, 1], [], []>} : vector<8x16xbf16>, vector<16x64xbf16>, vector<8x64xf32> -> vector<8x64xf32>
    %14 = arith.truncf %13 : vector<8x64xf32> to vector<8x64xbf16>
    %c1 = arith.constant 1 : index
    %c0_16 = arith.constant 0 : index
    %c0_17 = arith.constant 0 : index
    %15 = vector.load %arg5[%c1, %c0_16, %c0_17] : memref<4x8x16xbf16, #tpu.memory_space<vmem>>, vector<1x8x16xbf16>
    %16 = vector.shape_cast %15 : vector<1x8x16xbf16> to vector<8x16xbf16>
    %cst_18 = arith.constant dense<0.000000e+00> : vector<8x64xf32>
    %17 = tpu.matmul %16, %10, %cst_18 {dimension_numbers = #tpu.dot_dimension_numbers<[1], [0], [0], [1], [0, 0, 1, 1], [], []>} : vector<8x16xbf16>, vector<16x64xbf16>, vector<8x64xf32> -> vector<8x64xf32>
    %18 = arith.truncf %17 : vector<8x64xf32> to vector<8x64xbf16>
    %c2 = arith.constant 2 : index
    %c0_19 = arith.constant 0 : index
    %c0_20 = arith.constant 0 : index
    %19 = vector.load %arg5[%c2, %c0_19, %c0_20] : memref<4x8x16xbf16, #tpu.memory_space<vmem>>, vector<1x8x16xbf16>
    %20 = vector.shape_cast %19 : vector<1x8x16xbf16> to vector<8x16xbf16>
    %cst_21 = arith.constant dense<0.000000e+00> : vector<8x64xf32>
    %21 = tpu.matmul %20, %10, %cst_21 {dimension_numbers = #tpu.dot_dimension_numbers<[1], [0], [0], [1], [0, 0, 1, 1], [], []>} : vector<8x16xbf16>, vector<16x64xbf16>, vector<8x64xf32> -> vector<8x64xf32>
    %22 = arith.truncf %21 : vector<8x64xf32> to vector<8x64xbf16>
    %c3 = arith.constant 3 : index
    %c0_22 = arith.constant 0 : index
    %c0_23 = arith.constant 0 : index
    %23 = vector.load %arg5[%c3, %c0_22, %c0_23] : memref<4x8x16xbf16, #tpu.memory_space<vmem>>, vector<1x8x16xbf16>
    %24 = vector.shape_cast %23 : vector<1x8x16xbf16> to vector<8x16xbf16>
    %cst_24 = arith.constant dense<0.000000e+00> : vector<8x64xf32>
    %25 = tpu.matmul %24, %10, %cst_24 {dimension_numbers = #tpu.dot_dimension_numbers<[1], [0], [0], [1], [0, 0, 1, 1], [], []>} : vector<8x16xbf16>, vector<16x64xbf16>, vector<8x64xf32> -> vector<8x64xf32>
    %26 = arith.truncf %25 : vector<8x64xf32> to vector<8x64xbf16>
    %c0_25 = arith.constant 0 : index
    %c0_26 = arith.constant 0 : index
    %27 = vector.load %arg6[%c0_25, %c0_26] : memref<8x1xf32, #tpu.memory_space<vmem>>, vector<8x1xf32>
    %cst_27 = arith.constant 0.000000e+00 : f32
    %28 = vector.broadcast %cst_27 : f32 to vector<8x16xf32>
    %29 = vector.extract_strided_slice %14 {offsets = [0, 0], sizes = [8, 8], strides = [1, 1]} : vector<8x64xbf16> to vector<8x8xbf16>
    %c0_28 = arith.constant 0 : index
    %c0_29 = arith.constant 0 : index
    %c0_30 = arith.constant 0 : index
    %30 = vector.load %arg4[%c0_28, %c0_29, %c0_30] : memref<2x8x16xbf16, #tpu.memory_space<vmem>>, vector<1x8x16xbf16>
    %31 = vector.shape_cast %30 : vector<1x8x16xbf16> to vector<8x16xbf16>
    %cst_31 = arith.constant dense<0.000000e+00> : vector<8x16xf32>
    %32 = tpu.matmul %29, %31, %cst_31 {dimension_numbers = #tpu.dot_dimension_numbers<[1], [0], [0], [1], [0, 0, 1, 1], [], []>} : vector<8x8xbf16>, vector<8x16xbf16>, vector<8x16xf32> -> vector<8x16xf32>
    %33 = arith.addf %28, %32 : vector<8x16xf32>
    %34 = vector.extract_strided_slice %18 {offsets = [0, 0], sizes = [8, 8], strides = [1, 1]} : vector<8x64xbf16> to vector<8x8xbf16>
    %c1_32 = arith.constant 1 : index
    %c0_33 = arith.constant 0 : index
    %c0_34 = arith.constant 0 : index
    %35 = vector.load %arg4[%c1_32, %c0_33, %c0_34] : memref<2x8x16xbf16, #tpu.memory_space<vmem>>, vector<1x8x16xbf16>
    %36 = vector.shape_cast %35 : vector<1x8x16xbf16> to vector<8x16xbf16>
    %cst_35 = arith.constant dense<0.000000e+00> : vector<8x16xf32>
    %37 = tpu.matmul %34, %36, %cst_35 {dimension_numbers = #tpu.dot_dimension_numbers<[1], [0], [0], [1], [0, 0, 1, 1], [], []>} : vector<8x8xbf16>, vector<8x16xbf16>, vector<8x16xf32> -> vector<8x16xf32>
    %38 = arith.addf %33, %37 : vector<8x16xf32>
    %39 = vector.broadcast %27 : vector<8x1xf32> to vector<8x16xf32>
    %40 = arith.addf %38, %39 : vector<8x16xf32>
    %41 = arith.truncf %40 : vector<8x16xf32> to vector<8x16xbf16>
    %c0_36 = arith.constant 0 : index
    %c128 = arith.constant 128 : index
    %42 = vector.load %arg10[%c0_36, %c128] : memref<16x512xbf16, #tpu.memory_space<vmem>>, vector<8x16xbf16>
    tpu.vector_store %arg10[%c0_36, %c128], %41 {strides = array<i32>} : memref<16x512xbf16, #tpu.memory_space<vmem>>, vector<8x16xbf16>,
    %cst_37 = arith.constant 0.000000e+00 : f32
    %43 = vector.broadcast %cst_37 : f32 to vector<8x16xf32>
    %44 = vector.extract_strided_slice %22 {offsets = [0, 0], sizes = [8, 8], strides = [1, 1]} : vector<8x64xbf16> to vector<8x8xbf16>
    %c0_38 = arith.constant 0 : index
    %c0_39 = arith.constant 0 : index
    %c0_40 = arith.constant 0 : index
    %45 = vector.load %arg4[%c0_38, %c0_39, %c0_40] : memref<2x8x16xbf16, #tpu.memory_space<vmem>>, vector<1x8x16xbf16>
    %46 = vector.shape_cast %45 : vector<1x8x16xbf16> to vector<8x16xbf16>
    %cst_41 = arith.constant dense<0.000000e+00> : vector<8x16xf32>
    %47 = tpu.matmul %44, %46, %cst_41 {dimension_numbers = #tpu.dot_dimension_numbers<[1], [0], [0], [1], [0, 0, 1, 1], [], []>} : vector<8x8xbf16>, vector<8x16xbf16>, vector<8x16xf32> -> vector<8x16xf32>
    %48 = arith.addf %43, %47 : vector<8x16xf32>
    %49 = vector.extract_strided_slice %26 {offsets = [0, 0], sizes = [8, 8], strides = [1, 1]} : vector<8x64xbf16> to vector<8x8xbf16>
    %c1_42 = arith.constant 1 : index
    %c0_43 = arith.constant 0 : index
    %c0_44 = arith.constant 0 : index
    %50 = vector.load %arg4[%c1_42, %c0_43, %c0_44] : memref<2x8x16xbf16, #tpu.memory_space<vmem>>, vector<1x8x16xbf16>
    %51 = vector.shape_cast %50 : vector<1x8x16xbf16> to vector<8x16xbf16>
    %cst_45 = arith.constant dense<0.000000e+00> : vector<8x16xf32>
    %52 = tpu.matmul %49, %51, %cst_45 {dimension_numbers = #tpu.dot_dimension_numbers<[1], [0], [0], [1], [0, 0, 1, 1], [], []>} : vector<8x8xbf16>, vector<8x16xbf16>, vector<8x16xf32> -> vector<8x16xf32>
    %53 = arith.addf %48, %52 : vector<8x16xf32>
    %54 = vector.broadcast %27 : vector<8x1xf32> to vector<8x16xf32>
    %55 = arith.addf %53, %54 : vector<8x16xf32>
    %56 = arith.truncf %55 : vector<8x16xf32> to vector<8x16xbf16>
    %c0_46 = arith.constant 0 : index
    %c144 = arith.constant 144 : index
    %57 = vector.load %arg10[%c0_46, %c144] : memref<16x512xbf16, #tpu.memory_space<vmem>>, vector<8x16xbf16>
    tpu.vector_store %arg10[%c0_46, %c144], %56 {strides = array<i32>} : memref<16x512xbf16, #tpu.memory_space<vmem>>, vector<8x16xbf16>,
    %cst_47 = arith.constant 0.000000e+00 : f32
    %58 = vector.broadcast %cst_47 : f32 to vector<8x16xf32>
    %59 = vector.extract_strided_slice %14 {offsets = [0, 8], sizes = [8, 8], strides = [1, 1]} : vector<8x64xbf16> to vector<8x8xbf16>
    %c0_48 = arith.constant 0 : index
    %c0_49 = arith.constant 0 : index
    %c0_50 = arith.constant 0 : index
    %60 = vector.load %arg4[%c0_48, %c0_49, %c0_50] : memref<2x8x16xbf16, #tpu.memory_space<vmem>>, vector<1x8x16xbf16>
    %61 = vector.shape_cast %60 : vector<1x8x16xbf16> to vector<8x16xbf16>
    %cst_51 = arith.constant dense<0.000000e+00> : vector<8x16xf32>
    %62 = tpu.matmul %59, %61, %cst_51 {dimension_numbers = #tpu.dot_dimension_numbers<[1], [0], [0], [1], [0, 0, 1, 1], [], []>} : vector<8x8xbf16>, vector<8x16xbf16>, vector<8x16xf32> -> vector<8x16xf32>
    %63 = arith.addf %58, %62 : vector<8x16xf32>
    %64 = vector.extract_strided_slice %18 {offsets = [0, 8], sizes = [8, 8], strides = [1, 1]} : vector<8x64xbf16> to vector<8x8xbf16>
    %c1_52 = arith.constant 1 : index
    %c0_53 = arith.constant 0 : index
    %c0_54 = arith.constant 0 : index
    %65 = vector.load %arg4[%c1_52, %c0_53, %c0_54] : memref<2x8x16xbf16, #tpu.memory_space<vmem>>, vector<1x8x16xbf16>
    %66 = vector.shape_cast %65 : vector<1x8x16xbf16> to vector<8x16xbf16>
    %cst_55 = arith.constant dense<0.000000e+00> : vector<8x16xf32>
    %67 = tpu.matmul %64, %66, %cst_55 {dimension_numbers = #tpu.dot_dimension_numbers<[1], [0], [0], [1], [0, 0, 1, 1], [], []>} : vector<8x8xbf16>, vector<8x16xbf16>, vector<8x16xf32> -> vector<8x16xf32>
    %68 = arith.addf %63, %67 : vector<8x16xf32>
    %69 = vector.broadcast %27 : vector<8x1xf32> to vector<8x16xf32>
    %70 = arith.addf %68, %69 : vector<8x16xf32>
    %71 = arith.truncf %70 : vector<8x16xf32> to vector<8x16xbf16>
    %c0_56 = arith.constant 0 : index
    %c160 = arith.constant 160 : index
    %72 = vector.load %arg10[%c0_56, %c160] : memref<16x512xbf16, #tpu.memory_space<vmem>>, vector<8x16xbf16>
    tpu.vector_store %arg10[%c0_56, %c160], %71 {strides = array<i32>} : memref<16x512xbf16, #tpu.memory_space<vmem>>, vector<8x16xbf16>,
    %cst_57 = arith.constant 0.000000e+00 : f32
    %73 = vector.broadcast %cst_57 : f32 to vector<8x16xf32>
    %74 = vector.extract_strided_slice %22 {offsets = [0, 8], sizes = [8, 8], strides = [1, 1]} : vector<8x64xbf16> to vector<8x8xbf16>
    %c0_58 = arith.constant 0 : index
    %c0_59 = arith.constant 0 : index
    %c0_60 = arith.constant 0 : index
    %75 = vector.load %arg4[%c0_58, %c0_59, %c0_60] : memref<2x8x16xbf16, #tpu.memory_space<vmem>>, vector<1x8x16xbf16>
    %76 = vector.shape_cast %75 : vector<1x8x16xbf16> to vector<8x16xbf16>
    %cst_61 = arith.constant dense<0.000000e+00> : vector<8x16xf32>
    %77 = tpu.matmul %74, %76, %cst_61 {dimension_numbers = #tpu.dot_dimension_numbers<[1], [0], [0], [1], [0, 0, 1, 1], [], []>} : vector<8x8xbf16>, vector<8x16xbf16>, vector<8x16xf32> -> vector<8x16xf32>
    %78 = arith.addf %73, %77 : vector<8x16xf32>
    %79 = vector.extract_strided_slice %26 {offsets = [0, 8], sizes = [8, 8], strides = [1, 1]} : vector<8x64xbf16> to vector<8x8xbf16>
    %c1_62 = arith.constant 1 : index
    %c0_63 = arith.constant 0 : index
    %c0_64 = arith.constant 0 : index
    %80 = vector.load %arg4[%c1_62, %c0_63, %c0_64] : memref<2x8x16xbf16, #tpu.memory_space<vmem>>, vector<1x8x16xbf16>
    %81 = vector.shape_cast %80 : vector<1x8x16xbf16> to vector<8x16xbf16>
    %cst_65 = arith.constant dense<0.000000e+00> : vector<8x16xf32>
    %82 = tpu.matmul %79, %81, %cst_65 {dimension_numbers = #tpu.dot_dimension_numbers<[1], [0], [0], [1], [0, 0, 1, 1], [], []>} : vector<8x8xbf16>, vector<8x16xbf16>, vector<8x16xf32> -> vector<8x16xf32>
    %83 = arith.addf %78, %82 : vector<8x16xf32>
    %84 = vector.broadcast %27 : vector<8x1xf32> to vector<8x16xf32>
    %85 = arith.addf %83, %84 : vector<8x16xf32>
    %86 = arith.truncf %85 : vector<8x16xf32> to vector<8x16xbf16>
    %c0_66 = arith.constant 0 : index
    %c176 = arith.constant 176 : index
    %87 = vector.load %arg10[%c0_66, %c176] : memref<16x512xbf16, #tpu.memory_space<vmem>>, vector<8x16xbf16>
    tpu.vector_store %arg10[%c0_66, %c176], %86 {strides = array<i32>} : memref<16x512xbf16, #tpu.memory_space<vmem>>, vector<8x16xbf16>,
    %cst_67 = arith.constant 0.000000e+00 : f32
    %88 = vector.broadcast %cst_67 : f32 to vector<8x16xf32>
    %89 = vector.extract_strided_slice %14 {offsets = [0, 16], sizes = [8, 8], strides = [1, 1]} : vector<8x64xbf16> to vector<8x8xbf16>
    %c0_68 = arith.constant 0 : index
    %c0_69 = arith.constant 0 : index
    %c0_70 = arith.constant 0 : index
    %90 = vector.load %arg4[%c0_68, %c0_69, %c0_70] : memref<2x8x16xbf16, #tpu.memory_space<vmem>>, vector<1x8x16xbf16>
    %91 = vector.shape_cast %90 : vector<1x8x16xbf16> to vector<8x16xbf16>
    %cst_71 = arith.constant dense<0.000000e+00> : vector<8x16xf32>
    %92 = tpu.matmul %89, %91, %cst_71 {dimension_numbers = #tpu.dot_dimension_numbers<[1], [0], [0], [1], [0, 0, 1, 1], [], []>} : vector<8x8xbf16>, vector<8x16xbf16>, vector<8x16xf32> -> vector<8x16xf32>
    %93 = arith.addf %88, %92 : vector<8x16xf32>
    %94 = vector.extract_strided_slice %18 {offsets = [0, 16], sizes = [8, 8], strides = [1, 1]} : vector<8x64xbf16> to vector<8x8xbf16>
    %c1_72 = arith.constant 1 : index
    %c0_73 = arith.constant 0 : index
    %c0_74 = arith.constant 0 : index
    %95 = vector.load %arg4[%c1_72, %c0_73, %c0_74] : memref<2x8x16xbf16, #tpu.memory_space<vmem>>, vector<1x8x16xbf16>
    %96 = vector.shape_cast %95 : vector<1x8x16xbf16> to vector<8x16xbf16>
    %cst_75 = arith.constant dense<0.000000e+00> : vector<8x16xf32>
    %97 = tpu.matmul %94, %96, %cst_75 {dimension_numbers = #tpu.dot_dimension_numbers<[1], [0], [0], [1], [0, 0, 1, 1], [], []>} : vector<8x8xbf16>, vector<8x16xbf16>, vector<8x16xf32> -> vector<8x16xf32>
    %98 = arith.addf %93, %97 : vector<8x16xf32>
    %99 = vector.broadcast %27 : vector<8x1xf32> to vector<8x16xf32>
    %100 = arith.addf %98, %99 : vector<8x16xf32>
    %101 = arith.truncf %100 : vector<8x16xf32> to vector<8x16xbf16>
    %c0_76 = arith.constant 0 : index
    %c192 = arith.constant 192 : index
    %102 = vector.load %arg10[%c0_76, %c192] : memref<16x512xbf16, #tpu.memory_space<vmem>>, vector<8x16xbf16>
    tpu.vector_store %arg10[%c0_76, %c192], %101 {strides = array<i32>} : memref<16x512xbf16, #tpu.memory_space<vmem>>, vector<8x16xbf16>,
    %cst_77 = arith.constant 0.000000e+00 : f32
    %103 = vector.broadcast %cst_77 : f32 to vector<8x16xf32>
    %104 = vector.extract_strided_slice %22 {offsets = [0, 16], sizes = [8, 8], strides = [1, 1]} : vector<8x64xbf16> to vector<8x8xbf16>
    %c0_78 = arith.constant 0 : index
    %c0_79 = arith.constant 0 : index
    %c0_80 = arith.constant 0 : index
    %105 = vector.load %arg4[%c0_78, %c0_79, %c0_80] : memref<2x8x16xbf16, #tpu.memory_space<vmem>>, vector<1x8x16xbf16>
    %106 = vector.shape_cast %105 : vector<1x8x16xbf16> to vector<8x16xbf16>
    %cst_81 = arith.constant dense<0.000000e+00> : vector<8x16xf32>
    %107 = tpu.matmul %104, %106, %cst_81 {dimension_numbers = #tpu.dot_dimension_numbers<[1], [0], [0], [1], [0, 0, 1, 1], [], []>} : vector<8x8xbf16>, vector<8x16xbf16>, vector<8x16xf32> -> vector<8x16xf32>
    %108 = arith.addf %103, %107 : vector<8x16xf32>
    %109 = vector.extract_strided_slice %26 {offsets = [0, 16], sizes = [8, 8], strides = [1, 1]} : vector<8x64xbf16> to vector<8x8xbf16>
    %c1_82 = arith.constant 1 : index
    %c0_83 = arith.constant 0 : index
    %c0_84 = arith.constant 0 : index
    %110 = vector.load %arg4[%c1_82, %c0_83, %c0_84] : memref<2x8x16xbf16, #tpu.memory_space<vmem>>, vector<1x8x16xbf16>
    %111 = vector.shape_cast %110 : vector<1x8x16xbf16> to vector<8x16xbf16>
    %cst_85 = arith.constant dense<0.000000e+00> : vector<8x16xf32>
    %112 = tpu.matmul %109, %111, %cst_85 {dimension_numbers = #tpu.dot_dimension_numbers<[1], [0], [0], [1], [0, 0, 1, 1], [], []>} : vector<8x8xbf16>, vector<8x16xbf16>, vector<8x16xf32> -> vector<8x16xf32>
    %113 = arith.addf %108, %112 : vector<8x16xf32>
    %114 = vector.broadcast %27 : vector<8x1xf32> to vector<8x16xf32>
    %115 = arith.addf %113, %114 : vector<8x16xf32>
    %116 = arith.truncf %115 : vector<8x16xf32> to vector<8x16xbf16>
    %c0_86 = arith.constant 0 : index
    %c208 = arith.constant 208 : index
    %117 = vector.load %arg10[%c0_86, %c208] : memref<16x512xbf16, #tpu.memory_space<vmem>>, vector<8x16xbf16>
    tpu.vector_store %arg10[%c0_86, %c208], %116 {strides = array<i32>} : memref<16x512xbf16, #tpu.memory_space<vmem>>, vector<8x16xbf16>,
    %cst_87 = arith.constant 0.000000e+00 : f32
    %118 = vector.broadcast %cst_87 : f32 to vector<8x16xf32>
    %119 = vector.extract_strided_slice %14 {offsets = [0, 24], sizes = [8, 8], strides = [1, 1]} : vector<8x64xbf16> to vector<8x8xbf16>
    %c0_88 = arith.constant 0 : index
    %c0_89 = arith.constant 0 : index
    %c0_90 = arith.constant 0 : index
    %120 = vector.load %arg4[%c0_88, %c0_89, %c0_90] : memref<2x8x16xbf16, #tpu.memory_space<vmem>>, vector<1x8x16xbf16>
    %121 = vector.shape_cast %120 : vector<1x8x16xbf16> to vector<8x16xbf16>
    %cst_91 = arith.constant dense<0.000000e+00> : vector<8x16xf32>
    %122 = tpu.matmul %119, %121, %cst_91 {dimension_numbers = #tpu.dot_dimension_numbers<[1], [0], [0], [1], [0, 0, 1, 1], [], []>} : vector<8x8xbf16>, vector<8x16xbf16>, vector<8x16xf32> -> vector<8x16xf32>
    %123 = arith.addf %118, %122 : vector<8x16xf32>
    %124 = vector.extract_strided_slice %18 {offsets = [0, 24], sizes = [8, 8], strides = [1, 1]} : vector<8x64xbf16> to vector<8x8xbf16>
    %c1_92 = arith.constant 1 : index
    %c0_93 = arith.constant 0 : index
    %c0_94 = arith.constant 0 : index
    %125 = vector.load %arg4[%c1_92, %c0_93, %c0_94] : memref<2x8x16xbf16, #tpu.memory_space<vmem>>, vector<1x8x16xbf16>
    %126 = vector.shape_cast %125 : vector<1x8x16xbf16> to vector<8x16xbf16>
    %cst_95 = arith.constant dense<0.000000e+00> : vector<8x16xf32>
    %127 = tpu.matmul %124, %126, %cst_95 {dimension_numbers = #tpu.dot_dimension_numbers<[1], [0], [0], [1], [0, 0, 1, 1], [], []>} : vector<8x8xbf16>, vector<8x16xbf16>, vector<8x16xf32> -> vector<8x16xf32>
    %128 = arith.addf %123, %127 : vector<8x16xf32>
    %129 = vector.broadcast %27 : vector<8x1xf32> to vector<8x16xf32>
    %130 = arith.addf %128, %129 : vector<8x16xf32>
    %131 = arith.truncf %130 : vector<8x16xf32> to vector<8x16xbf16>
    %c0_96 = arith.constant 0 : index
    %c224 = arith.constant 224 : index
    %132 = vector.load %arg10[%c0_96, %c224] : memref<16x512xbf16, #tpu.memory_space<vmem>>, vector<8x16xbf16>
    tpu.vector_store %arg10[%c0_96, %c224], %131 {strides = array<i32>} : memref<16x512xbf16, #tpu.memory_space<vmem>>, vector<8x16xbf16>,
    %cst_97 = arith.constant 0.000000e+00 : f32
    %133 = vector.broadcast %cst_97 : f32 to vector<8x16xf32>
    %134 = vector.extract_strided_slice %22 {offsets = [0, 24], sizes = [8, 8], strides = [1, 1]} : vector<8x64xbf16> to vector<8x8xbf16>
    %c0_98 = arith.constant 0 : index
    %c0_99 = arith.constant 0 : index
    %c0_100 = arith.constant 0 : index
    %135 = vector.load %arg4[%c0_98, %c0_99, %c0_100] : memref<2x8x16xbf16, #tpu.memory_space<vmem>>, vector<1x8x16xbf16>
    %136 = vector.shape_cast %135 : vector<1x8x16xbf16> to vector<8x16xbf16>
    %cst_101 = arith.constant dense<0.000000e+00> : vector<8x16xf32>
    %137 = tpu.matmul %134, %136, %cst_101 {dimension_numbers = #tpu.dot_dimension_numbers<[1], [0], [0], [1], [0, 0, 1, 1], [], []>} : vector<8x8xbf16>, vector<8x16xbf16>, vector<8x16xf32> -> vector<8x16xf32>
    %138 = arith.addf %133, %137 : vector<8x16xf32>
    %139 = vector.extract_strided_slice %26 {offsets = [0, 24], sizes = [8, 8], strides = [1, 1]} : vector<8x64xbf16> to vector<8x8xbf16>
    %c1_102 = arith.constant 1 : index
    %c0_103 = arith.constant 0 : index
    %c0_104 = arith.constant 0 : index
    %140 = vector.load %arg4[%c1_102, %c0_103, %c0_104] : memref<2x8x16xbf16, #tpu.memory_space<vmem>>, vector<1x8x16xbf16>
    %141 = vector.shape_cast %140 : vector<1x8x16xbf16> to vector<8x16xbf16>
    %cst_105 = arith.constant dense<0.000000e+00> : vector<8x16xf32>
    %142 = tpu.matmul %139, %141, %cst_105 {dimension_numbers = #tpu.dot_dimension_numbers<[1], [0], [0], [1], [0, 0, 1, 1], [], []>} : vector<8x8xbf16>, vector<8x16xbf16>, vector<8x16xf32> -> vector<8x16xf32>
    %143 = arith.addf %138, %142 : vector<8x16xf32>
    %144 = vector.broadcast %27 : vector<8x1xf32> to vector<8x16xf32>
    %145 = arith.addf %143, %144 : vector<8x16xf32>
    %146 = arith.truncf %145 : vector<8x16xf32> to vector<8x16xbf16>
    %c0_106 = arith.constant 0 : index
    %c240 = arith.constant 240 : index
    %147 = vector.load %arg10[%c0_106, %c240] : memref<16x512xbf16, #tpu.memory_space<vmem>>, vector<8x16xbf16>
    tpu.vector_store %arg10[%c0_106, %c240], %146 {strides = array<i32>} : memref<16x512xbf16, #tpu.memory_space<vmem>>, vector<8x16xbf16>,
    %cst_107 = arith.constant 0.000000e+00 : f32
    %148 = vector.broadcast %cst_107 : f32 to vector<8x16xf32>
    %149 = vector.extract_strided_slice %14 {offsets = [0, 32], sizes = [8, 8], strides = [1, 1]} : vector<8x64xbf16> to vector<8x8xbf16>
    %c0_108 = arith.constant 0 : index
    %c0_109 = arith.constant 0 : index
    %c0_110 = arith.constant 0 : index
    %150 = vector.load %arg4[%c0_108, %c0_109, %c0_110] : memref<2x8x16xbf16, #tpu.memory_space<vmem>>, vector<1x8x16xbf16>
    %151 = vector.shape_cast %150 : vector<1x8x16xbf16> to vector<8x16xbf16>
    %cst_111 = arith.constant dense<0.000000e+00> : vector<8x16xf32>
    %152 = tpu.matmul %149, %151, %cst_111 {dimension_numbers = #tpu.dot_dimension_numbers<[1], [0], [0], [1], [0, 0, 1, 1], [], []>} : vector<8x8xbf16>, vector<8x16xbf16>, vector<8x16xf32> -> vector<8x16xf32>
    %153 = arith.addf %148, %152 : vector<8x16xf32>
    %154 = vector.extract_strided_slice %18 {offsets = [0, 32], sizes = [8, 8], strides = [1, 1]} : vector<8x64xbf16> to vector<8x8xbf16>
    %c1_112 = arith.constant 1 : index
    %c0_113 = arith.constant 0 : index
    %c0_114 = arith.constant 0 : index
    %155 = vector.load %arg4[%c1_112, %c0_113, %c0_114] : memref<2x8x16xbf16, #tpu.memory_space<vmem>>, vector<1x8x16xbf16>
    %156 = vector.shape_cast %155 : vector<1x8x16xbf16> to vector<8x16xbf16>
    %cst_115 = arith.constant dense<0.000000e+00> : vector<8x16xf32>
    %157 = tpu.matmul %154, %156, %cst_115 {dimension_numbers = #tpu.dot_dimension_numbers<[1], [0], [0], [1], [0, 0, 1, 1], [], []>} : vector<8x8xbf16>, vector<8x16xbf16>, vector<8x16xf32> -> vector<8x16xf32>
    %158 = arith.addf %153, %157 : vector<8x16xf32>
    %159 = vector.broadcast %27 : vector<8x1xf32> to vector<8x16xf32>
    %160 = arith.addf %158, %159 : vector<8x16xf32>
    %161 = arith.truncf %160 : vector<8x16xf32> to vector<8x16xbf16>
    %c0_116 = arith.constant 0 : index
    %c256 = arith.constant 256 : index
    %162 = vector.load %arg10[%c0_116, %c256] : memref<16x512xbf16, #tpu.memory_space<vmem>>, vector<8x16xbf16>
    tpu.vector_store %arg10[%c0_116, %c256], %161 {strides = array<i32>} : memref<16x512xbf16, #tpu.memory_space<vmem>>, vector<8x16xbf16>,
    %cst_117 = arith.constant 0.000000e+00 : f32
    %163 = vector.broadcast %cst_117 : f32 to vector<8x16xf32>
    %164 = vector.extract_strided_slice %22 {offsets = [0, 32], sizes = [8, 8], strides = [1, 1]} : vector<8x64xbf16> to vector<8x8xbf16>
    %c0_118 = arith.constant 0 : index
    %c0_119 = arith.constant 0 : index
    %c0_120 = arith.constant 0 : index
    %165 = vector.load %arg4[%c0_118, %c0_119, %c0_120] : memref<2x8x16xbf16, #tpu.memory_space<vmem>>, vector<1x8x16xbf16>
    %166 = vector.shape_cast %165 : vector<1x8x16xbf16> to vector<8x16xbf16>
    %cst_121 = arith.constant dense<0.000000e+00> : vector<8x16xf32>
    %167 = tpu.matmul %164, %166, %cst_121 {dimension_numbers = #tpu.dot_dimension_numbers<[1], [0], [0], [1], [0, 0, 1, 1], [], []>} : vector<8x8xbf16>, vector<8x16xbf16>, vector<8x16xf32> -> vector<8x16xf32>
    %168 = arith.addf %163, %167 : vector<8x16xf32>
    %169 = vector.extract_strided_slice %26 {offsets = [0, 32], sizes = [8, 8], strides = [1, 1]} : vector<8x64xbf16> to vector<8x8xbf16>
    %c1_122 = arith.constant 1 : index
    %c0_123 = arith.constant 0 : index
    %c0_124 = arith.constant 0 : index
    %170 = vector.load %arg4[%c1_122, %c0_123, %c0_124] : memref<2x8x16xbf16, #tpu.memory_space<vmem>>, vector<1x8x16xbf16>
    %171 = vector.shape_cast %170 : vector<1x8x16xbf16> to vector<8x16xbf16>
    %cst_125 = arith.constant dense<0.000000e+00> : vector<8x16xf32>
    %172 = tpu.matmul %169, %171, %cst_125 {dimension_numbers = #tpu.dot_dimension_numbers<[1], [0], [0], [1], [0, 0, 1, 1], [], []>} : vector<8x8xbf16>, vector<8x16xbf16>, vector<8x16xf32> -> vector<8x16xf32>
    %173 = arith.addf %168, %172 : vector<8x16xf32>
    %174 = vector.broadcast %27 : vector<8x1xf32> to vector<8x16xf32>
    %175 = arith.addf %173, %174 : vector<8x16xf32>
    %176 = arith.truncf %175 : vector<8x16xf32> to vector<8x16xbf16>
    %c0_126 = arith.constant 0 : index
    %c272 = arith.constant 272 : index
    %177 = vector.load %arg10[%c0_126, %c272] : memref<16x512xbf16, #tpu.memory_space<vmem>>, vector<8x16xbf16>
    tpu.vector_store %arg10[%c0_126, %c272], %176 {strides = array<i32>} : memref<16x512xbf16, #tpu.memory_space<vmem>>, vector<8x16xbf16>,
    %cst_127 = arith.constant 0.000000e+00 : f32
    %178 = vector.broadcast %cst_127 : f32 to vector<8x16xf32>
    %179 = vector.extract_strided_slice %14 {offsets = [0, 40], sizes = [8, 8], strides = [1, 1]} : vector<8x64xbf16> to vector<8x8xbf16>
    %c0_128 = arith.constant 0 : index
    %c0_129 = arith.constant 0 : index
    %c0_130 = arith.constant 0 : index
    %180 = vector.load %arg4[%c0_128, %c0_129, %c0_130] : memref<2x8x16xbf16, #tpu.memory_space<vmem>>, vector<1x8x16xbf16>
    %181 = vector.shape_cast %180 : vector<1x8x16xbf16> to vector<8x16xbf16>
    %cst_131 = arith.constant dense<0.000000e+00> : vector<8x16xf32>
    %182 = tpu.matmul %179, %181, %cst_131 {dimension_numbers = #tpu.dot_dimension_numbers<[1], [0], [0], [1], [0, 0, 1, 1], [], []>} : vector<8x8xbf16>, vector<8x16xbf16>, vector<8x16xf32> -> vector<8x16xf32>
    %183 = arith.addf %178, %182 : vector<8x16xf32>
    %184 = vector.extract_strided_slice %18 {offsets = [0, 40], sizes = [8, 8], strides = [1, 1]} : vector<8x64xbf16> to vector<8x8xbf16>
    %c1_132 = arith.constant 1 : index
    %c0_133 = arith.constant 0 : index
    %c0_134 = arith.constant 0 : index
    %185 = vector.load %arg4[%c1_132, %c0_133, %c0_134] : memref<2x8x16xbf16, #tpu.memory_space<vmem>>, vector<1x8x16xbf16>
    %186 = vector.shape_cast %185 : vector<1x8x16xbf16> to vector<8x16xbf16>
    %cst_135 = arith.constant dense<0.000000e+00> : vector<8x16xf32>
    %187 = tpu.matmul %184, %186, %cst_135 {dimension_numbers = #tpu.dot_dimension_numbers<[1], [0], [0], [1], [0, 0, 1, 1], [], []>} : vector<8x8xbf16>, vector<8x16xbf16>, vector<8x16xf32> -> vector<8x16xf32>
    %188 = arith.addf %183, %187 : vector<8x16xf32>
    %189 = vector.broadcast %27 : vector<8x1xf32> to vector<8x16xf32>
    %190 = arith.addf %188, %189 : vector<8x16xf32>
    %191 = arith.truncf %190 : vector<8x16xf32> to vector<8x16xbf16>
    %c0_136 = arith.constant 0 : index
    %c288 = arith.constant 288 : index
    %192 = vector.load %arg10[%c0_136, %c288] : memref<16x512xbf16, #tpu.memory_space<vmem>>, vector<8x16xbf16>
    tpu.vector_store %arg10[%c0_136, %c288], %191 {strides = array<i32>} : memref<16x512xbf16, #tpu.memory_space<vmem>>, vector<8x16xbf16>,
    %cst_137 = arith.constant 0.000000e+00 : f32
    %193 = vector.broadcast %cst_137 : f32 to vector<8x16xf32>
    %194 = vector.extract_strided_slice %22 {offsets = [0, 40], sizes = [8, 8], strides = [1, 1]} : vector<8x64xbf16> to vector<8x8xbf16>
    %c0_138 = arith.constant 0 : index
    %c0_139 = arith.constant 0 : index
    %c0_140 = arith.constant 0 : index
    %195 = vector.load %arg4[%c0_138, %c0_139, %c0_140] : memref<2x8x16xbf16, #tpu.memory_space<vmem>>, vector<1x8x16xbf16>
    %196 = vector.shape_cast %195 : vector<1x8x16xbf16> to vector<8x16xbf16>
    %cst_141 = arith.constant dense<0.000000e+00> : vector<8x16xf32>
    %197 = tpu.matmul %194, %196, %cst_141 {dimension_numbers = #tpu.dot_dimension_numbers<[1], [0], [0], [1], [0, 0, 1, 1], [], []>} : vector<8x8xbf16>, vector<8x16xbf16>, vector<8x16xf32> -> vector<8x16xf32>
    %198 = arith.addf %193, %197 : vector<8x16xf32>
    %199 = vector.extract_strided_slice %26 {offsets = [0, 40], sizes = [8, 8], strides = [1, 1]} : vector<8x64xbf16> to vector<8x8xbf16>
    %c1_142 = arith.constant 1 : index
    %c0_143 = arith.constant 0 : index
    %c0_144 = arith.constant 0 : index
    %200 = vector.load %arg4[%c1_142, %c0_143, %c0_144] : memref<2x8x16xbf16, #tpu.memory_space<vmem>>, vector<1x8x16xbf16>
    %201 = vector.shape_cast %200 : vector<1x8x16xbf16> to vector<8x16xbf16>
    %cst_145 = arith.constant dense<0.000000e+00> : vector<8x16xf32>
    %202 = tpu.matmul %199, %201, %cst_145 {dimension_numbers = #tpu.dot_dimension_numbers<[1], [0], [0], [1], [0, 0, 1, 1], [], []>} : vector<8x8xbf16>, vector<8x16xbf16>, vector<8x16xf32> -> vector<8x16xf32>
    %203 = arith.addf %198, %202 : vector<8x16xf32>
    %204 = vector.broadcast %27 : vector<8x1xf32> to vector<8x16xf32>
    %205 = arith.addf %203, %204 : vector<8x16xf32>
    %206 = arith.truncf %205 : vector<8x16xf32> to vector<8x16xbf16>
    %c0_146 = arith.constant 0 : index
    %c304 = arith.constant 304 : index
    %207 = vector.load %arg10[%c0_146, %c304] : memref<16x512xbf16, #tpu.memory_space<vmem>>, vector<8x16xbf16>
    tpu.vector_store %arg10[%c0_146, %c304], %206 {strides = array<i32>} : memref<16x512xbf16, #tpu.memory_space<vmem>>, vector<8x16xbf16>,
    %cst_147 = arith.constant 0.000000e+00 : f32
    %208 = vector.broadcast %cst_147 : f32 to vector<8x16xf32>
    %209 = vector.extract_strided_slice %14 {offsets = [0, 48], sizes = [8, 8], strides = [1, 1]} : vector<8x64xbf16> to vector<8x8xbf16>
    %c0_148 = arith.constant 0 : index
    %c0_149 = arith.constant 0 : index
    %c0_150 = arith.constant 0 : index
    %210 = vector.load %arg4[%c0_148, %c0_149, %c0_150] : memref<2x8x16xbf16, #tpu.memory_space<vmem>>, vector<1x8x16xbf16>
    %211 = vector.shape_cast %210 : vector<1x8x16xbf16> to vector<8x16xbf16>
    %cst_151 = arith.constant dense<0.000000e+00> : vector<8x16xf32>
    %212 = tpu.matmul %209, %211, %cst_151 {dimension_numbers = #tpu.dot_dimension_numbers<[1], [0], [0], [1], [0, 0, 1, 1], [], []>} : vector<8x8xbf16>, vector<8x16xbf16>, vector<8x16xf32> -> vector<8x16xf32>
    %213 = arith.addf %208, %212 : vector<8x16xf32>
    %214 = vector.extract_strided_slice %18 {offsets = [0, 48], sizes = [8, 8], strides = [1, 1]} : vector<8x64xbf16> to vector<8x8xbf16>
    %c1_152 = arith.constant 1 : index
    %c0_153 = arith.constant 0 : index
    %c0_154 = arith.constant 0 : index
    %215 = vector.load %arg4[%c1_152, %c0_153, %c0_154] : memref<2x8x16xbf16, #tpu.memory_space<vmem>>, vector<1x8x16xbf16>
    %216 = vector.shape_cast %215 : vector<1x8x16xbf16> to vector<8x16xbf16>
    %cst_155 = arith.constant dense<0.000000e+00> : vector<8x16xf32>
    %217 = tpu.matmul %214, %216, %cst_155 {dimension_numbers = #tpu.dot_dimension_numbers<[1], [0], [0], [1], [0, 0, 1, 1], [], []>} : vector<8x8xbf16>, vector<8x16xbf16>, vector<8x16xf32> -> vector<8x16xf32>
    %218 = arith.addf %213, %217 : vector<8x16xf32>
    %219 = vector.broadcast %27 : vector<8x1xf32> to vector<8x16xf32>
    %220 = arith.addf %218, %219 : vector<8x16xf32>
    %221 = arith.truncf %220 : vector<8x16xf32> to vector<8x16xbf16>
    %c0_156 = arith.constant 0 : index
    %c320 = arith.constant 320 : index
    %222 = vector.load %arg10[%c0_156, %c320] : memref<16x512xbf16, #tpu.memory_space<vmem>>, vector<8x16xbf16>
    tpu.vector_store %arg10[%c0_156, %c320], %221 {strides = array<i32>} : memref<16x512xbf16, #tpu.memory_space<vmem>>, vector<8x16xbf16>,
    %cst_157 = arith.constant 0.000000e+00 : f32
    %223 = vector.broadcast %cst_157 : f32 to vector<8x16xf32>
    %224 = vector.extract_strided_slice %22 {offsets = [0, 48], sizes = [8, 8], strides = [1, 1]} : vector<8x64xbf16> to vector<8x8xbf16>
    %c0_158 = arith.constant 0 : index
    %c0_159 = arith.constant 0 : index
    %c0_160 = arith.constant 0 : index
    %225 = vector.load %arg4[%c0_158, %c0_159, %c0_160] : memref<2x8x16xbf16, #tpu.memory_space<vmem>>, vector<1x8x16xbf16>
    %226 = vector.shape_cast %225 : vector<1x8x16xbf16> to vector<8x16xbf16>
    %cst_161 = arith.constant dense<0.000000e+00> : vector<8x16xf32>
    %227 = tpu.matmul %224, %226, %cst_161 {dimension_numbers = #tpu.dot_dimension_numbers<[1], [0], [0], [1], [0, 0, 1, 1], [], []>} : vector<8x8xbf16>, vector<8x16xbf16>, vector<8x16xf32> -> vector<8x16xf32>
    %228 = arith.addf %223, %227 : vector<8x16xf32>
    %229 = vector.extract_strided_slice %26 {offsets = [0, 48], sizes = [8, 8], strides = [1, 1]} : vector<8x64xbf16> to vector<8x8xbf16>
    %c1_162 = arith.constant 1 : index
    %c0_163 = arith.constant 0 : index
    %c0_164 = arith.constant 0 : index
    %230 = vector.load %arg4[%c1_162, %c0_163, %c0_164] : memref<2x8x16xbf16, #tpu.memory_space<vmem>>, vector<1x8x16xbf16>
    %231 = vector.shape_cast %230 : vector<1x8x16xbf16> to vector<8x16xbf16>
    %cst_165 = arith.constant dense<0.000000e+00> : vector<8x16xf32>
    %232 = tpu.matmul %229, %231, %cst_165 {dimension_numbers = #tpu.dot_dimension_numbers<[1], [0], [0], [1], [0, 0, 1, 1], [], []>} : vector<8x8xbf16>, vector<8x16xbf16>, vector<8x16xf32> -> vector<8x16xf32>
    %233 = arith.addf %228, %232 : vector<8x16xf32>
    %234 = vector.broadcast %27 : vector<8x1xf32> to vector<8x16xf32>
    %235 = arith.addf %233, %234 : vector<8x16xf32>
    %236 = arith.truncf %235 : vector<8x16xf32> to vector<8x16xbf16>
    %c0_166 = arith.constant 0 : index
    %c336 = arith.constant 336 : index
    %237 = vector.load %arg10[%c0_166, %c336] : memref<16x512xbf16, #tpu.memory_space<vmem>>, vector<8x16xbf16>
    tpu.vector_store %arg10[%c0_166, %c336], %236 {strides = array<i32>} : memref<16x512xbf16, #tpu.memory_space<vmem>>, vector<8x16xbf16>,
    %cst_167 = arith.constant 0.000000e+00 : f32
    %238 = vector.broadcast %cst_167 : f32 to vector<8x16xf32>
    %239 = vector.extract_strided_slice %14 {offsets = [0, 56], sizes = [8, 8], strides = [1, 1]} : vector<8x64xbf16> to vector<8x8xbf16>
    %c0_168 = arith.constant 0 : index
    %c0_169 = arith.constant 0 : index
    %c0_170 = arith.constant 0 : index
    %240 = vector.load %arg4[%c0_168, %c0_169, %c0_170] : memref<2x8x16xbf16, #tpu.memory_space<vmem>>, vector<1x8x16xbf16>
    %241 = vector.shape_cast %240 : vector<1x8x16xbf16> to vector<8x16xbf16>
    %cst_171 = arith.constant dense<0.000000e+00> : vector<8x16xf32>
    %242 = tpu.matmul %239, %241, %cst_171 {dimension_numbers = #tpu.dot_dimension_numbers<[1], [0], [0], [1], [0, 0, 1, 1], [], []>} : vector<8x8xbf16>, vector<8x16xbf16>, vector<8x16xf32> -> vector<8x16xf32>
    %243 = arith.addf %238, %242 : vector<8x16xf32>
    %244 = vector.extract_strided_slice %18 {offsets = [0, 56], sizes = [8, 8], strides = [1, 1]} : vector<8x64xbf16> to vector<8x8xbf16>
    %c1_172 = arith.constant 1 : index
    %c0_173 = arith.constant 0 : index
    %c0_174 = arith.constant 0 : index
    %245 = vector.load %arg4[%c1_172, %c0_173, %c0_174] : memref<2x8x16xbf16, #tpu.memory_space<vmem>>, vector<1x8x16xbf16>
    %246 = vector.shape_cast %245 : vector<1x8x16xbf16> to vector<8x16xbf16>
    %cst_175 = arith.constant dense<0.000000e+00> : vector<8x16xf32>
    %247 = tpu.matmul %244, %246, %cst_175 {dimension_numbers = #tpu.dot_dimension_numbers<[1], [0], [0], [1], [0, 0, 1, 1], [], []>} : vector<8x8xbf16>, vector<8x16xbf16>, vector<8x16xf32> -> vector<8x16xf32>
    %248 = arith.addf %243, %247 : vector<8x16xf32>
    %249 = vector.broadcast %27 : vector<8x1xf32> to vector<8x16xf32>
    %250 = arith.addf %248, %249 : vector<8x16xf32>
    %251 = arith.truncf %250 : vector<8x16xf32> to vector<8x16xbf16>
    %c0_176 = arith.constant 0 : index
    %c352 = arith.constant 352 : index
    %252 = vector.load %arg10[%c0_176, %c352] : memref<16x512xbf16, #tpu.memory_space<vmem>>, vector<8x16xbf16>
    tpu.vector_store %arg10[%c0_176, %c352], %251 {strides = array<i32>} : memref<16x512xbf16, #tpu.memory_space<vmem>>, vector<8x16xbf16>,
    %cst_177 = arith.constant 0.000000e+00 : f32
    %253 = vector.broadcast %cst_177 : f32 to vector<8x16xf32>
    %254 = vector.extract_strided_slice %22 {offsets = [0, 56], sizes = [8, 8], strides = [1, 1]} : vector<8x64xbf16> to vector<8x8xbf16>
    %c0_178 = arith.constant 0 : index
    %c0_179 = arith.constant 0 : index
    %c0_180 = arith.constant 0 : index
    %255 = vector.load %arg4[%c0_178, %c0_179, %c0_180] : memref<2x8x16xbf16, #tpu.memory_space<vmem>>, vector<1x8x16xbf16>
    %256 = vector.shape_cast %255 : vector<1x8x16xbf16> to vector<8x16xbf16>
    %cst_181 = arith.constant dense<0.000000e+00> : vector<8x16xf32>
    %257 = tpu.matmul %254, %256, %cst_181 {dimension_numbers = #tpu.dot_dimension_numbers<[1], [0], [0], [1], [0, 0, 1, 1], [], []>} : vector<8x8xbf16>, vector<8x16xbf16>, vector<8x16xf32> -> vector<8x16xf32>
    %258 = arith.addf %253, %257 : vector<8x16xf32>
    %259 = vector.extract_strided_slice %26 {offsets = [0, 56], sizes = [8, 8], strides = [1, 1]} : vector<8x64xbf16> to vector<8x8xbf16>
    %c1_182 = arith.constant 1 : index
    %c0_183 = arith.constant 0 : index
    %c0_184 = arith.constant 0 : index
    %260 = vector.load %arg4[%c1_182, %c0_183, %c0_184] : memref<2x8x16xbf16, #tpu.memory_space<vmem>>, vector<1x8x16xbf16>
    %261 = vector.shape_cast %260 : vector<1x8x16xbf16> to vector<8x16xbf16>
    %cst_185 = arith.constant dense<0.000000e+00> : vector<8x16xf32>
    %262 = tpu.matmul %259, %261, %cst_185 {dimension_numbers = #tpu.dot_dimension_numbers<[1], [0], [0], [1], [0, 0, 1, 1], [], []>} : vector<8x8xbf16>, vector<8x16xbf16>, vector<8x16xf32> -> vector<8x16xf32>
    %263 = arith.addf %258, %262 : vector<8x16xf32>
    %264 = vector.broadcast %27 : vector<8x1xf32> to vector<8x16xf32>
    %265 = arith.addf %263, %264 : vector<8x16xf32>
    %266 = arith.truncf %265 : vector<8x16xf32> to vector<8x16xbf16>
    %c0_186 = arith.constant 0 : index
    %c368 = arith.constant 368 : index
    %267 = vector.load %arg10[%c0_186, %c368] : memref<16x512xbf16, #tpu.memory_space<vmem>>, vector<8x16xbf16>
    tpu.vector_store %arg10[%c0_186, %c368], %266 {strides = array<i32>} : memref<16x512xbf16, #tpu.memory_space<vmem>>, vector<8x16xbf16>,
    %c0_187 = arith.constant 0 : index
    %c0_188 = arith.constant 0 : index
    %c0_189 = arith.constant 0 : index
    %268 = vector.load %arg2[%c0_187, %c0_188, %c0_189] : memref<1x8x256xf32, #tpu.memory_space<vmem>>, vector<1x8x256xf32>
    %269 = vector.shape_cast %268 : vector<1x8x256xf32> to vector<8x256xf32>
    %270 = arith.truncf %269 : vector<8x256xf32> to vector<8x256xbf16>
    %c8 = arith.constant 8 : index
    %c128_190 = arith.constant 128 : index
    %271 = vector.load %arg10[%c8, %c128_190] : memref<16x512xbf16, #tpu.memory_space<vmem>>, vector<8x256xbf16>
    tpu.vector_store %arg10[%c8, %c128_190], %270 {strides = array<i32>} : memref<16x512xbf16, #tpu.memory_space<vmem>>, vector<8x256xbf16>,
    %cst_191 = arith.constant 0.000000e+00 : f32
    %272 = vector.broadcast %cst_191 : f32 to vector<8x256xf32>
    %cst_192 = arith.constant 0.000000e+00 : f32
    %273 = vector.broadcast %cst_192 : f32 to vector<8x256xf32>
    %c0_193 = arith.constant 0 : index
    %c0_194 = arith.constant 0 : index
    %c0_195 = arith.constant 0 : index
    %274 = vector.load %arg7[%c0_193, %c0_194, %c0_195] : memref<9x8x16xbf16, #tpu.memory_space<vmem>>, vector<1x8x16xbf16>
    %275 = vector.shape_cast %274 : vector<1x8x16xbf16> to vector<8x16xbf16>
    %c0_196 = arith.constant 0 : index
    %c111 = arith.constant 111 : index
    %276 = vector.load %arg10[%c0_196, %c111] : memref<16x512xbf16, #tpu.memory_space<vmem>>, vector<16x256xbf16>
    %cst_197 = arith.constant dense<0.000000e+00> : vector<8x256xf32>
    %277 = tpu.matmul %275, %276, %cst_197 {dimension_numbers = #tpu.dot_dimension_numbers<[1], [0], [0], [1], [0, 0, 1, 1], [], []>} : vector<8x16xbf16>, vector<16x256xbf16>, vector<8x256xf32> -> vector<8x256xf32>
    %278 = arith.addf %273, %277 : vector<8x256xf32>
    %c3_198 = arith.constant 3 : index
    %c0_199 = arith.constant 0 : index
    %c0_200 = arith.constant 0 : index
    %279 = vector.load %arg7[%c3_198, %c0_199, %c0_200] : memref<9x8x16xbf16, #tpu.memory_space<vmem>>, vector<1x8x16xbf16>
    %280 = vector.shape_cast %279 : vector<1x8x16xbf16> to vector<8x16xbf16>
    %c0_201 = arith.constant 0 : index
    %c127 = arith.constant 127 : index
    %281 = vector.load %arg10[%c0_201, %c127] : memref<16x512xbf16, #tpu.memory_space<vmem>>, vector<16x256xbf16>
    %cst_202 = arith.constant dense<0.000000e+00> : vector<8x256xf32>
    %282 = tpu.matmul %280, %281, %cst_202 {dimension_numbers = #tpu.dot_dimension_numbers<[1], [0], [0], [1], [0, 0, 1, 1], [], []>} : vector<8x16xbf16>, vector<16x256xbf16>, vector<8x256xf32> -> vector<8x256xf32>
    %283 = arith.addf %278, %282 : vector<8x256xf32>
    %c6 = arith.constant 6 : index
    %c0_203 = arith.constant 0 : index
    %c0_204 = arith.constant 0 : index
    %284 = vector.load %arg7[%c6, %c0_203, %c0_204] : memref<9x8x16xbf16, #tpu.memory_space<vmem>>, vector<1x8x16xbf16>
    %285 = vector.shape_cast %284 : vector<1x8x16xbf16> to vector<8x16xbf16>
    %c0_205 = arith.constant 0 : index
    %c143 = arith.constant 143 : index
    %286 = vector.load %arg10[%c0_205, %c143] : memref<16x512xbf16, #tpu.memory_space<vmem>>, vector<16x256xbf16>
    %cst_206 = arith.constant dense<0.000000e+00> : vector<8x256xf32>
    %287 = tpu.matmul %285, %286, %cst_206 {dimension_numbers = #tpu.dot_dimension_numbers<[1], [0], [0], [1], [0, 0, 1, 1], [], []>} : vector<8x16xbf16>, vector<16x256xbf16>, vector<8x256xf32> -> vector<8x256xf32>
    %288 = arith.addf %283, %287 : vector<8x256xf32>
    %c0_207 = arith.constant 0 : index
    %c0_208 = arith.constant 0 : index
    %289 = vector.load %arg3[%c0_207, %c0_208] : memref<2x256xf32, #tpu.memory_space<vmem>>, vector<1x256xf32>
    %290 = vector.broadcast %289 : vector<1x256xf32> to vector<8x256xf32>
    %291 = arith.mulf %288, %290 : vector<8x256xf32>
    %292 = arith.addf %272, %291 : vector<8x256xf32>
    %cst_209 = arith.constant 0.000000e+00 : f32
    %293 = vector.broadcast %cst_209 : f32 to vector<8x256xf32>
    %c1_210 = arith.constant 1 : index
    %c0_211 = arith.constant 0 : index
    %c0_212 = arith.constant 0 : index
    %294 = vector.load %arg7[%c1_210, %c0_211, %c0_212] : memref<9x8x16xbf16, #tpu.memory_space<vmem>>, vector<1x8x16xbf16>
    %295 = vector.shape_cast %294 : vector<1x8x16xbf16> to vector<8x16xbf16>
    %c0_213 = arith.constant 0 : index
    %c112 = arith.constant 112 : index
    %296 = vector.load %arg10[%c0_213, %c112] : memref<16x512xbf16, #tpu.memory_space<vmem>>, vector<16x256xbf16>
    %cst_214 = arith.constant dense<0.000000e+00> : vector<8x256xf32>
    %297 = tpu.matmul %295, %296, %cst_214 {dimension_numbers = #tpu.dot_dimension_numbers<[1], [0], [0], [1], [0, 0, 1, 1], [], []>} : vector<8x16xbf16>, vector<16x256xbf16>, vector<8x256xf32> -> vector<8x256xf32>
    %298 = arith.addf %293, %297 : vector<8x256xf32>
    %c4 = arith.constant 4 : index
    %c0_215 = arith.constant 0 : index
    %c0_216 = arith.constant 0 : index
    %299 = vector.load %arg7[%c4, %c0_215, %c0_216] : memref<9x8x16xbf16, #tpu.memory_space<vmem>>, vector<1x8x16xbf16>
    %300 = vector.shape_cast %299 : vector<1x8x16xbf16> to vector<8x16xbf16>
    %c0_217 = arith.constant 0 : index
    %c128_218 = arith.constant 128 : index
    %301 = vector.load %arg10[%c0_217, %c128_218] : memref<16x512xbf16, #tpu.memory_space<vmem>>, vector<16x256xbf16>
    %cst_219 = arith.constant dense<0.000000e+00> : vector<8x256xf32>
    %302 = tpu.matmul %300, %301, %cst_219 {dimension_numbers = #tpu.dot_dimension_numbers<[1], [0], [0], [1], [0, 0, 1, 1], [], []>} : vector<8x16xbf16>, vector<16x256xbf16>, vector<8x256xf32> -> vector<8x256xf32>
    %303 = arith.addf %298, %302 : vector<8x256xf32>
    %c7 = arith.constant 7 : index
    %c0_220 = arith.constant 0 : index
    %c0_221 = arith.constant 0 : index
    %304 = vector.load %arg7[%c7, %c0_220, %c0_221] : memref<9x8x16xbf16, #tpu.memory_space<vmem>>, vector<1x8x16xbf16>
    %305 = vector.shape_cast %304 : vector<1x8x16xbf16> to vector<8x16xbf16>
    %c0_222 = arith.constant 0 : index
    %c144_223 = arith.constant 144 : index
    %306 = vector.load %arg10[%c0_222, %c144_223] : memref<16x512xbf16, #tpu.memory_space<vmem>>, vector<16x256xbf16>
    %cst_224 = arith.constant dense<0.000000e+00> : vector<8x256xf32>
    %307 = tpu.matmul %305, %306, %cst_224 {dimension_numbers = #tpu.dot_dimension_numbers<[1], [0], [0], [1], [0, 0, 1, 1], [], []>} : vector<8x16xbf16>, vector<16x256xbf16>, vector<8x256xf32> -> vector<8x256xf32>
    %308 = arith.addf %303, %307 : vector<8x256xf32>
    %309 = arith.addf %292, %308 : vector<8x256xf32>
    %cst_225 = arith.constant 0.000000e+00 : f32
    %310 = vector.broadcast %cst_225 : f32 to vector<8x256xf32>
    %c2_226 = arith.constant 2 : index
    %c0_227 = arith.constant 0 : index
    %c0_228 = arith.constant 0 : index
    %311 = vector.load %arg7[%c2_226, %c0_227, %c0_228] : memref<9x8x16xbf16, #tpu.memory_space<vmem>>, vector<1x8x16xbf16>
    %312 = vector.shape_cast %311 : vector<1x8x16xbf16> to vector<8x16xbf16>
    %c0_229 = arith.constant 0 : index
    %c113 = arith.constant 113 : index
    %313 = vector.load %arg10[%c0_229, %c113] : memref<16x512xbf16, #tpu.memory_space<vmem>>, vector<16x256xbf16>
    %cst_230 = arith.constant dense<0.000000e+00> : vector<8x256xf32>
    %314 = tpu.matmul %312, %313, %cst_230 {dimension_numbers = #tpu.dot_dimension_numbers<[1], [0], [0], [1], [0, 0, 1, 1], [], []>} : vector<8x16xbf16>, vector<16x256xbf16>, vector<8x256xf32> -> vector<8x256xf32>
    %315 = arith.addf %310, %314 : vector<8x256xf32>
    %c5 = arith.constant 5 : index
    %c0_231 = arith.constant 0 : index
    %c0_232 = arith.constant 0 : index
    %316 = vector.load %arg7[%c5, %c0_231, %c0_232] : memref<9x8x16xbf16, #tpu.memory_space<vmem>>, vector<1x8x16xbf16>
    %317 = vector.shape_cast %316 : vector<1x8x16xbf16> to vector<8x16xbf16>
    %c0_233 = arith.constant 0 : index
    %c129 = arith.constant 129 : index
    %318 = vector.load %arg10[%c0_233, %c129] : memref<16x512xbf16, #tpu.memory_space<vmem>>, vector<16x256xbf16>
    %cst_234 = arith.constant dense<0.000000e+00> : vector<8x256xf32>
    %319 = tpu.matmul %317, %318, %cst_234 {dimension_numbers = #tpu.dot_dimension_numbers<[1], [0], [0], [1], [0, 0, 1, 1], [], []>} : vector<8x16xbf16>, vector<16x256xbf16>, vector<8x256xf32> -> vector<8x256xf32>
    %320 = arith.addf %315, %319 : vector<8x256xf32>
    %c8_235 = arith.constant 8 : index
    %c0_236 = arith.constant 0 : index
    %c0_237 = arith.constant 0 : index
    %321 = vector.load %arg7[%c8_235, %c0_236, %c0_237] : memref<9x8x16xbf16, #tpu.memory_space<vmem>>, vector<1x8x16xbf16>
    %322 = vector.shape_cast %321 : vector<1x8x16xbf16> to vector<8x16xbf16>
    %c0_238 = arith.constant 0 : index
    %c145 = arith.constant 145 : index
    %323 = vector.load %arg10[%c0_238, %c145] : memref<16x512xbf16, #tpu.memory_space<vmem>>, vector<16x256xbf16>
    %cst_239 = arith.constant dense<0.000000e+00> : vector<8x256xf32>
    %324 = tpu.matmul %322, %323, %cst_239 {dimension_numbers = #tpu.dot_dimension_numbers<[1], [0], [0], [1], [0, 0, 1, 1], [], []>} : vector<8x16xbf16>, vector<16x256xbf16>, vector<8x256xf32> -> vector<8x256xf32>
    %325 = arith.addf %320, %324 : vector<8x256xf32>
    %c1_240 = arith.constant 1 : index
    %c0_241 = arith.constant 0 : index
    %326 = vector.load %arg3[%c1_240, %c0_241] : memref<2x256xf32, #tpu.memory_space<vmem>>, vector<1x256xf32>
    %327 = vector.broadcast %326 : vector<1x256xf32> to vector<8x256xf32>
    %328 = arith.mulf %325, %327 : vector<8x256xf32>
    %329 = arith.addf %309, %328 : vector<8x256xf32>
    %cst_242 = arith.constant 0.000000e+00 : f32
    %330 = vector.broadcast %cst_242 : f32 to vector<8x256xf32>
    %331 = arith.maximumf %329, %330 : vector<8x256xf32>
    %332 = arith.truncf %331 : vector<8x256xf32> to vector<8x256xbf16>
    %c0_243 = arith.constant 0 : index
    %c128_244 = arith.constant 128 : index
    %333 = vector.load %arg11[%c0_243, %c128_244] : memref<8x512xbf16, #tpu.memory_space<vmem>>, vector<8x256xbf16>
    tpu.vector_store %arg11[%c0_243, %c128_244], %332 {strides = array<i32>} : memref<8x512xbf16, #tpu.memory_space<vmem>>, vector<8x256xbf16>,
    %cst_245 = arith.constant 0.000000e+00 : f32
    %334 = vector.broadcast %cst_245 : f32 to vector<8x256xf32>
    %cst_246 = arith.constant 0.000000e+00 : f32
    %335 = vector.broadcast %cst_246 : f32 to vector<8x256xf32>
    %c0_247 = arith.constant 0 : index
    %c0_248 = arith.constant 0 : index
    %c0_249 = arith.constant 0 : index
    %336 = vector.load %arg8[%c0_247, %c0_248, %c0_249] : memref<9x8x8xbf16, #tpu.memory_space<vmem>>, vector<1x8x8xbf16>
    %337 = vector.shape_cast %336 : vector<1x8x8xbf16> to vector<8x8xbf16>
    %c0_250 = arith.constant 0 : index
    %c111_251 = arith.constant 111 : index
    %338 = vector.load %arg11[%c0_250, %c111_251] : memref<8x512xbf16, #tpu.memory_space<vmem>>, vector<8x256xbf16>
    %cst_252 = arith.constant dense<0.000000e+00> : vector<8x256xf32>
    %339 = tpu.matmul %337, %338, %cst_252 {dimension_numbers = #tpu.dot_dimension_numbers<[1], [0], [0], [1], [0, 0, 1, 1], [], []>} : vector<8x8xbf16>, vector<8x256xbf16>, vector<8x256xf32> -> vector<8x256xf32>
    %340 = arith.addf %335, %339 : vector<8x256xf32>
    %c3_253 = arith.constant 3 : index
    %c0_254 = arith.constant 0 : index
    %c0_255 = arith.constant 0 : index
    %341 = vector.load %arg8[%c3_253, %c0_254, %c0_255] : memref<9x8x8xbf16, #tpu.memory_space<vmem>>, vector<1x8x8xbf16>
    %342 = vector.shape_cast %341 : vector<1x8x8xbf16> to vector<8x8xbf16>
    %c0_256 = arith.constant 0 : index
    %c127_257 = arith.constant 127 : index
    %343 = vector.load %arg11[%c0_256, %c127_257] : memref<8x512xbf16, #tpu.memory_space<vmem>>, vector<8x256xbf16>
    %cst_258 = arith.constant dense<0.000000e+00> : vector<8x256xf32>
    %344 = tpu.matmul %342, %343, %cst_258 {dimension_numbers = #tpu.dot_dimension_numbers<[1], [0], [0], [1], [0, 0, 1, 1], [], []>} : vector<8x8xbf16>, vector<8x256xbf16>, vector<8x256xf32> -> vector<8x256xf32>
    %345 = arith.addf %340, %344 : vector<8x256xf32>
    %c6_259 = arith.constant 6 : index
    %c0_260 = arith.constant 0 : index
    %c0_261 = arith.constant 0 : index
    %346 = vector.load %arg8[%c6_259, %c0_260, %c0_261] : memref<9x8x8xbf16, #tpu.memory_space<vmem>>, vector<1x8x8xbf16>
    %347 = vector.shape_cast %346 : vector<1x8x8xbf16> to vector<8x8xbf16>
    %c0_262 = arith.constant 0 : index
    %c143_263 = arith.constant 143 : index
    %348 = vector.load %arg11[%c0_262, %c143_263] : memref<8x512xbf16, #tpu.memory_space<vmem>>, vector<8x256xbf16>
    %cst_264 = arith.constant dense<0.000000e+00> : vector<8x256xf32>
    %349 = tpu.matmul %347, %348, %cst_264 {dimension_numbers = #tpu.dot_dimension_numbers<[1], [0], [0], [1], [0, 0, 1, 1], [], []>} : vector<8x8xbf16>, vector<8x256xbf16>, vector<8x256xf32> -> vector<8x256xf32>
    %350 = arith.addf %345, %349 : vector<8x256xf32>
    %c0_265 = arith.constant 0 : index
    %c0_266 = arith.constant 0 : index
    %351 = vector.load %arg3[%c0_265, %c0_266] : memref<2x256xf32, #tpu.memory_space<vmem>>, vector<1x256xf32>
    %352 = vector.broadcast %351 : vector<1x256xf32> to vector<8x256xf32>
    %353 = arith.mulf %350, %352 : vector<8x256xf32>
    %354 = arith.addf %334, %353 : vector<8x256xf32>
    %cst_267 = arith.constant 0.000000e+00 : f32
    %355 = vector.broadcast %cst_267 : f32 to vector<8x256xf32>
    %c1_268 = arith.constant 1 : index
    %c0_269 = arith.constant 0 : index
    %c0_270 = arith.constant 0 : index
    %356 = vector.load %arg8[%c1_268, %c0_269, %c0_270] : memref<9x8x8xbf16, #tpu.memory_space<vmem>>, vector<1x8x8xbf16>
    %357 = vector.shape_cast %356 : vector<1x8x8xbf16> to vector<8x8xbf16>
    %c0_271 = arith.constant 0 : index
    %c112_272 = arith.constant 112 : index
    %358 = vector.load %arg11[%c0_271, %c112_272] : memref<8x512xbf16, #tpu.memory_space<vmem>>, vector<8x256xbf16>
    %cst_273 = arith.constant dense<0.000000e+00> : vector<8x256xf32>
    %359 = tpu.matmul %357, %358, %cst_273 {dimension_numbers = #tpu.dot_dimension_numbers<[1], [0], [0], [1], [0, 0, 1, 1], [], []>} : vector<8x8xbf16>, vector<8x256xbf16>, vector<8x256xf32> -> vector<8x256xf32>
    %360 = arith.addf %355, %359 : vector<8x256xf32>
    %c4_274 = arith.constant 4 : index
    %c0_275 = arith.constant 0 : index
    %c0_276 = arith.constant 0 : index
    %361 = vector.load %arg8[%c4_274, %c0_275, %c0_276] : memref<9x8x8xbf16, #tpu.memory_space<vmem>>, vector<1x8x8xbf16>
    %362 = vector.shape_cast %361 : vector<1x8x8xbf16> to vector<8x8xbf16>
    %c0_277 = arith.constant 0 : index
    %c128_278 = arith.constant 128 : index
    %363 = vector.load %arg11[%c0_277, %c128_278] : memref<8x512xbf16, #tpu.memory_space<vmem>>, vector<8x256xbf16>
    %cst_279 = arith.constant dense<0.000000e+00> : vector<8x256xf32>
    %364 = tpu.matmul %362, %363, %cst_279 {dimension_numbers = #tpu.dot_dimension_numbers<[1], [0], [0], [1], [0, 0, 1, 1], [], []>} : vector<8x8xbf16>, vector<8x256xbf16>, vector<8x256xf32> -> vector<8x256xf32>
    %365 = arith.addf %360, %364 : vector<8x256xf32>
    %c7_280 = arith.constant 7 : index
    %c0_281 = arith.constant 0 : index
    %c0_282 = arith.constant 0 : index
    %366 = vector.load %arg8[%c7_280, %c0_281, %c0_282] : memref<9x8x8xbf16, #tpu.memory_space<vmem>>, vector<1x8x8xbf16>
    %367 = vector.shape_cast %366 : vector<1x8x8xbf16> to vector<8x8xbf16>
    %c0_283 = arith.constant 0 : index
    %c144_284 = arith.constant 144 : index
    %368 = vector.load %arg11[%c0_283, %c144_284] : memref<8x512xbf16, #tpu.memory_space<vmem>>, vector<8x256xbf16>
    %cst_285 = arith.constant dense<0.000000e+00> : vector<8x256xf32>
    %369 = tpu.matmul %367, %368, %cst_285 {dimension_numbers = #tpu.dot_dimension_numbers<[1], [0], [0], [1], [0, 0, 1, 1], [], []>} : vector<8x8xbf16>, vector<8x256xbf16>, vector<8x256xf32> -> vector<8x256xf32>
    %370 = arith.addf %365, %369 : vector<8x256xf32>
    %371 = arith.addf %354, %370 : vector<8x256xf32>
    %cst_286 = arith.constant 0.000000e+00 : f32
    %372 = vector.broadcast %cst_286 : f32 to vector<8x256xf32>
    %c2_287 = arith.constant 2 : index
    %c0_288 = arith.constant 0 : index
    %c0_289 = arith.constant 0 : index
    %373 = vector.load %arg8[%c2_287, %c0_288, %c0_289] : memref<9x8x8xbf16, #tpu.memory_space<vmem>>, vector<1x8x8xbf16>
    %374 = vector.shape_cast %373 : vector<1x8x8xbf16> to vector<8x8xbf16>
    %c0_290 = arith.constant 0 : index
    %c113_291 = arith.constant 113 : index
    %375 = vector.load %arg11[%c0_290, %c113_291] : memref<8x512xbf16, #tpu.memory_space<vmem>>, vector<8x256xbf16>
    %cst_292 = arith.constant dense<0.000000e+00> : vector<8x256xf32>
    %376 = tpu.matmul %374, %375, %cst_292 {dimension_numbers = #tpu.dot_dimension_numbers<[1], [0], [0], [1], [0, 0, 1, 1], [], []>} : vector<8x8xbf16>, vector<8x256xbf16>, vector<8x256xf32> -> vector<8x256xf32>
    %377 = arith.addf %372, %376 : vector<8x256xf32>
    %c5_293 = arith.constant 5 : index
    %c0_294 = arith.constant 0 : index
    %c0_295 = arith.constant 0 : index
    %378 = vector.load %arg8[%c5_293, %c0_294, %c0_295] : memref<9x8x8xbf16, #tpu.memory_space<vmem>>, vector<1x8x8xbf16>
    %379 = vector.shape_cast %378 : vector<1x8x8xbf16> to vector<8x8xbf16>
    %c0_296 = arith.constant 0 : index
    %c129_297 = arith.constant 129 : index
    %380 = vector.load %arg11[%c0_296, %c129_297] : memref<8x512xbf16, #tpu.memory_space<vmem>>, vector<8x256xbf16>
    %cst_298 = arith.constant dense<0.000000e+00> : vector<8x256xf32>
    %381 = tpu.matmul %379, %380, %cst_298 {dimension_numbers = #tpu.dot_dimension_numbers<[1], [0], [0], [1], [0, 0, 1, 1], [], []>} : vector<8x8xbf16>, vector<8x256xbf16>, vector<8x256xf32> -> vector<8x256xf32>
    %382 = arith.addf %377, %381 : vector<8x256xf32>
    %c8_299 = arith.constant 8 : index
    %c0_300 = arith.constant 0 : index
    %c0_301 = arith.constant 0 : index
    %383 = vector.load %arg8[%c8_299, %c0_300, %c0_301] : memref<9x8x8xbf16, #tpu.memory_space<vmem>>, vector<1x8x8xbf16>
    %384 = vector.shape_cast %383 : vector<1x8x8xbf16> to vector<8x8xbf16>
    %c0_302 = arith.constant 0 : index
    %c145_303 = arith.constant 145 : index
    %385 = vector.load %arg11[%c0_302, %c145_303] : memref<8x512xbf16, #tpu.memory_space<vmem>>, vector<8x256xbf16>
    %cst_304 = arith.constant dense<0.000000e+00> : vector<8x256xf32>
    %386 = tpu.matmul %384, %385, %cst_304 {dimension_numbers = #tpu.dot_dimension_numbers<[1], [0], [0], [1], [0, 0, 1, 1], [], []>} : vector<8x8xbf16>, vector<8x256xbf16>, vector<8x256xf32> -> vector<8x256xf32>
    %387 = arith.addf %382, %386 : vector<8x256xf32>
    %c1_305 = arith.constant 1 : index
    %c0_306 = arith.constant 0 : index
    %388 = vector.load %arg3[%c1_305, %c0_306] : memref<2x256xf32, #tpu.memory_space<vmem>>, vector<1x256xf32>
    %389 = vector.broadcast %388 : vector<1x256xf32> to vector<8x256xf32>
    %390 = arith.mulf %387, %389 : vector<8x256xf32>
    %391 = arith.addf %371, %390 : vector<8x256xf32>
    %cst_307 = arith.constant 0.000000e+00 : f32
    %392 = vector.broadcast %cst_307 : f32 to vector<8x256xf32>
    %393 = arith.maximumf %391, %392 : vector<8x256xf32>
    %c0_308 = arith.constant 0 : index
    %c0_309 = arith.constant 0 : index
    %c0_310 = arith.constant 0 : index
    %394 = vector.load %arg9[%c0_308, %c0_309, %c0_310] : memref<1x8x256xf32, #tpu.memory_space<vmem>>, vector<1x8x256xf32>
    %395 = vector.shape_cast %394 : vector<1x8x256xf32> to vector<8x256xf32>
    %396 = vector.shape_cast %393 : vector<8x256xf32> to vector<1x8x256xf32>
    tpu.vector_store %arg9[%c0_308, %c0_309, %c0_310], %396 {strides = array<i32>} : memref<1x8x256xf32, #tpu.memory_space<vmem>>, vector<1x8x256xf32>,
    return
  }
  func.func @transform_0(%arg0: i32) -> (i32, i32, i32) {
    %c0_i32 = arith.constant 0 : i32
    %c0_i32_0 = arith.constant 0 : i32
    %c0_i32_1 = arith.constant 0 : i32
    return %arg0, %c0_i32, %c0_i32_0 : i32, i32, i32
  }
  func.func @transform_1(%arg0: i32) -> (i32, i32, i32) {
    %c0_i32 = arith.constant 0 : i32
    %c0_i32_0 = arith.constant 0 : i32
    %c0_i32_1 = arith.constant 0 : i32
    return %arg0, %c0_i32, %c0_i32_0 : i32, i32, i32
  }
  func.func @transform_2(%arg0: i32) -> (i32, i32) {
    %c0_i32 = arith.constant 0 : i32
    %c0_i32_0 = arith.constant 0 : i32
    %c0_i32_1 = arith.constant 0 : i32
    return %c0_i32, %c0_i32_0 : i32, i32
  }
  func.func @transform_3(%arg0: i32) -> (i32, i32, i32) {
    %c0_i32 = arith.constant 0 : i32
    %c0_i32_0 = arith.constant 0 : i32
    %c0_i32_1 = arith.constant 0 : i32
    %c0_i32_2 = arith.constant 0 : i32
    return %c0_i32, %c0_i32_0, %c0_i32_1 : i32, i32, i32
  }
  func.func @transform_4(%arg0: i32) -> (i32, i32, i32) {
    %c0_i32 = arith.constant 0 : i32
    %c0_i32_0 = arith.constant 0 : i32
    %c0_i32_1 = arith.constant 0 : i32
    %c0_i32_2 = arith.constant 0 : i32
    return %c0_i32, %c0_i32_0, %c0_i32_1 : i32, i32, i32
  }
  func.func @transform_5(%arg0: i32) -> (i32, i32) {
    %c0_i32 = arith.constant 0 : i32
    %c0_i32_0 = arith.constant 0 : i32
    %c0_i32_1 = arith.constant 0 : i32
    return %c0_i32, %c0_i32_0 : i32, i32
  }
  func.func @transform_6(%arg0: i32) -> (i32, i32, i32) {
    %c0_i32 = arith.constant 0 : i32
    %c0_i32_0 = arith.constant 0 : i32
    %c0_i32_1 = arith.constant 0 : i32
    %c0_i32_2 = arith.constant 0 : i32
    return %c0_i32, %c0_i32_0, %c0_i32_1 : i32, i32, i32
  }
  func.func @transform_7(%arg0: i32) -> (i32, i32, i32) {
    %c0_i32 = arith.constant 0 : i32
    %c0_i32_0 = arith.constant 0 : i32
    %c0_i32_1 = arith.constant 0 : i32
    %c0_i32_2 = arith.constant 0 : i32
    return %c0_i32, %c0_i32_0, %c0_i32_1 : i32, i32, i32
  }
  func.func @transform_8(%arg0: i32) -> (i32, i32, i32) {
    %c0_i32 = arith.constant 0 : i32
    %c0_i32_0 = arith.constant 0 : i32
    %c0_i32_1 = arith.constant 0 : i32
    return %arg0, %c0_i32, %c0_i32_0 : i32, i32, i32
  }
}

</mosaic_0001>

<llo_original>
// kernel: upblock_forward.1
$region0: #{upblock_forward.1}
  #allocation0 [shape = 'u32[]', space=smem, size = 0x4, offset = 0x4, fixed_abs, tag = 'smem constant byte address 0x4 - core index']
  #allocation1 [shape = 'u32[72,128]{1,0:T(1,128)}', space=vmem, size = 0x9000, scoped, tag = 'internal scratch']
  #allocation2 [shape = 'bf16[16,512]{1,0:T(8,128)(2,1)}', space=vmem, size = 0x4000, scoped, tag = 'scratch operand']
  #allocation3 [shape = 'bf16[8,512]{1,0:T(8,128)(2,1)}', space=vmem, size = 0x2000, scoped, tag = 'scratch operand']
  %s0 = inlined_call_operand.vmem [shape: f32[2,16,64], index: 0, kind: input, shape index: {}]
  %s1 = inlined_call_operand.vmem [shape: f32[2,8,256], index: 1, kind: input, shape index: {}]
  %s2 = inlined_call_operand.vmem [shape: f32[2,256], index: 2, kind: input, shape index: {}]
  %s3 = inlined_call_operand.vmem [shape: bf16[2,8,16], index: 3, kind: input, shape index: {}]
  %s4 = inlined_call_operand.vmem [shape: bf16[4,8,16], index: 4, kind: input, shape index: {}]
  %s5 = inlined_call_operand.vmem [shape: f32[8,1], index: 5, kind: input, shape index: {}]
  %s6 = inlined_call_operand.vmem [shape: bf16[9,8,16], index: 6, kind: input, shape index: {}]
  %s7 = inlined_call_operand.vmem [shape: bf16[9,8,8], index: 7, kind: input, shape index: {}]
  %s8 = inlined_call_operand.vmem [shape: f32[2,8,256], index: 8, kind: output, shape index: {}]
  %s9 = sld [smem:[#allocation0]]
  $region65: #{upblock_forward.1} parent=0
    _
  %s11 = ssub.s32 1, %s9
  %s12 = scalar_select 0, %s11, %s9
  loop: start=0, step=1, limit=4
  $region2: #{upblock_forward.1} parent=0 // loop_pre_header
    _
  $region3: #{upblock_forward.1} parent=0 // loop_header
    %s14 = sphi 0, %s18
    %p15 = scmp.ge.s32.totalorder %s14, 4
    %s24 = sphi 0, %s26
    %s27 = sphi 0, %s24
    %s28 = sphi 0, %s27
    %s44 = sphi 0, %s28
    %s50 = sphi 0, %s52
    %s53 = sphi 0, %s50
    %s54 = sphi 0, %s53
    %s70 = sphi 0, %s54
    %s74 = sphi 0, %s74
    %s76 = sphi 0, %s74
    %s77 = sphi 0, %s76
    %s91 = sphi 0, %s77
    %s95 = sphi 0, %s95
    %s97 = sphi 0, %s95
    %s98 = sphi 0, %s97
    %s112 = sphi 0, %s98
    %s116 = sphi 0, %s116
    %s118 = sphi 0, %s116
    %s119 = sphi 0, %s118
    %s133 = sphi 0, %s119
    %s137 = sphi 0, %s137
    %s139 = sphi 0, %s137
    %s140 = sphi 0, %s139
    %s154 = sphi 0, %s140
    %s158 = sphi 0, %s158
    %s160 = sphi 0, %s158
    %s161 = sphi 0, %s160
    %s175 = sphi 0, %s161
    %s179 = sphi 0, %s179
    %s181 = sphi 0, %s179
    %s182 = sphi 0, %s181
    %s196 = sphi 0, %s182
    %s202 = sphi 0, %s204
    %s205 = sphi 0, %s202
    %s206 = sphi 0, %s205
    %s222 = sphi 0, %s206
  $region4: #{upblock_forward.1} parent=0 // loop_header_branch
    %17 = sbr.rel (%p15) target = $region8
  $region5: #{upblock_forward.1} parent=0 // loop_body
    %s19 = ssub.s32 %s14, 1
    %s20 = ssub.s32 %s14, 2
    %s21 = sadd.s32 %s14, 1
    %s22 = ssub.s32 %s14, %s21
    %p23 = scmp.eq.s32.totalorder %s22, 0
    %s25 = sadd.s32 %s24, 1
    %s26 = scalar_select %p23, %s24, %s25
    %p29 = pneg %p23
    %p30 = scmp.eq.s32.totalorder %s14, 1
    %p31 = por %p29, %p30
    %p32 = scmp.ne.s32.totalorder %s24, %s27
    %p33 = scmp.eq.s32.totalorder %s14, 0
    %p34 = por %p32, %p33
    %p35 = scmp.ne.s32.totalorder %s24, %s27
    %p36 = scmp.eq.s32.totalorder %s19, 1
    %p37 = por %p35, %p36
    %p38 = scmp.ne.s32.totalorder %s27, %s28
    %p39 = scmp.eq.s32.totalorder %s19, 0
    %p40 = por %p38, %p39
    %p41 = scmp.ne.s32.totalorder %s27, %s28
    %p42 = scmp.eq.s32.totalorder %s20, 1
    %p43 = por %p41, %p42
    %p45 = scmp.ne.s32.totalorder %s28, %s44
    %p46 = scmp.eq.s32.totalorder %s20, 0
    %p47 = por %p45, %p46
    %s48 = ssub.s32 %s14, %s21
    %p49 = scmp.eq.s32.totalorder %s48, 0
    %s51 = sadd.s32 %s50, 1
    %s52 = scalar_select %p49, %s50, %s51
    %p55 = pneg %p49
    %p56 = scmp.eq.s32.totalorder %s14, 1
    %p57 = por %p55, %p56
    %p58 = scmp.ne.s32.totalorder %s50, %s53
    %p59 = scmp.eq.s32.totalorder %s14, 0
    %p60 = por %p58, %p59
    %p61 = scmp.ne.s32.totalorder %s50, %s53
    %p62 = scmp.eq.s32.totalorder %s19, 1
    %p63 = por %p61, %p62
    %p64 = scmp.ne.s32.totalorder %s53, %s54
    %p65 = scmp.eq.s32.totalorder %s19, 0
    %p66 = por %p64, %p65
    %p67 = scmp.ne.s32.totalorder %s53, %s54
    %p68 = scmp.eq.s32.totalorder %s20, 1
    %p69 = por %p67, %p68
    %p71 = scmp.ne.s32.totalorder %s54, %s70
    %p72 = scmp.eq.s32.totalorder %s20, 0
    %p73 = por %p71, %p72
    %s75 = sadd.s32 %s74, 1
    %p78 = scmp.eq.s32.totalorder %s14, 1
    %p79 = scmp.ne.s32.totalorder %s74, %s76
    %p80 = scmp.eq.s32.totalorder %s14, 0
    %p81 = por %p79, %p80
    %p82 = scmp.ne.s32.totalorder %s74, %s76
    %p83 = scmp.eq.s32.totalorder %s19, 1
    %p84 = por %p82, %p83
    %p85 = scmp.ne.s32.totalorder %s76, %s77
    %p86 = scmp.eq.s32.totalorder %s19, 0
    %p87 = por %p85, %p86
    %p88 = scmp.ne.s32.totalorder %s76, %s77
    %p89 = scmp.eq.s32.totalorder %s20, 1
    %p90 = por %p88, %p89
    %p92 = scmp.ne.s32.totalorder %s77, %s91
    %p93 = scmp.eq.s32.totalorder %s20, 0
    %p94 = por %p92, %p93
    %s96 = sadd.s32 %s95, 1
    %p99 = scmp.eq.s32.totalorder %s14, 1
    %p100 = scmp.ne.s32.totalorder %s95, %s97
    %p101 = scmp.eq.s32.totalorder %s14, 0
    %p102 = por %p100, %p101
    %p103 = scmp.ne.s32.totalorder %s95, %s97
    %p104 = scmp.eq.s32.totalorder %s19, 1
    %p105 = por %p103, %p104
    %p106 = scmp.ne.s32.totalorder %s97, %s98
    %p107 = scmp.eq.s32.totalorder %s19, 0
    %p108 = por %p106, %p107
    %p109 = scmp.ne.s32.totalorder %s97, %s98
    %p110 = scmp.eq.s32.totalorder %s20, 1
    %p111 = por %p109, %p110
    %p113 = scmp.ne.s32.totalorder %s98, %s112
    %p114 = scmp.eq.s32.totalorder %s20, 0
    %p115 = por %p113, %p114
    %s117 = sadd.s32 %s116, 1
    %p120 = scmp.eq.s32.totalorder %s14, 1
    %p121 = scmp.ne.s32.totalorder %s116, %s118
    %p122 = scmp.eq.s32.totalorder %s14, 0
    %p123 = por %p121, %p122
    %p124 = scmp.ne.s32.totalorder %s116, %s118
    %p125 = scmp.eq.s32.totalorder %s19, 1
    %p126 = por %p124, %p125
    %p127 = scmp.ne.s32.totalorder %s118, %s119
    %p128 = scmp.eq.s32.totalorder %s19, 0
    %p129 = por %p127, %p128
    %p130 = scmp.ne.s32.totalorder %s118, %s119
    %p131 = scmp.eq.s32.totalorder %s20, 1
    %p132 = por %p130, %p131
    %p134 = scmp.ne.s32.totalorder %s119, %s133
    %p135 = scmp.eq.s32.totalorder %s20, 0
    %p136 = por %p134, %p135
    %s138 = sadd.s32 %s137, 1
    %p141 = scmp.eq.s32.totalorder %s14, 1
    %p142 = scmp.ne.s32.totalorder %s137, %s139
    %p143 = scmp.eq.s32.totalorder %s14, 0
    %p144 = por %p142, %p143
    %p145 = scmp.ne.s32.totalorder %s137, %s139
    %p146 = scmp.eq.s32.totalorder %s19, 1
    %p147 = por %p145, %p146
    %p148 = scmp.ne.s32.totalorder %s139, %s140
    %p149 = scmp.eq.s32.totalorder %s19, 0
    %p150 = por %p148, %p149
    %p151 = scmp.ne.s32.totalorder %s139, %s140
    %p152 = scmp.eq.s32.totalorder %s20, 1
    %p153 = por %p151, %p152
    %p155 = scmp.ne.s32.totalorder %s140, %s154
    %p156 = scmp.eq.s32.totalorder %s20, 0
    %p157 = por %p155, %p156
    %s159 = sadd.s32 %s158, 1
    %p162 = scmp.eq.s32.totalorder %s14, 1
    %p163 = scmp.ne.s32.totalorder %s158, %s160
    %p164 = scmp.eq.s32.totalorder %s14, 0
    %p165 = por %p163, %p164
    %p166 = scmp.ne.s32.totalorder %s158, %s160
    %p167 = scmp.eq.s32.totalorder %s19, 1
    %p168 = por %p166, %p167
    %p169 = scmp.ne.s32.totalorder %s160, %s161
    %p170 = scmp.eq.s32.totalorder %s19, 0
    %p171 = por %p169, %p170
    %p172 = scmp.ne.s32.totalorder %s160, %s161
    %p173 = scmp.eq.s32.totalorder %s20, 1
    %p174 = por %p172, %p173
    %p176 = scmp.ne.s32.totalorder %s161, %s175
    %p177 = scmp.eq.s32.totalorder %s20, 0
    %p178 = por %p176, %p177
    %s180 = sadd.s32 %s179, 1
    %p183 = scmp.eq.s32.totalorder %s14, 1
    %p184 = scmp.ne.s32.totalorder %s179, %s181
    %p185 = scmp.eq.s32.totalorder %s14, 0
    %p186 = por %p184, %p185
    %p187 = scmp.ne.s32.totalorder %s179, %s181
    %p188 = scmp.eq.s32.totalorder %s19, 1
    %p189 = por %p187, %p188
    %p190 = scmp.ne.s32.totalorder %s181, %s182
    %p191 = scmp.eq.s32.totalorder %s19, 0
    %p192 = por %p190, %p191
    %p193 = scmp.ne.s32.totalorder %s181, %s182
    %p194 = scmp.eq.s32.totalorder %s20, 1
    %p195 = por %p193, %p194
    %p197 = scmp.ne.s32.totalorder %s182, %s196
    %p198 = scmp.eq.s32.totalorder %s20, 0
    %p199 = por %p197, %p198
    %s200 = ssub.s32 %s14, %s21
    %p201 = scmp.eq.s32.totalorder %s200, 0
    %s203 = sadd.s32 %s202, 1
    %s204 = scalar_select %p201, %s202, %s203
    %p207 = pneg %p201
    %p208 = scmp.eq.s32.totalorder %s14, 1
    %p209 = por %p207, %p208
    %p210 = scmp.ne.s32.totalorder %s202, %s205
    %p211 = scmp.eq.s32.totalorder %s14, 0
    %p212 = por %p210, %p211
    %p213 = scmp.ne.s32.totalorder %s202, %s205
    %p214 = scmp.eq.s32.totalorder %s19, 1
    %p215 = por %p213, %p214
    %p216 = scmp.ne.s32.totalorder %s205, %s206
    %p217 = scmp.eq.s32.totalorder %s19, 0
    %p218 = por %p216, %p217
    %p219 = scmp.ne.s32.totalorder %s205, %s206
    %p220 = scmp.eq.s32.totalorder %s20, 1
    %p221 = por %p219, %p220
    %p223 = scmp.ne.s32.totalorder %s206, %s222
    %p224 = scmp.eq.s32.totalorder %s20, 0
    %p225 = por %p223, %p224
    %p226 = scmp.le.s32.totalorder 1, %s14
    %p227 = scmp.lt.s32.totalorder %s14, 3
    %p228 = pnand %p226, %p227
    %p229 = pneg %p228
    // Predicated region
    $region9: #{upblock_forward.1} parent=5 // pred_check
      _
    $region10: #{upblock_forward.1} parent=5 // pred_check_branch
      %231 = sbr.rel (%p228) target = $region12
    $region11: #{upblock_forward.1} parent=5 // pred_region
      %s232 = ssub.s32 %s14, 1
      // Predicated region
      $region13: #{upblock_forward.1} parent=11 // pred_check
        %p233 = pneg %p87
      $region14: #{upblock_forward.1} parent=11 // pred_check_branch
        %235 = sbr.rel (%p233) target = $region16
      $region15: #{upblock_forward.1} parent=11 // pred_region
        _
      $region16: #{upblock_forward.1} parent=11 // pred_fallthru
        _
      // Predicated region
      $region17: #{upblock_forward.1} parent=11 // pred_check
        %p236 = pneg %p108
      $region18: #{upblock_forward.1} parent=11 // pred_check_branch
        %238 = sbr.rel (%p236) target = $region20
      $region19: #{upblock_forward.1} parent=11 // pred_region
        _
      $region20: #{upblock_forward.1} parent=11 // pred_fallthru
        _
      // Predicated region
      $region21: #{upblock_forward.1} parent=11 // pred_check
        %p239 = pneg %p129
      $region22: #{upblock_forward.1} parent=11 // pred_check_branch
        %241 = sbr.rel (%p239) target = $region24
      $region23: #{upblock_forward.1} parent=11 // pred_region
        _
      $region24: #{upblock_forward.1} parent=11 // pred_fallthru
        _
      // Predicated region
      $region25: #{upblock_forward.1} parent=11 // pred_check
        %p242 = pneg %p150
      $region26: #{upblock_forward.1} parent=11 // pred_check_branch
        %244 = sbr.rel (%p242) target = $region28
      $region27: #{upblock_forward.1} parent=11 // pred_region
        _
      $region28: #{upblock_forward.1} parent=11 // pred_fallthru
        _
      // Predicated region
      $region29: #{upblock_forward.1} parent=11 // pred_check
        %p245 = pneg %p171
      $region30: #{upblock_forward.1} parent=11 // pred_check_branch
        %247 = sbr.rel (%p245) target = $region32
      $region31: #{upblock_forward.1} parent=11 // pred_region
        _
      $region32: #{upblock_forward.1} parent=11 // pred_fallthru
        _
      // Predicated region
      $region33: #{upblock_forward.1} parent=11 // pred_check
        %p248 = pneg %p192
      $region34: #{upblock_forward.1} parent=11 // pred_check_branch
        %250 = sbr.rel (%p248) target = $region36
      $region35: #{upblock_forward.1} parent=11 // pred_region
        _
      $region36: #{upblock_forward.1} parent=11 // pred_fallthru
        _
    $region12: #{upblock_forward.1} parent=5 // pred_fallthru
      _
    %p251 = scmp.lt.s32.totalorder %s14, 2
    // Predicated region
    $region37: #{upblock_forward.1} parent=5 // pred_check
      %p252 = pneg %p251
    $region38: #{upblock_forward.1} parent=5 // pred_check_branch
      %254 = sbr.rel (%p252) target = $region40
    $region39: #{upblock_forward.1} parent=5 // pred_region
      // Predicated region
      $region41: #{upblock_forward.1} parent=39 // pred_check
        %p255 = pneg %p34
      $region42: #{upblock_forward.1} parent=39 // pred_check_branch
        %257 = sbr.rel (%p255) target = $region44
      $region43: #{upblock_forward.1} parent=39 // pred_region
        %p258 = scmp.lt.s32.totalorder %s14, 1
        %s259 = scalar_select %p258, %s14, 1
        %s260 = smul.addr %s259, 2
        %s261 = smul.addr %s260, 8
        %s262 = scalar_lea.vmem %s0, %s261
      $region44: #{upblock_forward.1} parent=39 // pred_fallthru
        _
      // Predicated region
      $region45: #{upblock_forward.1} parent=39 // pred_check
        %p263 = pneg %p60
      $region46: #{upblock_forward.1} parent=39 // pred_check_branch
        %265 = sbr.rel (%p263) target = $region48
      $region47: #{upblock_forward.1} parent=39 // pred_region
        %p266 = scmp.lt.s32.totalorder %s14, 1
        %s267 = scalar_select %p266, %s14, 1
        %s268 = smul.addr %s267, 2
        %s269 = smul.addr %s268, 8
        %s270 = scalar_lea.vmem %s1, %s269
      $region48: #{upblock_forward.1} parent=39 // pred_fallthru
        _
    $region40: #{upblock_forward.1} parent=5 // pred_fallthru
      _
    %p271 = scmp.le.s32.totalorder 1, %s14
    %p272 = scmp.lt.s32.totalorder %s14, 3
    %p273 = pnand %p271, %p272
    %p274 = pneg %p273
    // Predicated region
    $region49: #{upblock_forward.1} parent=5 // pred_check
      _
    $region50: #{upblock_forward.1} parent=5 // pred_check_branch
      %276 = sbr.rel (%p273) target = $region52
    $region51: #{upblock_forward.1} parent=5 // pred_region
      %s277 = ssub.s32 %s14, 1
      %p278 = scmp.lt.s32.totalorder %s19, 1
      %s279 = scalar_select %p278, %s19, 1
      %s280 = smul.addr %s279, 2
      %s281 = smul.addr %s280, 8
      %s282 = scalar_lea.vmem %s0, %s281
      %p283 = pneg %p40
      %p284 = pneg %p37
      %p285 = scmp.lt.s32.totalorder %s19, 1
      %s286 = scalar_select %p285, %s19, 1
      %s287 = smul.addr %s286, 2
      %s288 = smul.addr %s287, 8
      %s289 = scalar_lea.vmem %s1, %s288
      %p290 = pneg %p66
      %p291 = pneg %p63
      %p292 = pneg %p87
      %p293 = pneg %p84
      %p294 = pneg %p108
      %p295 = pneg %p105
      %p296 = pneg %p129
      %p297 = pneg %p126
      %p298 = pneg %p150
      %p299 = pneg %p147
      %p300 = pneg %p171
      %p301 = pneg %p168
      %p302 = pneg %p192
      %p303 = pneg %p189
      %p304 = pneg %p218
      %p305 = pneg %p215
      %p306 = scmp.lt.s32.totalorder %s19, 1
      %s307 = scalar_select %p306, %s19, 1
      %s308 = smul.addr %s307, 2
      %s309 = smul.addr %s308, 8
      %s310 = scalar_lea.vmem %s8, %s309
      %p311 = scmp.lt.s32.totalorder %s19, 1
      %s312 = scalar_select %p311, %s19, 1
      %s313 = smul.addr %s312, 2
      %s314 = smul.addr %s313, 8
      %s315 = scalar_lea.vmem %s0, %s314
      %p316 = scmp.lt.s32.totalorder %s19, 1
      %s317 = scalar_select %p316, %s19, 1
      %s318 = smul.addr %s317, 2
      %s319 = smul.addr %s318, 8
      %s320 = scalar_lea.vmem %s1, %s319
      %p321 = scmp.lt.s32.totalorder %s19, 1
      %s322 = scalar_select %p321, %s19, 1
      %s323 = smul.addr %s322, 2
      %s324 = smul.addr %s323, 8
      %s325 = scalar_lea.vmem %s8, %s324
      %327 = vst [vmem:[#allocation2] sm:$0xf] 0
      %328 = vst [vmem:[#allocation2 + $0x10] sm:$0xf] 0
      %329 = vst [vmem:[#allocation2 + $0xc] sm:$0xf] 0
      %330 = vst [vmem:[#allocation2 + $0x1c] sm:$0xf] 0
      %331 = vst [vmem:[#allocation3] sm:$0xf] 0
      %332 = vst [vmem:[#allocation3 + $0xc] sm:$0xf] 0
      %v333 = vld [vmem:[%s315] sm:$0xff]
      %v334 = vld [vmem:[%s315 + $0x8] sm:$0xff]
      %v335 = vpack.c.bf16 %v334, %v333
      %v336 = vld [vmem:[%s4] sm:$0xf]
      %vm337 = vcmask 130048
      %v339 = vsel %vm337, %v336, 0
      %341 = vmatpush.bf16.msra.mxu0 0
      %342 = vmatpush.bf16.msra.mxu0 0
      %343 = vmatpush.bf16.msra.mxu0 0
      %344 = vmatpush.bf16.msra.mxu0 0
      %345 = vmatpush.bf16.msra.mxu0 0
      %346 = vmatpush.bf16.msra.mxu0 0
      %347 = vmatpush.bf16.msra.mxu0 0
      %348 = vmatpush.bf16.msra.mxu0 %v335
      %349 = vmatmul.bf16.gmra.mxu0 %v339
      %v350 = vpop.f32.mrf.mxu0
      %v351 = vadd.f32 0.0, %v350
      %v352 = vpop.f32.mrf.mxu0
      %353 = vdwg.mxu0
      %v354 = vpack.c.bf16 %v351, %v351
      %s355 = scalar_lea.vmem %s4, 4
      %v356 = vld [vmem:[%s355] sm:$0xf]
      %v358 = vsel %vm337, %v356, 0
      %360 = vmatpush.bf16.msra.mxu0 0
      %361 = vmatpush.bf16.msra.mxu0 0
      %362 = vmatpush.bf16.msra.mxu0 0
      %363 = vmatpush.bf16.msra.mxu0 0
      %364 = vmatpush.bf16.msra.mxu0 0
      %365 = vmatpush.bf16.msra.mxu0 0
      %366 = vmatpush.bf16.msra.mxu0 0
      %367 = vmatpush.bf16.msra.mxu0 %v335
      %368 = vmatmul.bf16.gmra.mxu0 %v358
      %v369 = vpop.f32.mrf.mxu0
      %v370 = vadd.f32 0.0, %v369
      %v371 = vpop.f32.mrf.mxu0
      %372 = vdwg.mxu0
      %v373 = vpack.c.bf16 %v370, %v370
      %s374 = scalar_lea.vmem %s4, 8
      %v375 = vld [vmem:[%s374] sm:$0xf]
      %v377 = vsel %vm337, %v375, 0
      %379 = vmatpush.bf16.msra.mxu0 0
      %380 = vmatpush.bf16.msra.mxu0 0
      %381 = vmatpush.bf16.msra.mxu0 0
      %382 = vmatpush.bf16.msra.mxu0 0
      %383 = vmatpush.bf16.msra.mxu0 0
      %384 = vmatpush.bf16.msra.mxu0 0
      %385 = vmatpush.bf16.msra.mxu0 0
      %386 = vmatpush.bf16.msra.mxu0 %v335
      %387 = vmatmul.bf16.gmra.mxu0 %v377
      %v388 = vpop.f32.mrf.mxu0
      %v389 = vadd.f32 0.0, %v388
      %v390 = vpop.f32.mrf.mxu0
      %391 = vdwg.mxu0
      %v392 = vpack.c.bf16 %v389, %v389
      %s393 = scalar_lea.vmem %s4, 12
      %v394 = vld [vmem:[%s393] sm:$0xf]
      %v396 = vsel %vm337, %v394, 0
      %398 = vmatpush.bf16.msra.mxu0 0
      %399 = vmatpush.bf16.msra.mxu0 0
      %400 = vmatpush.bf16.msra.mxu0 0
      %401 = vmatpush.bf16.msra.mxu0 0
      %402 = vmatpush.bf16.msra.mxu0 0
      %403 = vmatpush.bf16.msra.mxu0 0
      %404 = vmatpush.bf16.msra.mxu0 0
      %405 = vmatpush.bf16.msra.mxu0 %v335
      %406 = vmatmul.bf16.gmra.mxu0 %v396
      %v407 = vpop.f32.mrf.mxu0
      %v408 = vadd.f32 0.0, %v407
      %v409 = vpop.f32.mrf.mxu0
      %410 = vdwg.mxu0
      %v411 = vpack.c.bf16 %v408, %v408
      %v412 = vld [vmem:[%s5] sm:$0xff]
      %v413 = vld [vmem:[%s3] sm:$0xf]
      %s414 = scalar_lea.vmem %s3, 4
      %v415 = vld [vmem:[%s414] sm:$0xf]
      %vm416 = vcmask 64512
      %v418 = vsel %vm416, %v373, 0
      %vm420 = vcmask 1043456
      %v422 = vsel %vm420, %v415, 0
      %424 = vmatpush.bf16.msra.mxu0 0
      %425 = vmatpush.bf16.msra.mxu0 0
      %426 = vmatpush.bf16.msra.mxu0 0
      %427 = vmatpush.bf16.msra.mxu0 0
      %428 = vmatpush.bf16.msra.mxu0 0
      %429 = vmatpush.bf16.msra.mxu0 0
      %430 = vmatpush.bf16.msra.mxu0 0
      %431 = vmatpush.bf16.msra.mxu0 %v422
      %432 = vmatmul.bf16.gmra.mxu0 %v418
      %v433 = vpop.f32.mrf.mxu0
      %v434 = vadd.f32 0.0, %v433
      %v435 = vpop.f32.mrf.mxu0
      %436 = vdwg.mxu0
      %v438 = vsel %vm416, %v354, 0
      %v441 = vsel %vm420, %v413, 0
      %443 = vmatpush.bf16.msra.mxu0 0
      %444 = vmatpush.bf16.msra.mxu0 0
      %445 = vmatpush.bf16.msra.mxu0 0
      %446 = vmatpush.bf16.msra.mxu0 0
      %447 = vmatpush.bf16.msra.mxu0 0
      %448 = vmatpush.bf16.msra.mxu0 0
      %449 = vmatpush.bf16.msra.mxu0 0
      %450 = vmatpush.bf16.msra.mxu0 %v441
      %451 = vmatmul.bf16.gmra.mxu0 %v438
      %v452 = vpop.f32.mrf.mxu0
      %v453 = vadd.f32 %v434, %v452
      %v454 = vpop.f32.mrf.mxu0
      %455 = vdwg.mxu0
      %457 = vset.pattern.permute.xlu0 0
      %458 = vperm.xlu0 %457, %v412
      %v459 = vpop.permute.xlu0 %458
      %v461 = vadd.f32 %v453, %v459
      %v462 = vpack.c.bf16 %v461, %v461
      %vm463 = vcmask 125952
      %464 = vst.msk [vmem:[#allocation2 + $0x4] sm:$0xf] %vm463, %v462
      %v465 = vld [vmem:[%s3] sm:$0xf]
      %v466 = vld [vmem:[%s414] sm:$0xf]
      %v468 = vsel %vm416, %v411, 0
      %v471 = vsel %vm420, %v466, 0
      %473 = vmatpush.bf16.msra.mxu0 0
      %474 = vmatpush.bf16.msra.mxu0 0
      %475 = vmatpush.bf16.msra.mxu0 0
      %476 = vmatpush.bf16.msra.mxu0 0
      %477 = vmatpush.bf16.msra.mxu0 0
      %478 = vmatpush.bf16.msra.mxu0 0
      %479 = vmatpush.bf16.msra.mxu0 0
      %480 = vmatpush.bf16.msra.mxu0 %v471
      %481 = vmatmul.bf16.gmra.mxu0 %v468
      %v482 = vpop.f32.mrf.mxu0
      %v483 = vadd.f32 0.0, %v482
      %v484 = vpop.f32.mrf.mxu0
      %485 = vdwg.mxu0
      %v487 = vsel %vm416, %v392, 0
      %v490 = vsel %vm420, %v465, 0
      %492 = vmatpush.bf16.msra.mxu0 0
      %493 = vmatpush.bf16.msra.mxu0 0
      %494 = vmatpush.bf16.msra.mxu0 0
      %495 = vmatpush.bf16.msra.mxu0 0
      %496 = vmatpush.bf16.msra.mxu0 0
      %497 = vmatpush.bf16.msra.mxu0 0
      %498 = vmatpush.bf16.msra.mxu0 0
      %499 = vmatpush.bf16.msra.mxu0 %v490
      %500 = vmatmul.bf16.gmra.mxu0 %v487
      %v501 = vpop.f32.mrf.mxu0
      %v502 = vadd.f32 %v483, %v501
      %v503 = vpop.f32.mrf.mxu0
      %504 = vdwg.mxu0
      %v505 = vadd.f32 %v502, %v459
      %v506 = vpack.c.bf16 %v505, %v505
      %508 = vrot.lane.b32.xlu0 %v506, 16
      %v509 = vpop.permute.xlu0 %508
      %vm511 = vcmask 257152
      %512 = vst.msk [vmem:[#allocation2 + $0x4] sm:$0xf] %vm511, %v509
      %v513 = vld [vmem:[%s3] sm:$0xf]
      %v514 = vld [vmem:[%s414] sm:$0xf]
      %v516 = vunpack.c.l.b16 %v373
      %v517 = vpack.c.b16 %v516, %v516
      %518 = vrot.lane.b32.xlu0 %v517, 120
      %v519 = vpop.permute.xlu0 %518
      %v521 = vsel %vm416, %v519, 0
      %v524 = vsel %vm420, %v514, 0
      %526 = vmatpush.bf16.msra.mxu0 0
      %527 = vmatpush.bf16.msra.mxu0 0
      %528 = vmatpush.bf16.msra.mxu0 0
      %529 = vmatpush.bf16.msra.mxu0 0
      %530 = vmatpush.bf16.msra.mxu0 0
      %531 = vmatpush.bf16.msra.mxu0 0
      %532 = vmatpush.bf16.msra.mxu0 0
      %533 = vmatpush.bf16.msra.mxu0 %v524
      %534 = vmatmul.bf16.gmra.mxu0 %v521
      %v535 = vpop.f32.mrf.mxu0
      %v536 = vadd.f32 0.0, %v535
      %v537 = vpop.f32.mrf.mxu0
      %538 = vdwg.mxu0
      %v540 = vunpack.c.l.b16 %v354
      %v541 = vpack.c.b16 %v540, %v540
      %542 = vrot.lane.b32.xlu0 %v541, 120
      %v543 = vpop.permute.xlu0 %542
      %v545 = vsel %vm416, %v543, 0
      %v548 = vsel %vm420, %v513, 0
      %550 = vmatpush.bf16.msra.mxu0 0
      %551 = vmatpush.bf16.msra.mxu0 0
      %552 = vmatpush.bf16.msra.mxu0 0
      %553 = vmatpush.bf16.msra.mxu0 0
      %554 = vmatpush.bf16.msra.mxu0 0
      %555 = vmatpush.bf16.msra.mxu0 0
      %556 = vmatpush.bf16.msra.mxu0 0
      %557 = vmatpush.bf16.msra.mxu0 %v548
      %558 = vmatmul.bf16.gmra.mxu0 %v545
      %v559 = vpop.f32.mrf.mxu0
      %v560 = vadd.f32 %v536, %v559
      %v561 = vpop.f32.mrf.mxu0
      %562 = vdwg.mxu0
      %v563 = vadd.f32 %v560, %v459
      %v564 = vpack.c.bf16 %v563, %v563
      %566 = vrot.lane.b32.xlu0 %v564, 32
      %v567 = vpop.permute.xlu0 %566
      %vm569 = vcmask 388352
      %570 = vst.msk [vmem:[#allocation2 + $0x4] sm:$0xf] %vm569, %v567
      %v571 = vld [vmem:[%s3] sm:$0xf]
      %v572 = vld [vmem:[%s414] sm:$0xf]
      %v574 = vunpack.c.l.b16 %v411
      %v575 = vpack.c.b16 %v574, %v574
      %576 = vrot.lane.b32.xlu0 %v575, 120
      %v577 = vpop.permute.xlu0 %576
      %v579 = vsel %vm416, %v577, 0
      %v582 = vsel %vm420, %v572, 0
      %584 = vmatpush.bf16.msra.mxu0 0
      %585 = vmatpush.bf16.msra.mxu0 0
      %586 = vmatpush.bf16.msra.mxu0 0
      %587 = vmatpush.bf16.msra.mxu0 0
      %588 = vmatpush.bf16.msra.mxu0 0
      %589 = vmatpush.bf16.msra.mxu0 0
      %590 = vmatpush.bf16.msra.mxu0 0
      %591 = vmatpush.bf16.msra.mxu0 %v582
      %592 = vmatmul.bf16.gmra.mxu0 %v579
      %v593 = vpop.f32.mrf.mxu0
      %v594 = vadd.f32 0.0, %v593
      %v595 = vpop.f32.mrf.mxu0
      %596 = vdwg.mxu0
      %v598 = vunpack.c.l.b16 %v392
      %v599 = vpack.c.b16 %v598, %v598
      %600 = vrot.lane.b32.xlu0 %v599, 120
      %v601 = vpop.permute.xlu0 %600
      %v603 = vsel %vm416, %v601, 0
      %v606 = vsel %vm420, %v571, 0
      %608 = vmatpush.bf16.msra.mxu0 0
      %609 = vmatpush.bf16.msra.mxu0 0
      %610 = vmatpush.bf16.msra.mxu0 0
      %611 = vmatpush.bf16.msra.mxu0 0
      %612 = vmatpush.bf16.msra.mxu0 0
      %613 = vmatpush.bf16.msra.mxu0 0
      %614 = vmatpush.bf16.msra.mxu0 0
      %615 = vmatpush.bf16.msra.mxu0 %v606
      %616 = vmatmul.bf16.gmra.mxu0 %v603
      %v617 = vpop.f32.mrf.mxu0
      %v618 = vadd.f32 %v594, %v617
      %v619 = vpop.f32.mrf.mxu0
      %620 = vdwg.mxu0
      %v621 = vadd.f32 %v618, %v459
      %v622 = vpack.c.bf16 %v621, %v621
      %624 = vrot.lane.b32.xlu0 %v622, 48
      %v625 = vpop.permute.xlu0 %624
      %vm627 = vcmask 519552
      %628 = vst.msk [vmem:[#allocation2 + $0x4] sm:$0xf] %vm627, %v625
      %v629 = vld [vmem:[%s3] sm:$0xf]
      %v630 = vld [vmem:[%s414] sm:$0xf]
      %631 = vrot.lane.b32.xlu0 %v517, 112
      %v632 = vpop.permute.xlu0 %631
      %v634 = vsel %vm416, %v632, 0
      %v637 = vsel %vm420, %v630, 0
      %639 = vmatpush.bf16.msra.mxu0 0
      %640 = vmatpush.bf16.msra.mxu0 0
      %641 = vmatpush.bf16.msra.mxu0 0
      %642 = vmatpush.bf16.msra.mxu0 0
      %643 = vmatpush.bf16.msra.mxu0 0
      %644 = vmatpush.bf16.msra.mxu0 0
      %645 = vmatpush.bf16.msra.mxu0 0
      %646 = vmatpush.bf16.msra.mxu0 %v637
      %647 = vmatmul.bf16.gmra.mxu0 %v634
      %v648 = vpop.f32.mrf.mxu0
      %v649 = vadd.f32 0.0, %v648
      %v650 = vpop.f32.mrf.mxu0
      %651 = vdwg.mxu0
      %652 = vrot.lane.b32.xlu0 %v541, 112
      %v653 = vpop.permute.xlu0 %652
      %v655 = vsel %vm416, %v653, 0
      %v658 = vsel %vm420, %v629, 0
      %660 = vmatpush.bf16.msra.mxu0 0
      %661 = vmatpush.bf16.msra.mxu0 0
      %662 = vmatpush.bf16.msra.mxu0 0
      %663 = vmatpush.bf16.msra.mxu0 0
      %664 = vmatpush.bf16.msra.mxu0 0
      %665 = vmatpush.bf16.msra.mxu0 0
      %666 = vmatpush.bf16.msra.mxu0 0
      %667 = vmatpush.bf16.msra.mxu0 %v658
      %668 = vmatmul.bf16.gmra.mxu0 %v655
      %v669 = vpop.f32.mrf.mxu0
      %v670 = vadd.f32 %v649, %v669
      %v671 = vpop.f32.mrf.mxu0
      %672 = vdwg.mxu0
      %v673 = vadd.f32 %v670, %v459
      %v674 = vpack.c.bf16 %v673, %v673
      %676 = vrot.lane.b32.xlu0 %v674, 64
      %v677 = vpop.permute.xlu0 %676
      %vm679 = vcmask 650752
      %680 = vst.msk [vmem:[#allocation2 + $0x4] sm:$0xf] %vm679, %v677
      %v681 = vld [vmem:[%s3] sm:$0xf]
      %v682 = vld [vmem:[%s414] sm:$0xf]
      %683 = vrot.lane.b32.xlu0 %v575, 112
      %v684 = vpop.permute.xlu0 %683
      %v686 = vsel %vm416, %v684, 0
      %v689 = vsel %vm420, %v682, 0
      %691 = vmatpush.bf16.msra.mxu0 0
      %692 = vmatpush.bf16.msra.mxu0 0
      %693 = vmatpush.bf16.msra.mxu0 0
      %694 = vmatpush.bf16.msra.mxu0 0
      %695 = vmatpush.bf16.msra.mxu0 0
      %696 = vmatpush.bf16.msra.mxu0 0
      %697 = vmatpush.bf16.msra.mxu0 0
      %698 = vmatpush.bf16.msra.mxu0 %v689
      %699 = vmatmul.bf16.gmra.mxu0 %v686
      %v700 = vpop.f32.mrf.mxu0
      %v701 = vadd.f32 0.0, %v700
      %v702 = vpop.f32.mrf.mxu0
      %703 = vdwg.mxu0
      %704 = vrot.lane.b32.xlu0 %v599, 112
      %v705 = vpop.permute.xlu0 %704
      %v707 = vsel %vm416, %v705, 0
      %v710 = vsel %vm420, %v681, 0
      %712 = vmatpush.bf16.msra.mxu0 0
      %713 = vmatpush.bf16.msra.mxu0 0
      %714 = vmatpush.bf16.msra.mxu0 0
      %715 = vmatpush.bf16.msra.mxu0 0
      %716 = vmatpush.bf16.msra.mxu0 0
      %717 = vmatpush.bf16.msra.mxu0 0
      %718 = vmatpush.bf16.msra.mxu0 0
      %719 = vmatpush.bf16.msra.mxu0 %v710
      %720 = vmatmul.bf16.gmra.mxu0 %v707
      %v721 = vpop.f32.mrf.mxu0
      %v722 = vadd.f32 %v701, %v721
      %v723 = vpop.f32.mrf.mxu0
      %724 = vdwg.mxu0
      %v725 = vadd.f32 %v722, %v459
      %v726 = vpack.c.bf16 %v725, %v725
      %728 = vrot.lane.b32.xlu0 %v726, 80
      %v729 = vpop.permute.xlu0 %728
      %vm731 = vcmask 781952
      %732 = vst.msk [vmem:[#allocation2 + $0x4] sm:$0xf] %vm731, %v729
      %v733 = vld [vmem:[%s3] sm:$0xf]
      %v734 = vld [vmem:[%s414] sm:$0xf]
      %735 = vrot.lane.b32.xlu0 %v517, 104
      %v736 = vpop.permute.xlu0 %735
      %v738 = vsel %vm416, %v736, 0
      %v741 = vsel %vm420, %v734, 0
      %743 = vmatpush.bf16.msra.mxu0 0
      %744 = vmatpush.bf16.msra.mxu0 0
      %745 = vmatpush.bf16.msra.mxu0 0
      %746 = vmatpush.bf16.msra.mxu0 0
      %747 = vmatpush.bf16.msra.mxu0 0
      %748 = vmatpush.bf16.msra.mxu0 0
      %749 = vmatpush.bf16.msra.mxu0 0
      %750 = vmatpush.bf16.msra.mxu0 %v741
      %751 = vmatmul.bf16.gmra.mxu0 %v738
      %v752 = vpop.f32.mrf.mxu0
      %v753 = vadd.f32 0.0, %v752
      %v754 = vpop.f32.mrf.mxu0
      %755 = vdwg.mxu0
      %756 = vrot.lane.b32.xlu0 %v541, 104
      %v757 = vpop.permute.xlu0 %756
      %v759 = vsel %vm416, %v757, 0
      %v762 = vsel %vm420, %v733, 0
      %764 = vmatpush.bf16.msra.mxu0 0
      %765 = vmatpush.bf16.msra.mxu0 0
      %766 = vmatpush.bf16.msra.mxu0 0
      %767 = vmatpush.bf16.msra.mxu0 0
      %768 = vmatpush.bf16.msra.mxu0 0
      %769 = vmatpush.bf16.msra.mxu0 0
      %770 = vmatpush.bf16.msra.mxu0 0
      %771 = vmatpush.bf16.msra.mxu0 %v762
      %772 = vmatmul.bf16.gmra.mxu0 %v759
      %v773 = vpop.f32.mrf.mxu0
      %v774 = vadd.f32 %v753, %v773
      %v775 = vpop.f32.mrf.mxu0
      %776 = vdwg.mxu0
      %v777 = vadd.f32 %v774, %v459
      %v778 = vpack.c.bf16 %v777, %v777
      %780 = vrot.lane.b32.xlu0 %v778, 96
      %v781 = vpop.permute.xlu0 %780
      %vm783 = vcmask 913152
      %784 = vst.msk [vmem:[#allocation2 + $0x4] sm:$0xf] %vm783, %v781
      %v785 = vld [vmem:[%s3] sm:$0xf]
      %v786 = vld [vmem:[%s414] sm:$0xf]
      %787 = vrot.lane.b32.xlu0 %v575, 104
      %v788 = vpop.permute.xlu0 %787
      %v790 = vsel %vm416, %v788, 0
      %v793 = vsel %vm420, %v786, 0
      %795 = vmatpush.bf16.msra.mxu0 0
      %796 = vmatpush.bf16.msra.mxu0 0
      %797 = vmatpush.bf16.msra.mxu0 0
      %798 = vmatpush.bf16.msra.mxu0 0
      %799 = vmatpush.bf16.msra.mxu0 0
      %800 = vmatpush.bf16.msra.mxu0 0
      %801 = vmatpush.bf16.msra.mxu0 0
      %802 = vmatpush.bf16.msra.mxu0 %v793
      %803 = vmatmul.bf16.gmra.mxu0 %v790
      %v804 = vpop.f32.mrf.mxu0
      %v805 = vadd.f32 0.0, %v804
      %v806 = vpop.f32.mrf.mxu0
      %807 = vdwg.mxu0
      %808 = vrot.lane.b32.xlu0 %v599, 104
      %v809 = vpop.permute.xlu0 %808
      %v811 = vsel %vm416, %v809, 0
      %v814 = vsel %vm420, %v785, 0
      %816 = vmatpush.bf16.msra.mxu0 0
      %817 = vmatpush.bf16.msra.mxu0 0
      %818 = vmatpush.bf16.msra.mxu0 0
      %819 = vmatpush.bf16.msra.mxu0 0
      %820 = vmatpush.bf16.msra.mxu0 0
      %821 = vmatpush.bf16.msra.mxu0 0
      %822 = vmatpush.bf16.msra.mxu0 0
      %823 = vmatpush.bf16.msra.mxu0 %v814
      %824 = vmatmul.bf16.gmra.mxu0 %v811
      %v825 = vpop.f32.mrf.mxu0
      %v826 = vadd.f32 %v805, %v825
      %v827 = vpop.f32.mrf.mxu0
      %828 = vdwg.mxu0
      %v829 = vadd.f32 %v826, %v459
      %v830 = vpack.c.bf16 %v829, %v829
      %832 = vrot.lane.b32.xlu0 %v830, 112
      %v833 = vpop.permute.xlu0 %832
      %vm835 = vcmask 1044352
      %836 = vst.msk [vmem:[#allocation2 + $0x4] sm:$0xf] %vm835, %v833
      %v837 = vld [vmem:[%s3] sm:$0xf]
      %v838 = vld [vmem:[%s414] sm:$0xf]
      %839 = vrot.lane.b32.xlu0 %v517, 96
      %v840 = vpop.permute.xlu0 %839
      %v842 = vsel %vm416, %v840, 0
      %v845 = vsel %vm420, %v838, 0
      %847 = vmatpush.bf16.msra.mxu0 0
      %848 = vmatpush.bf16.msra.mxu0 0
      %849 = vmatpush.bf16.msra.mxu0 0
      %850 = vmatpush.bf16.msra.mxu0 0
      %851 = vmatpush.bf16.msra.mxu0 0
      %852 = vmatpush.bf16.msra.mxu0 0
      %853 = vmatpush.bf16.msra.mxu0 0
      %854 = vmatpush.bf16.msra.mxu0 %v845
      %855 = vmatmul.bf16.gmra.mxu0 %v842
      %v856 = vpop.f32.mrf.mxu0
      %v857 = vadd.f32 0.0, %v856
      %v858 = vpop.f32.mrf.mxu0
      %859 = vdwg.mxu0
      %860 = vrot.lane.b32.xlu0 %v541, 96
      %v861 = vpop.permute.xlu0 %860
      %v863 = vsel %vm416, %v861, 0
      %v866 = vsel %vm420, %v837, 0
      %868 = vmatpush.bf16.msra.mxu0 0
      %869 = vmatpush.bf16.msra.mxu0 0
      %870 = vmatpush.bf16.msra.mxu0 0
      %871 = vmatpush.bf16.msra.mxu0 0
      %872 = vmatpush.bf16.msra.mxu0 0
      %873 = vmatpush.bf16.msra.mxu0 0
      %874 = vmatpush.bf16.msra.mxu0 0
      %875 = vmatpush.bf16.msra.mxu0 %v866
      %876 = vmatmul.bf16.gmra.mxu0 %v863
      %v877 = vpop.f32.mrf.mxu0
      %v878 = vadd.f32 %v857, %v877
      %v879 = vpop.f32.mrf.mxu0
      %880 = vdwg.mxu0
      %v881 = vadd.f32 %v878, %v459
      %v882 = vpack.c.bf16 %v881, %v881
      %883 = vst.msk [vmem:[#allocation2 + $0x8] sm:$0xf] %vm463, %v882
      %v884 = vld [vmem:[%s3] sm:$0xf]
      %v885 = vld [vmem:[%s414] sm:$0xf]
      %886 = vrot.lane.b32.xlu0 %v575, 96
      %v887 = vpop.permute.xlu0 %886
      %v889 = vsel %vm416, %v887, 0
      %v892 = vsel %vm420, %v885, 0
      %894 = vmatpush.bf16.msra.mxu0 0
      %895 = vmatpush.bf16.msra.mxu0 0
      %896 = vmatpush.bf16.msra.mxu0 0
      %897 = vmatpush.bf16.msra.mxu0 0
      %898 = vmatpush.bf16.msra.mxu0 0
      %899 = vmatpush.bf16.msra.mxu0 0
      %900 = vmatpush.bf16.msra.mxu0 0
      %901 = vmatpush.bf16.msra.mxu0 %v892
      %902 = vmatmul.bf16.gmra.mxu0 %v889
      %v903 = vpop.f32.mrf.mxu0
      %v904 = vadd.f32 0.0, %v903
      %v905 = vpop.f32.mrf.mxu0
      %906 = vdwg.mxu0
      %907 = vrot.lane.b32.xlu0 %v599, 96
      %v908 = vpop.permute.xlu0 %907
      %v910 = vsel %vm416, %v908, 0
      %v913 = vsel %vm420, %v884, 0
      %915 = vmatpush.bf16.msra.mxu0 0
      %916 = vmatpush.bf16.msra.mxu0 0
      %917 = vmatpush.bf16.msra.mxu0 0
      %918 = vmatpush.bf16.msra.mxu0 0
      %919 = vmatpush.bf16.msra.mxu0 0
      %920 = vmatpush.bf16.msra.mxu0 0
      %921 = vmatpush.bf16.msra.mxu0 0
      %922 = vmatpush.bf16.msra.mxu0 %v913
      %923 = vmatmul.bf16.gmra.mxu0 %v910
      %v924 = vpop.f32.mrf.mxu0
      %v925 = vadd.f32 %v904, %v924
      %v926 = vpop.f32.mrf.mxu0
      %927 = vdwg.mxu0
      %v928 = vadd.f32 %v925, %v459
      %v929 = vpack.c.bf16 %v928, %v928
      %931 = vrot.lane.b32.xlu0 %v929, 16
      %v932 = vpop.permute.xlu0 %931
      %934 = vst.msk [vmem:[#allocation2 + $0x8] sm:$0xf] %vm511, %v932
      %v935 = vld [vmem:[%s3] sm:$0xf]
      %v936 = vld [vmem:[%s414] sm:$0xf]
      %937 = vrot.lane.b32.xlu0 %v517, 88
      %v938 = vpop.permute.xlu0 %937
      %v940 = vsel %vm416, %v938, 0
      %v943 = vsel %vm420, %v936, 0
      %945 = vmatpush.bf16.msra.mxu0 0
      %946 = vmatpush.bf16.msra.mxu0 0
      %947 = vmatpush.bf16.msra.mxu0 0
      %948 = vmatpush.bf16.msra.mxu0 0
      %949 = vmatpush.bf16.msra.mxu0 0
      %950 = vmatpush.bf16.msra.mxu0 0
      %951 = vmatpush.bf16.msra.mxu0 0
      %952 = vmatpush.bf16.msra.mxu0 %v943
      %953 = vmatmul.bf16.gmra.mxu0 %v940
      %v954 = vpop.f32.mrf.mxu0
      %v955 = vadd.f32 0.0, %v954
      %v956 = vpop.f32.mrf.mxu0
      %957 = vdwg.mxu0
      %958 = vrot.lane.b32.xlu0 %v541, 88
      %v959 = vpop.permute.xlu0 %958
      %v961 = vsel %vm416, %v959, 0
      %v964 = vsel %vm420, %v935, 0
      %966 = vmatpush.bf16.msra.mxu0 0
      %967 = vmatpush.bf16.msra.mxu0 0
      %968 = vmatpush.bf16.msra.mxu0 0
      %969 = vmatpush.bf16.msra.mxu0 0
      %970 = vmatpush.bf16.msra.mxu0 0
      %971 = vmatpush.bf16.msra.mxu0 0
      %972 = vmatpush.bf16.msra.mxu0 0
      %973 = vmatpush.bf16.msra.mxu0 %v964
      %974 = vmatmul.bf16.gmra.mxu0 %v961
      %v975 = vpop.f32.mrf.mxu0
      %v976 = vadd.f32 %v955, %v975
      %v977 = vpop.f32.mrf.mxu0
      %978 = vdwg.mxu0
      %v979 = vadd.f32 %v976, %v459
      %v980 = vpack.c.bf16 %v979, %v979
      %982 = vrot.lane.b32.xlu0 %v980, 32
      %v983 = vpop.permute.xlu0 %982
      %985 = vst.msk [vmem:[#allocation2 + $0x8] sm:$0xf] %vm569, %v983
      %v986 = vld [vmem:[%s3] sm:$0xf]
      %v987 = vld [vmem:[%s414] sm:$0xf]
      %988 = vrot.lane.b32.xlu0 %v575, 88
      %v989 = vpop.permute.xlu0 %988
      %v991 = vsel %vm416, %v989, 0
      %v994 = vsel %vm420, %v987, 0
      %996 = vmatpush.bf16.msra.mxu0 0
      %997 = vmatpush.bf16.msra.mxu0 0
      %998 = vmatpush.bf16.msra.mxu0 0
      %999 = vmatpush.bf16.msra.mxu0 0
      %1000 = vmatpush.bf16.msra.mxu0 0
      %1001 = vmatpush.bf16.msra.mxu0 0
      %1002 = vmatpush.bf16.msra.mxu0 0
      %1003 = vmatpush.bf16.msra.mxu0 %v994
      %1004 = vmatmul.bf16.gmra.mxu0 %v991
      %v1005 = vpop.f32.mrf.mxu0
      %v1006 = vadd.f32 0.0, %v1005
      %v1007 = vpop.f32.mrf.mxu0
      %1008 = vdwg.mxu0
      %1009 = vrot.lane.b32.xlu0 %v599, 88
      %v1010 = vpop.permute.xlu0 %1009
      %v1012 = vsel %vm416, %v1010, 0
      %v1015 = vsel %vm420, %v986, 0
      %1017 = vmatpush.bf16.msra.mxu0 0
      %1018 = vmatpush.bf16.msra.mxu0 0
      %1019 = vmatpush.bf16.msra.mxu0 0
      %1020 = vmatpush.bf16.msra.mxu0 0
      %1021 = vmatpush.bf16.msra.mxu0 0
      %1022 = vmatpush.bf16.msra.mxu0 0
      %1023 = vmatpush.bf16.msra.mxu0 0
      %1024 = vmatpush.bf16.msra.mxu0 %v1015
      %1025 = vmatmul.bf16.gmra.mxu0 %v1012
      %v1026 = vpop.f32.mrf.mxu0
      %v1027 = vadd.f32 %v1006, %v1026
      %v1028 = vpop.f32.mrf.mxu0
      %1029 = vdwg.mxu0
      %v1030 = vadd.f32 %v1027, %v459
      %v1031 = vpack.c.bf16 %v1030, %v1030
      %1033 = vrot.lane.b32.xlu0 %v1031, 48
      %v1034 = vpop.permute.xlu0 %1033
      %1036 = vst.msk [vmem:[#allocation2 + $0x8] sm:$0xf] %vm627, %v1034
      %v1037 = vld [vmem:[%s3] sm:$0xf]
      %v1038 = vld [vmem:[%s414] sm:$0xf]
      %1039 = vrot.lane.b32.xlu0 %v517, 80
      %v1040 = vpop.permute.xlu0 %1039
      %v1042 = vsel %vm416, %v1040, 0
      %v1045 = vsel %vm420, %v1038, 0
      %1047 = vmatpush.bf16.msra.mxu0 0
      %1048 = vmatpush.bf16.msra.mxu0 0
      %1049 = vmatpush.bf16.msra.mxu0 0
      %1050 = vmatpush.bf16.msra.mxu0 0
      %1051 = vmatpush.bf16.msra.mxu0 0
      %1052 = vmatpush.bf16.msra.mxu0 0
      %1053 = vmatpush.bf16.msra.mxu0 0
      %1054 = vmatpush.bf16.msra.mxu0 %v1045
      %1055 = vmatmul.bf16.gmra.mxu0 %v1042
      %v1056 = vpop.f32.mrf.mxu0
      %v1057 = vadd.f32 0.0, %v1056
      %v1058 = vpop.f32.mrf.mxu0
      %1059 = vdwg.mxu0
      %1060 = vrot.lane.b32.xlu0 %v541, 80
      %v1061 = vpop.permute.xlu0 %1060
      %v1063 = vsel %vm416, %v1061, 0
      %v1066 = vsel %vm420, %v1037, 0
      %1068 = vmatpush.bf16.msra.mxu0 0
      %1069 = vmatpush.bf16.msra.mxu0 0
      %1070 = vmatpush.bf16.msra.mxu0 0
      %1071 = vmatpush.bf16.msra.mxu0 0
      %1072 = vmatpush.bf16.msra.mxu0 0
      %1073 = vmatpush.bf16.msra.mxu0 0
      %1074 = vmatpush.bf16.msra.mxu0 0
      %1075 = vmatpush.bf16.msra.mxu0 %v1066
      %1076 = vmatmul.bf16.gmra.mxu0 %v1063
      %v1077 = vpop.f32.mrf.mxu0
      %v1078 = vadd.f32 %v1057, %v1077
      %v1079 = vpop.f32.mrf.mxu0
      %1080 = vdwg.mxu0
      %v1081 = vadd.f32 %v1078, %v459
      %v1082 = vpack.c.bf16 %v1081, %v1081
      %1084 = vrot.lane.b32.xlu0 %v1082, 64
      %v1085 = vpop.permute.xlu0 %1084
      %1087 = vst.msk [vmem:[#allocation2 + $0x8] sm:$0xf] %vm679, %v1085
      %v1088 = vld [vmem:[%s3] sm:$0xf]
      %v1089 = vld [vmem:[%s414] sm:$0xf]
      %1090 = vrot.lane.b32.xlu0 %v575, 80
      %v1091 = vpop.permute.xlu0 %1090
      %v1093 = vsel %vm416, %v1091, 0
      %v1096 = vsel %vm420, %v1089, 0
      %1098 = vmatpush.bf16.msra.mxu0 0
      %1099 = vmatpush.bf16.msra.mxu0 0
      %1100 = vmatpush.bf16.msra.mxu0 0
      %1101 = vmatpush.bf16.msra.mxu0 0
      %1102 = vmatpush.bf16.msra.mxu0 0
      %1103 = vmatpush.bf16.msra.mxu0 0
      %1104 = vmatpush.bf16.msra.mxu0 0
      %1105 = vmatpush.bf16.msra.mxu0 %v1096
      %1106 = vmatmul.bf16.gmra.mxu0 %v1093
      %v1107 = vpop.f32.mrf.mxu0
      %v1108 = vadd.f32 0.0, %v1107
      %v1109 = vpop.f32.mrf.mxu0
      %1110 = vdwg.mxu0
      %1111 = vrot.lane.b32.xlu0 %v599, 80
      %v1112 = vpop.permute.xlu0 %1111
      %v1114 = vsel %vm416, %v1112, 0
      %v1117 = vsel %vm420, %v1088, 0
      %1119 = vmatpush.bf16.msra.mxu0 0
      %1120 = vmatpush.bf16.msra.mxu0 0
      %1121 = vmatpush.bf16.msra.mxu0 0
      %1122 = vmatpush.bf16.msra.mxu0 0
      %1123 = vmatpush.bf16.msra.mxu0 0
      %1124 = vmatpush.bf16.msra.mxu0 0
      %1125 = vmatpush.bf16.msra.mxu0 0
      %1126 = vmatpush.bf16.msra.mxu0 %v1117
      %1127 = vmatmul.bf16.gmra.mxu0 %v1114
      %v1128 = vpop.f32.mrf.mxu0
      %v1129 = vadd.f32 %v1108, %v1128
      %v1130 = vpop.f32.mrf.mxu0
      %1131 = vdwg.mxu0
      %v1132 = vadd.f32 %v1129, %v459
      %v1133 = vpack.c.bf16 %v1132, %v1132
      %1135 = vrot.lane.b32.xlu0 %v1133, 80
      %v1136 = vpop.permute.xlu0 %1135
      %1138 = vst.msk [vmem:[#allocation2 + $0x8] sm:$0xf] %vm731, %v1136
      %v1139 = vld [vmem:[%s3] sm:$0xf]
      %v1140 = vld [vmem:[%s414] sm:$0xf]
      %1141 = vrot.lane.b32.xlu0 %v517, 72
      %v1142 = vpop.permute.xlu0 %1141
      %v1144 = vsel %vm416, %v1142, 0
      %v1147 = vsel %vm420, %v1140, 0
      %1149 = vmatpush.bf16.msra.mxu0 0
      %1150 = vmatpush.bf16.msra.mxu0 0
      %1151 = vmatpush.bf16.msra.mxu0 0
      %1152 = vmatpush.bf16.msra.mxu0 0
      %1153 = vmatpush.bf16.msra.mxu0 0
      %1154 = vmatpush.bf16.msra.mxu0 0
      %1155 = vmatpush.bf16.msra.mxu0 0
      %1156 = vmatpush.bf16.msra.mxu0 %v1147
      %1157 = vmatmul.bf16.gmra.mxu0 %v1144
      %v1158 = vpop.f32.mrf.mxu0
      %v1159 = vadd.f32 0.0, %v1158
      %v1160 = vpop.f32.mrf.mxu0
      %1161 = vdwg.mxu0
      %1162 = vrot.lane.b32.xlu0 %v541, 72
      %v1163 = vpop.permute.xlu0 %1162
      %v1165 = vsel %vm416, %v1163, 0
      %v1168 = vsel %vm420, %v1139, 0
      %1170 = vmatpush.bf16.msra.mxu0 0
      %1171 = vmatpush.bf16.msra.mxu0 0
      %1172 = vmatpush.bf16.msra.mxu0 0
      %1173 = vmatpush.bf16.msra.mxu0 0
      %1174 = vmatpush.bf16.msra.mxu0 0
      %1175 = vmatpush.bf16.msra.mxu0 0
      %1176 = vmatpush.bf16.msra.mxu0 0
      %1177 = vmatpush.bf16.msra.mxu0 %v1168
      %1178 = vmatmul.bf16.gmra.mxu0 %v1165
      %v1179 = vpop.f32.mrf.mxu0
      %v1180 = vadd.f32 %v1159, %v1179
      %v1181 = vpop.f32.mrf.mxu0
      %1182 = vdwg.mxu0
      %v1183 = vadd.f32 %v1180, %v459
      %v1184 = vpack.c.bf16 %v1183, %v1183
      %1186 = vrot.lane.b32.xlu0 %v1184, 96
      %v1187 = vpop.permute.xlu0 %1186
      %1189 = vst.msk [vmem:[#allocation2 + $0x8] sm:$0xf] %vm783, %v1187
      %v1190 = vld [vmem:[%s3] sm:$0xf]
      %v1191 = vld [vmem:[%s414] sm:$0xf]
      %1192 = vrot.lane.b32.xlu0 %v575, 72
      %v1193 = vpop.permute.xlu0 %1192
      %v1195 = vsel %vm416, %v1193, 0
      %v1198 = vsel %vm420, %v1191, 0
      %1200 = vmatpush.bf16.msra.mxu0 0
      %1201 = vmatpush.bf16.msra.mxu0 0
      %1202 = vmatpush.bf16.msra.mxu0 0
      %1203 = vmatpush.bf16.msra.mxu0 0
      %1204 = vmatpush.bf16.msra.mxu0 0
      %1205 = vmatpush.bf16.msra.mxu0 0
      %1206 = vmatpush.bf16.msra.mxu0 0
      %1207 = vmatpush.bf16.msra.mxu0 %v1198
      %1208 = vmatmul.bf16.gmra.mxu0 %v1195
      %v1209 = vpop.f32.mrf.mxu0
      %v1210 = vadd.f32 0.0, %v1209
      %v1211 = vpop.f32.mrf.mxu0
      %1212 = vdwg.mxu0
      %1213 = vrot.lane.b32.xlu0 %v599, 72
      %v1214 = vpop.permute.xlu0 %1213
      %v1216 = vsel %vm416, %v1214, 0
      %v1219 = vsel %vm420, %v1190, 0
      %1221 = vmatpush.bf16.msra.mxu0 0
      %1222 = vmatpush.bf16.msra.mxu0 0
      %1223 = vmatpush.bf16.msra.mxu0 0
      %1224 = vmatpush.bf16.msra.mxu0 0
      %1225 = vmatpush.bf16.msra.mxu0 0
      %1226 = vmatpush.bf16.msra.mxu0 0
      %1227 = vmatpush.bf16.msra.mxu0 0
      %1228 = vmatpush.bf16.msra.mxu0 %v1219
      %1229 = vmatmul.bf16.gmra.mxu0 %v1216
      %v1230 = vpop.f32.mrf.mxu0
      %v1231 = vadd.f32 %v1210, %v1230
      %v1232 = vpop.f32.mrf.mxu0
      %1233 = vdwg.mxu0
      %v1234 = vadd.f32 %v1231, %v459
      %v1235 = vpack.c.bf16 %v1234, %v1234
      %1237 = vrot.lane.b32.xlu0 %v1235, 112
      %v1238 = vpop.permute.xlu0 %1237
      %1240 = vst.msk [vmem:[#allocation2 + $0x8] sm:$0xf] %vm835, %v1238
      %v1241 = vld [vmem:[%s320] sm:$0xff]
      %v1242 = vld [vmem:[%s320 + $0x8] sm:$0xff]
      %v1243 = vpack.c.bf16 %v1242, %v1241
      %1244 = vst [vmem:[#allocation2 + $0x14] sm:$0xff] %v1243
      %v1245 = vld [vmem:[%s6] sm:$0xf]
      %v1246 = vld [vmem:[#allocation2] sm:$0xff]
      %v1247 = vld [vmem:[#allocation2 + $0x8] sm:$0xf]
      %v1248 = vld [vmem:[#allocation2 + $0x10] sm:$0xff]
      %v1249 = vld [vmem:[#allocation2 + $0x18] sm:$0xf]
      %s1250 = scalar_lea.vmem %s6, 12
      %v1251 = vld [vmem:[%s1250] sm:$0xf]
      %v1256 = vunpack.c.l.b16 %v1246
      %v1257 = vunpack.c.h.b16 %v1246
      %v1258 = vunpack.c.l.b16 %v1247
      %v1259 = vunpack.c.l.b16 %v1248
      %v1260 = vunpack.c.h.b16 %v1248
      %v1261 = vunpack.c.l.b16 %v1249
      %v1262 = vpack.c.b16 %v1259, %v1256
      %v1263 = vpack.c.b16 %v1260, %v1257
      %v1264 = vpack.c.b16 %v1261, %v1258
      %1265 = vrot.lane.b32.xlu0 %v1262, 1
      %v1266 = vpop.permute.xlu0 %1265
      %1267 = vrot.lane.b32.xlu0 %v1263, 1
      %v1268 = vpop.permute.xlu0 %1267
      %1269 = vrot.lane.b32.xlu0 %v1264, 1
      %v1270 = vpop.permute.xlu0 %1269
      %vm1271 = vcmask 7168
      %v1272 = vsel %vm1271, %v1266, %v1268
      %v1273 = vsel %vm1271, %v1268, %v1270
      %v1277 = vsel %vm337, %v1251, 0
      %1279 = vmatpush.bf16.msra.mxu0 0
      %1280 = vmatpush.bf16.msra.mxu0 0
      %1281 = vmatpush.bf16.msra.mxu0 0
      %1282 = vmatpush.bf16.msra.mxu0 0
      %1283 = vmatpush.bf16.msra.mxu0 0
      %1284 = vmatpush.bf16.msra.mxu0 0
      %1285 = vmatpush.bf16.msra.mxu0 0
      %1286 = vmatpush.bf16.msra.mxu0 %v1272
      %1287 = vmatmul.bf16.gmra.mxu0 %v1277
      %v1288 = vpop.f32.mrf.mxu0
      %v1289 = vadd.f32 0.0, %v1288
      %v1290 = vpop.f32.mrf.mxu0
      %1291 = vdwg.mxu0
      %1292 = vmatpush.bf16.msra.mxu0 0
      %1293 = vmatpush.bf16.msra.mxu0 0
      %1294 = vmatpush.bf16.msra.mxu0 0
      %1295 = vmatpush.bf16.msra.mxu0 0
      %1296 = vmatpush.bf16.msra.mxu0 0
      %1297 = vmatpush.bf16.msra.mxu0 0
      %1298 = vmatpush.bf16.msra.mxu0 0
      %1299 = vmatpush.bf16.msra.mxu0 %v1273
      %1300 = vmatmul.bf16.gmra.mxu0 %v1277
      %v1301 = vpop.f32.mrf.mxu0
      %v1302 = vadd.f32 0.0, %v1301
      %v1303 = vpop.f32.mrf.mxu0
      %1304 = vdwg.mxu0
      %1305 = vrot.lane.b32.xlu0 %v1262, 17
      %v1306 = vpop.permute.xlu0 %1305
      %1307 = vrot.lane.b32.xlu0 %v1263, 17
      %v1308 = vpop.permute.xlu0 %1307
      %1309 = vrot.lane.b32.xlu0 %v1264, 17
      %v1310 = vpop.permute.xlu0 %1309
      %vm1311 = vcmask 138240
      %v1312 = vsel %vm1311, %v1306, %v1308
      %v1313 = vsel %vm1311, %v1308, %v1310
      %v1317 = vsel %vm337, %v1245, 0
      %1319 = vmatpush.bf16.msra.mxu0 0
      %1320 = vmatpush.bf16.msra.mxu0 0
      %1321 = vmatpush.bf16.msra.mxu0 0
      %1322 = vmatpush.bf16.msra.mxu0 0
      %1323 = vmatpush.bf16.msra.mxu0 0
      %1324 = vmatpush.bf16.msra.mxu0 0
      %1325 = vmatpush.bf16.msra.mxu0 0
      %1326 = vmatpush.bf16.msra.mxu0 %v1312
      %1327 = vmatmul.bf16.gmra.mxu0 %v1317
      %v1328 = vpop.f32.mrf.mxu0
      %v1329 = vadd.f32 %v1289, %v1328
      %v1330 = vpop.f32.mrf.mxu0
      %1331 = vdwg.mxu0
      %1332 = vmatpush.bf16.msra.mxu0 0
      %1333 = vmatpush.bf16.msra.mxu0 0
      %1334 = vmatpush.bf16.msra.mxu0 0
      %1335 = vmatpush.bf16.msra.mxu0 0
      %1336 = vmatpush.bf16.msra.mxu0 0
      %1337 = vmatpush.bf16.msra.mxu0 0
      %1338 = vmatpush.bf16.msra.mxu0 0
      %1339 = vmatpush.bf16.msra.mxu0 %v1313
      %1340 = vmatmul.bf16.gmra.mxu0 %v1317
      %v1341 = vpop.f32.mrf.mxu0
      %v1342 = vadd.f32 %v1302, %v1341
      %v1343 = vpop.f32.mrf.mxu0
      %1344 = vdwg.mxu0
      %s1345 = scalar_lea.vmem %s6, 24
      %v1346 = vld [vmem:[%s1345] sm:$0xf]
      %v1347 = vld [vmem:[#allocation2 + $0x4] sm:$0xff]
      %v1348 = vld [vmem:[#allocation2 + $0xc] sm:$0xf]
      %v1349 = vld [vmem:[#allocation2 + $0x14] sm:$0xff]
      %v1350 = vld [vmem:[#allocation2 + $0x1c] sm:$0xf]
      %v1355 = vunpack.c.l.b16 %v1347
      %v1356 = vunpack.c.h.b16 %v1347
      %v1357 = vunpack.c.l.b16 %v1348
      %v1358 = vunpack.c.l.b16 %v1349
      %v1359 = vunpack.c.h.b16 %v1349
      %v1360 = vunpack.c.l.b16 %v1350
      %v1361 = vpack.c.b16 %v1358, %v1355
      %v1362 = vpack.c.b16 %v1359, %v1356
      %v1363 = vpack.c.b16 %v1360, %v1357
      %1364 = vrot.lane.b32.xlu0 %v1361, 113
      %v1365 = vpop.permute.xlu0 %1364
      %1366 = vrot.lane.b32.xlu0 %v1362, 113
      %v1367 = vpop.permute.xlu0 %1366
      %1368 = vrot.lane.b32.xlu0 %v1363, 113
      %v1369 = vpop.permute.xlu0 %1368
      %vm1370 = vcmask 924672
      %v1371 = vsel %vm1370, %v1365, %v1367
      %v1372 = vsel %vm1370, %v1367, %v1369
      %v1376 = vsel %vm337, %v1346, 0
      %1378 = vmatpush.bf16.msra.mxu0 0
      %1379 = vmatpush.bf16.msra.mxu0 0
      %1380 = vmatpush.bf16.msra.mxu0 0
      %1381 = vmatpush.bf16.msra.mxu0 0
      %1382 = vmatpush.bf16.msra.mxu0 0
      %1383 = vmatpush.bf16.msra.mxu0 0
      %1384 = vmatpush.bf16.msra.mxu0 0
      %1385 = vmatpush.bf16.msra.mxu0 %v1371
      %1386 = vmatmul.bf16.gmra.mxu0 %v1376
      %v1387 = vpop.f32.mrf.mxu0
      %v1388 = vadd.f32 0.0, %v1387
      %v1389 = vpop.f32.mrf.mxu0
      %1390 = vdwg.mxu0
      %1391 = vmatpush.bf16.msra.mxu0 0
      %1392 = vmatpush.bf16.msra.mxu0 0
      %1393 = vmatpush.bf16.msra.mxu0 0
      %1394 = vmatpush.bf16.msra.mxu0 0
      %1395 = vmatpush.bf16.msra.mxu0 0
      %1396 = vmatpush.bf16.msra.mxu0 0
      %1397 = vmatpush.bf16.msra.mxu0 0
      %1398 = vmatpush.bf16.msra.mxu0 %v1372
      %1399 = vmatmul.bf16.gmra.mxu0 %v1376
      %v1400 = vpop.f32.mrf.mxu0
      %v1401 = vadd.f32 0.0, %v1400
      %v1402 = vpop.f32.mrf.mxu0
      %1403 = vdwg.mxu0
      %v1404 = vadd.f32 %v1329, %v1388
      %v1405 = vadd.f32 %v1342, %v1401
      %v1406 = vld [vmem:[%s2] ss:$2 sm:$0x3]
      %v1408 = vperm.slane %v1406, 0
      %v1409 = vperm.slane %v1406, 1
      %v1412 = vmul.f32 %v1404, %v1408
      %v1413 = vmul.f32 %v1405, %v1409
      %v1414 = vadd.f32 %v1412, 0.0
      %v1415 = vadd.f32 %v1413, 0.0
      %s1416 = scalar_lea.vmem %s6, 4
      %v1417 = vld [vmem:[%s1416] sm:$0xf]
      %s1418 = scalar_lea.vmem %s6, 16
      %v1419 = vld [vmem:[%s1418] sm:$0xf]
      %v1420 = vld [vmem:[#allocation2 + $0x4] sm:$0xff]
      %v1421 = vld [vmem:[#allocation2 + $0x14] sm:$0xff]
      %v1424 = vunpack.c.l.b16 %v1420
      %v1425 = vunpack.c.h.b16 %v1420
      %v1426 = vunpack.c.l.b16 %v1421
      %v1427 = vunpack.c.h.b16 %v1421
      %v1428 = vpack.c.b16 %v1426, %v1424
      %v1429 = vpack.c.b16 %v1427, %v1425
      %v1433 = vsel %vm337, %v1419, 0
      %1435 = vmatpush.bf16.msra.mxu0 0
      %1436 = vmatpush.bf16.msra.mxu0 0
      %1437 = vmatpush.bf16.msra.mxu0 0
      %1438 = vmatpush.bf16.msra.mxu0 0
      %1439 = vmatpush.bf16.msra.mxu0 0
      %1440 = vmatpush.bf16.msra.mxu0 0
      %1441 = vmatpush.bf16.msra.mxu0 0
      %1442 = vmatpush.bf16.msra.mxu0 %v1428
      %1443 = vmatmul.bf16.gmra.mxu0 %v1433
      %v1444 = vpop.f32.mrf.mxu0
      %v1445 = vadd.f32 0.0, %v1444
      %v1446 = vpop.f32.mrf.mxu0
      %1447 = vdwg.mxu0
      %1448 = vmatpush.bf16.msra.mxu0 0
      %1449 = vmatpush.bf16.msra.mxu0 0
      %1450 = vmatpush.bf16.msra.mxu0 0
      %1451 = vmatpush.bf16.msra.mxu0 0
      %1452 = vmatpush.bf16.msra.mxu0 0
      %1453 = vmatpush.bf16.msra.mxu0 0
      %1454 = vmatpush.bf16.msra.mxu0 0
      %1455 = vmatpush.bf16.msra.mxu0 %v1429
      %1456 = vmatmul.bf16.gmra.mxu0 %v1433
      %v1457 = vpop.f32.mrf.mxu0
      %v1458 = vadd.f32 0.0, %v1457
      %v1459 = vpop.f32.mrf.mxu0
      %1460 = vdwg.mxu0
      %1461 = vrot.lane.b32.xlu0 %v1262, 16
      %v1462 = vpop.permute.xlu0 %1461
      %1463 = vrot.lane.b32.xlu0 %v1263, 16
      %v1464 = vpop.permute.xlu0 %1463
      %1465 = vrot.lane.b32.xlu0 %v1264, 16
      %v1466 = vpop.permute.xlu0 %1465
      %vm1467 = vcmask 130048
      %v1468 = vsel %vm1467, %v1462, %v1464
      %v1469 = vsel %vm1467, %v1464, %v1466
      %v1473 = vsel %vm337, %v1417, 0
      %1475 = vmatpush.bf16.msra.mxu0 0
      %1476 = vmatpush.bf16.msra.mxu0 0
      %1477 = vmatpush.bf16.msra.mxu0 0
      %1478 = vmatpush.bf16.msra.mxu0 0
      %1479 = vmatpush.bf16.msra.mxu0 0
      %1480 = vmatpush.bf16.msra.mxu0 0
      %1481 = vmatpush.bf16.msra.mxu0 0
      %1482 = vmatpush.bf16.msra.mxu0 %v1468
      %1483 = vmatmul.bf16.gmra.mxu0 %v1473
      %v1484 = vpop.f32.mrf.mxu0
      %v1485 = vadd.f32 %v1445, %v1484
      %v1486 = vpop.f32.mrf.mxu0
      %1487 = vdwg.mxu0
      %1488 = vmatpush.bf16.msra.mxu0 0
      %1489 = vmatpush.bf16.msra.mxu0 0
      %1490 = vmatpush.bf16.msra.mxu0 0
      %1491 = vmatpush.bf16.msra.mxu0 0
      %1492 = vmatpush.bf16.msra.mxu0 0
      %1493 = vmatpush.bf16.msra.mxu0 0
      %1494 = vmatpush.bf16.msra.mxu0 0
      %1495 = vmatpush.bf16.msra.mxu0 %v1469
      %1496 = vmatmul.bf16.gmra.mxu0 %v1473
      %v1497 = vpop.f32.mrf.mxu0
      %v1498 = vadd.f32 %v1458, %v1497
      %v1499 = vpop.f32.mrf.mxu0
      %1500 = vdwg.mxu0
      %s1501 = scalar_lea.vmem %s6, 28
      %v1502 = vld [vmem:[%s1501] sm:$0xf]
      %1503 = vrot.lane.b32.xlu0 %v1361, 112
      %v1504 = vpop.permute.xlu0 %1503
      %1505 = vrot.lane.b32.xlu0 %v1362, 112
      %v1506 = vpop.permute.xlu0 %1505
      %1507 = vrot.lane.b32.xlu0 %v1363, 112
      %v1508 = vpop.permute.xlu0 %1507
      %vm1509 = vcmask 916480
      %v1510 = vsel %vm1509, %v1504, %v1506
      %v1511 = vsel %vm1509, %v1506, %v1508
      %v1515 = vsel %vm337, %v1502, 0
      %1517 = vmatpush.bf16.msra.mxu0 0
      %1518 = vmatpush.bf16.msra.mxu0 0
      %1519 = vmatpush.bf16.msra.mxu0 0
      %1520 = vmatpush.bf16.msra.mxu0 0
      %1521 = vmatpush.bf16.msra.mxu0 0
      %1522 = vmatpush.bf16.msra.mxu0 0
      %1523 = vmatpush.bf16.msra.mxu0 0
      %1524 = vmatpush.bf16.msra.mxu0 %v1510
      %1525 = vmatmul.bf16.gmra.mxu0 %v1515
      %v1526 = vpop.f32.mrf.mxu0
      %v1527 = vadd.f32 0.0, %v1526
      %v1528 = vpop.f32.mrf.mxu0
      %1529 = vdwg.mxu0
      %1530 = vmatpush.bf16.msra.mxu0 0
      %1531 = vmatpush.bf16.msra.mxu0 0
      %1532 = vmatpush.bf16.msra.mxu0 0
      %1533 = vmatpush.bf16.msra.mxu0 0
      %1534 = vmatpush.bf16.msra.mxu0 0
      %1535 = vmatpush.bf16.msra.mxu0 0
      %1536 = vmatpush.bf16.msra.mxu0 0
      %1537 = vmatpush.bf16.msra.mxu0 %v1511
      %1538 = vmatmul.bf16.gmra.mxu0 %v1515
      %v1539 = vpop.f32.mrf.mxu0
      %v1540 = vadd.f32 0.0, %v1539
      %v1541 = vpop.f32.mrf.mxu0
      %1542 = vdwg.mxu0
      %v1543 = vadd.f32 %v1485, %v1527
      %v1544 = vadd.f32 %v1498, %v1540
      %v1545 = vadd.f32 %v1414, %v1543
      %v1546 = vadd.f32 %v1415, %v1544
      %s1547 = scalar_lea.vmem %s6, 8
      %v1548 = vld [vmem:[%s1547] sm:$0xf]
      %s1549 = scalar_lea.vmem %s6, 20
      %v1550 = vld [vmem:[%s1549] sm:$0xf]
      %1551 = vrot.lane.b32.xlu0 %v1361, 127
      %v1552 = vpop.permute.xlu0 %1551
      %1553 = vrot.lane.b32.xlu0 %v1362, 127
      %v1554 = vpop.permute.xlu0 %1553
      %1555 = vrot.lane.b32.xlu0 %v1363, 127
      %v1556 = vpop.permute.xlu0 %1555
      %vm1557 = vcmask 1039360
      %v1558 = vsel %vm1557, %v1552, %v1554
      %v1559 = vsel %vm1557, %v1554, %v1556
      %v1563 = vsel %vm337, %v1550, 0
      %1565 = vmatpush.bf16.msra.mxu0 0
      %1566 = vmatpush.bf16.msra.mxu0 0
      %1567 = vmatpush.bf16.msra.mxu0 0
      %1568 = vmatpush.bf16.msra.mxu0 0
      %1569 = vmatpush.bf16.msra.mxu0 0
      %1570 = vmatpush.bf16.msra.mxu0 0
      %1571 = vmatpush.bf16.msra.mxu0 0
      %1572 = vmatpush.bf16.msra.mxu0 %v1558
      %1573 = vmatmul.bf16.gmra.mxu0 %v1563
      %v1574 = vpop.f32.mrf.mxu0
      %v1575 = vadd.f32 0.0, %v1574
      %v1576 = vpop.f32.mrf.mxu0
      %1577 = vdwg.mxu0
      %1578 = vmatpush.bf16.msra.mxu0 0
      %1579 = vmatpush.bf16.msra.mxu0 0
      %1580 = vmatpush.bf16.msra.mxu0 0
      %1581 = vmatpush.bf16.msra.mxu0 0
      %1582 = vmatpush.bf16.msra.mxu0 0
      %1583 = vmatpush.bf16.msra.mxu0 0
      %1584 = vmatpush.bf16.msra.mxu0 0
      %1585 = vmatpush.bf16.msra.mxu0 %v1559
      %1586 = vmatmul.bf16.gmra.mxu0 %v1563
      %v1587 = vpop.f32.mrf.mxu0
      %v1588 = vadd.f32 0.0, %v1587
      %v1589 = vpop.f32.mrf.mxu0
      %1590 = vdwg.mxu0
      %1591 = vrot.lane.b32.xlu0 %v1262, 15
      %v1592 = vpop.permute.xlu0 %1591
      %1593 = vrot.lane.b32.xlu0 %v1263, 15
      %v1594 = vpop.permute.xlu0 %1593
      %1595 = vrot.lane.b32.xlu0 %v1264, 15
      %v1596 = vpop.permute.xlu0 %1595
      %vm1597 = vcmask 121856
      %v1598 = vsel %vm1597, %v1592, %v1594
      %v1599 = vsel %vm1597, %v1594, %v1596
      %v1603 = vsel %vm337, %v1548, 0
      %1605 = vmatpush.bf16.msra.mxu0 0
      %1606 = vmatpush.bf16.msra.mxu0 0
      %1607 = vmatpush.bf16.msra.mxu0 0
      %1608 = vmatpush.bf16.msra.mxu0 0
      %1609 = vmatpush.bf16.msra.mxu0 0
      %1610 = vmatpush.bf16.msra.mxu0 0
      %1611 = vmatpush.bf16.msra.mxu0 0
      %1612 = vmatpush.bf16.msra.mxu0 %v1598
      %1613 = vmatmul.bf16.gmra.mxu0 %v1603
      %v1614 = vpop.f32.mrf.mxu0
      %v1615 = vadd.f32 %v1575, %v1614
      %v1616 = vpop.f32.mrf.mxu0
      %1617 = vdwg.mxu0
      %1618 = vmatpush.bf16.msra.mxu0 0
      %1619 = vmatpush.bf16.msra.mxu0 0
      %1620 = vmatpush.bf16.msra.mxu0 0
      %1621 = vmatpush.bf16.msra.mxu0 0
      %1622 = vmatpush.bf16.msra.mxu0 0
      %1623 = vmatpush.bf16.msra.mxu0 0
      %1624 = vmatpush.bf16.msra.mxu0 0
      %1625 = vmatpush.bf16.msra.mxu0 %v1599
      %1626 = vmatmul.bf16.gmra.mxu0 %v1603
      %v1627 = vpop.f32.mrf.mxu0
      %v1628 = vadd.f32 %v1588, %v1627
      %v1629 = vpop.f32.mrf.mxu0
      %1630 = vdwg.mxu0
      %s1631 = scalar_lea.vmem %s6, 32
      %v1632 = vld [vmem:[%s1631] sm:$0xf]
      %1633 = vrot.lane.b32.xlu0 %v1361, 111
      %v1634 = vpop.permute.xlu0 %1633
      %1635 = vrot.lane.b32.xlu0 %v1362, 111
      %v1636 = vpop.permute.xlu0 %1635
      %1637 = vrot.lane.b32.xlu0 %v1363, 111
      %v1638 = vpop.permute.xlu0 %1637
      %vm1639 = vcmask 908288
      %v1640 = vsel %vm1639, %v1634, %v1636
      %v1641 = vsel %vm1639, %v1636, %v1638
      %v1645 = vsel %vm337, %v1632, 0
      %1647 = vmatpush.bf16.msra.mxu0 0
      %1648 = vmatpush.bf16.msra.mxu0 0
      %1649 = vmatpush.bf16.msra.mxu0 0
      %1650 = vmatpush.bf16.msra.mxu0 0
      %1651 = vmatpush.bf16.msra.mxu0 0
      %1652 = vmatpush.bf16.msra.mxu0 0
      %1653 = vmatpush.bf16.msra.mxu0 0
      %1654 = vmatpush.bf16.msra.mxu0 %v1640
      %1655 = vmatmul.bf16.gmra.mxu0 %v1645
      %v1656 = vpop.f32.mrf.mxu0
      %v1657 = vadd.f32 0.0, %v1656
      %v1658 = vpop.f32.mrf.mxu0
      %1659 = vdwg.mxu0
      %1660 = vmatpush.bf16.msra.mxu0 0
      %1661 = vmatpush.bf16.msra.mxu0 0
      %1662 = vmatpush.bf16.msra.mxu0 0
      %1663 = vmatpush.bf16.msra.mxu0 0
      %1664 = vmatpush.bf16.msra.mxu0 0
      %1665 = vmatpush.bf16.msra.mxu0 0
      %1666 = vmatpush.bf16.msra.mxu0 0
      %1667 = vmatpush.bf16.msra.mxu0 %v1641
      %1668 = vmatmul.bf16.gmra.mxu0 %v1645
      %v1669 = vpop.f32.mrf.mxu0
      %v1670 = vadd.f32 0.0, %v1669
      %v1671 = vpop.f32.mrf.mxu0
      %1672 = vdwg.mxu0
      %v1673 = vadd.f32 %v1615, %v1657
      %v1674 = vadd.f32 %v1628, %v1670
      %s1675 = scalar_lea.vmem %s2, 1
      %v1676 = vld [vmem:[%s1675] ss:$2 sm:$0x3]
      %v1678 = vperm.slane %v1676, 0
      %v1679 = vperm.slane %v1676, 1
      %v1682 = vmul.f32 %v1673, %v1678
      %v1683 = vmul.f32 %v1674, %v1679
      %v1684 = vadd.f32 %v1545, %v1682
      %v1685 = vadd.f32 %v1546, %v1683
      %v1686 = vmax.f32 %v1684, 0.0
      %v1687 = vmax.f32 %v1685, 0.0
      %v1688 = vpack.c.bf16 %v1687, %v1686
      %1689 = vst [vmem:[#allocation3 + $0x4] sm:$0xff] %v1688
      %v1690 = vld [vmem:[%s7] sm:$0xf]
      %v1691 = vld [vmem:[#allocation3] sm:$0xff]
      %v1692 = vld [vmem:[#allocation3 + $0x8] sm:$0xf]
      %s1693 = scalar_lea.vmem %s7, 12
      %v1694 = vld [vmem:[%s1693] sm:$0xf]
      %v1697 = vunpack.c.l.b16 %v1691
      %v1698 = vunpack.c.h.b16 %v1691
      %v1699 = vunpack.c.l.b16 %v1692
      %v1700 = vpack.c.b16 %v1697, %v1697
      %v1701 = vpack.c.b16 %v1698, %v1698
      %v1702 = vpack.c.b16 %v1699, %v1699
      %1703 = vrot.lane.b32.xlu0 %v1700, 1
      %v1704 = vpop.permute.xlu0 %1703
      %1705 = vrot.lane.b32.xlu0 %v1701, 1
      %v1706 = vpop.permute.xlu0 %1705
      %1707 = vrot.lane.b32.xlu0 %v1702, 1
      %v1708 = vpop.permute.xlu0 %1707
      %v1709 = vsel %vm1271, %v1704, %v1706
      %v1710 = vsel %vm1271, %v1706, %v1708
      %v1712 = vsel %vm416, %v1694, 0
      %v1715 = vsel %vm420, %v1709, 0
      %v1718 = vsel %vm420, %v1710, 0
      %1720 = vmatpush.bf16.msra.mxu0 0
      %1721 = vmatpush.bf16.msra.mxu0 0
      %1722 = vmatpush.bf16.msra.mxu0 0
      %1723 = vmatpush.bf16.msra.mxu0 0
      %1724 = vmatpush.bf16.msra.mxu0 0
      %1725 = vmatpush.bf16.msra.mxu0 0
      %1726 = vmatpush.bf16.msra.mxu0 0
      %1727 = vmatpush.bf16.msra.mxu0 %v1715
      %1728 = vmatmul.bf16.gmra.mxu0 %v1712
      %v1729 = vpop.f32.mrf.mxu0
      %v1730 = vadd.f32 0.0, %v1729
      %v1731 = vpop.f32.mrf.mxu0
      %1732 = vdwg.mxu0
      %1733 = vmatpush.bf16.msra.mxu0 0
      %1734 = vmatpush.bf16.msra.mxu0 0
      %1735 = vmatpush.bf16.msra.mxu0 0
      %1736 = vmatpush.bf16.msra.mxu0 0
      %1737 = vmatpush.bf16.msra.mxu0 0
      %1738 = vmatpush.bf16.msra.mxu0 0
      %1739 = vmatpush.bf16.msra.mxu0 0
      %1740 = vmatpush.bf16.msra.mxu0 %v1718
      %1741 = vmatmul.bf16.gmra.mxu0 %v1712
      %v1742 = vpop.f32.mrf.mxu0
      %v1743 = vadd.f32 0.0, %v1742
      %v1744 = vpop.f32.mrf.mxu0
      %1745 = vdwg.mxu0
      %1746 = vrot.lane.b32.xlu0 %v1700, 17
      %v1747 = vpop.permute.xlu0 %1746
      %1748 = vrot.lane.b32.xlu0 %v1701, 17
      %v1749 = vpop.permute.xlu0 %1748
      %1750 = vrot.lane.b32.xlu0 %v1702, 17
      %v1751 = vpop.permute.xlu0 %1750
      %v1752 = vsel %vm1311, %v1747, %v1749
      %v1753 = vsel %vm1311, %v1749, %v1751
      %v1755 = vsel %vm416, %v1690, 0
      %v1758 = vsel %vm420, %v1752, 0
      %v1761 = vsel %vm420, %v1753, 0
      %1763 = vmatpush.bf16.msra.mxu0 0
      %1764 = vmatpush.bf16.msra.mxu0 0
      %1765 = vmatpush.bf16.msra.mxu0 0
      %1766 = vmatpush.bf16.msra.mxu0 0
      %1767 = vmatpush.bf16.msra.mxu0 0
      %1768 = vmatpush.bf16.msra.mxu0 0
      %1769 = vmatpush.bf16.msra.mxu0 0
      %1770 = vmatpush.bf16.msra.mxu0 %v1758
      %1771 = vmatmul.bf16.gmra.mxu0 %v1755
      %v1772 = vpop.f32.mrf.mxu0
      %v1773 = vadd.f32 %v1730, %v1772
      %v1774 = vpop.f32.mrf.mxu0
      %1775 = vdwg.mxu0
      %1776 = vmatpush.bf16.msra.mxu0 0
      %1777 = vmatpush.bf16.msra.mxu0 0
      %1778 = vmatpush.bf16.msra.mxu0 0
      %1779 = vmatpush.bf16.msra.mxu0 0
      %1780 = vmatpush.bf16.msra.mxu0 0
      %1781 = vmatpush.bf16.msra.mxu0 0
      %1782 = vmatpush.bf16.msra.mxu0 0
      %1783 = vmatpush.bf16.msra.mxu0 %v1761
      %1784 = vmatmul.bf16.gmra.mxu0 %v1755
      %v1785 = vpop.f32.mrf.mxu0
      %v1786 = vadd.f32 %v1743, %v1785
      %v1787 = vpop.f32.mrf.mxu0
      %1788 = vdwg.mxu0
      %s1789 = scalar_lea.vmem %s7, 24
      %v1790 = vld [vmem:[%s1789] sm:$0xf]
      %v1791 = vld [vmem:[#allocation3 + $0x4] sm:$0xff]
      %v1792 = vld [vmem:[#allocation3 + $0xc] sm:$0xf]
      %v1795 = vunpack.c.l.b16 %v1791
      %v1796 = vunpack.c.h.b16 %v1791
      %v1797 = vunpack.c.l.b16 %v1792
      %v1798 = vpack.c.b16 %v1795, %v1795
      %v1799 = vpack.c.b16 %v1796, %v1796
      %v1800 = vpack.c.b16 %v1797, %v1797
      %1801 = vrot.lane.b32.xlu0 %v1798, 113
      %v1802 = vpop.permute.xlu0 %1801
      %1803 = vrot.lane.b32.xlu0 %v1799, 113
      %v1804 = vpop.permute.xlu0 %1803
      %1805 = vrot.lane.b32.xlu0 %v1800, 113
      %v1806 = vpop.permute.xlu0 %1805
      %v1807 = vsel %vm1370, %v1802, %v1804
      %v1808 = vsel %vm1370, %v1804, %v1806
      %v1810 = vsel %vm416, %v1790, 0
      %v1813 = vsel %vm420, %v1807, 0
      %v1816 = vsel %vm420, %v1808, 0
      %1818 = vmatpush.bf16.msra.mxu0 0
      %1819 = vmatpush.bf16.msra.mxu0 0
      %1820 = vmatpush.bf16.msra.mxu0 0
      %1821 = vmatpush.bf16.msra.mxu0 0
      %1822 = vmatpush.bf16.msra.mxu0 0
      %1823 = vmatpush.bf16.msra.mxu0 0
      %1824 = vmatpush.bf16.msra.mxu0 0
      %1825 = vmatpush.bf16.msra.mxu0 %v1813
      %1826 = vmatmul.bf16.gmra.mxu0 %v1810
      %v1827 = vpop.f32.mrf.mxu0
      %v1828 = vadd.f32 0.0, %v1827
      %v1829 = vpop.f32.mrf.mxu0
      %1830 = vdwg.mxu0
      %1831 = vmatpush.bf16.msra.mxu0 0
      %1832 = vmatpush.bf16.msra.mxu0 0
      %1833 = vmatpush.bf16.msra.mxu0 0
      %1834 = vmatpush.bf16.msra.mxu0 0
      %1835 = vmatpush.bf16.msra.mxu0 0
      %1836 = vmatpush.bf16.msra.mxu0 0
      %1837 = vmatpush.bf16.msra.mxu0 0
      %1838 = vmatpush.bf16.msra.mxu0 %v1816
      %1839 = vmatmul.bf16.gmra.mxu0 %v1810
      %v1840 = vpop.f32.mrf.mxu0
      %v1841 = vadd.f32 0.0, %v1840
      %v1842 = vpop.f32.mrf.mxu0
      %1843 = vdwg.mxu0
      %v1844 = vadd.f32 %v1773, %v1828
      %v1845 = vadd.f32 %v1786, %v1841
      %v1846 = vld [vmem:[%s2] ss:$2 sm:$0x3]
      %v1848 = vperm.slane %v1846, 0
      %v1849 = vperm.slane %v1846, 1
      %v1852 = vmul.f32 %v1844, %v1848
      %v1853 = vmul.f32 %v1845, %v1849
      %v1854 = vadd.f32 %v1852, 0.0
      %v1855 = vadd.f32 %v1853, 0.0
      %s1856 = scalar_lea.vmem %s7, 4
      %v1857 = vld [vmem:[%s1856] sm:$0xf]
      %s1858 = scalar_lea.vmem %s7, 16
      %v1859 = vld [vmem:[%s1858] sm:$0xf]
      %v1860 = vld [vmem:[#allocation3 + $0x4] sm:$0xff]
      %v1862 = vunpack.c.l.b16 %v1860
      %v1863 = vunpack.c.h.b16 %v1860
      %v1864 = vpack.c.b16 %v1862, %v1862
      %v1865 = vpack.c.b16 %v1863, %v1863
      %v1867 = vsel %vm416, %v1859, 0
      %v1870 = vsel %vm420, %v1864, 0
      %v1873 = vsel %vm420, %v1865, 0
      %1875 = vmatpush.bf16.msra.mxu0 0
      %1876 = vmatpush.bf16.msra.mxu0 0
      %1877 = vmatpush.bf16.msra.mxu0 0
      %1878 = vmatpush.bf16.msra.mxu0 0
      %1879 = vmatpush.bf16.msra.mxu0 0
      %1880 = vmatpush.bf16.msra.mxu0 0
      %1881 = vmatpush.bf16.msra.mxu0 0
      %1882 = vmatpush.bf16.msra.mxu0 %v1870
      %1883 = vmatmul.bf16.gmra.mxu0 %v1867
      %v1884 = vpop.f32.mrf.mxu0
      %v1885 = vadd.f32 0.0, %v1884
      %v1886 = vpop.f32.mrf.mxu0
      %1887 = vdwg.mxu0
      %1888 = vmatpush.bf16.msra.mxu0 0
      %1889 = vmatpush.bf16.msra.mxu0 0
      %1890 = vmatpush.bf16.msra.mxu0 0
      %1891 = vmatpush.bf16.msra.mxu0 0
      %1892 = vmatpush.bf16.msra.mxu0 0
      %1893 = vmatpush.bf16.msra.mxu0 0
      %1894 = vmatpush.bf16.msra.mxu0 0
      %1895 = vmatpush.bf16.msra.mxu0 %v1873
      %1896 = vmatmul.bf16.gmra.mxu0 %v1867
      %v1897 = vpop.f32.mrf.mxu0
      %v1898 = vadd.f32 0.0, %v1897
      %v1899 = vpop.f32.mrf.mxu0
      %1900 = vdwg.mxu0
      %1901 = vrot.lane.b32.xlu0 %v1700, 16
      %v1902 = vpop.permute.xlu0 %1901
      %1903 = vrot.lane.b32.xlu0 %v1701, 16
      %v1904 = vpop.permute.xlu0 %1903
      %1905 = vrot.lane.b32.xlu0 %v1702, 16
      %v1906 = vpop.permute.xlu0 %1905
      %v1907 = vsel %vm1467, %v1902, %v1904
      %v1908 = vsel %vm1467, %v1904, %v1906
      %v1910 = vsel %vm416, %v1857, 0
      %v1913 = vsel %vm420, %v1907, 0
      %v1916 = vsel %vm420, %v1908, 0
      %1918 = vmatpush.bf16.msra.mxu0 0
      %1919 = vmatpush.bf16.msra.mxu0 0
      %1920 = vmatpush.bf16.msra.mxu0 0
      %1921 = vmatpush.bf16.msra.mxu0 0
      %1922 = vmatpush.bf16.msra.mxu0 0
      %1923 = vmatpush.bf16.msra.mxu0 0
      %1924 = vmatpush.bf16.msra.mxu0 0
      %1925 = vmatpush.bf16.msra.mxu0 %v1913
      %1926 = vmatmul.bf16.gmra.mxu0 %v1910
      %v1927 = vpop.f32.mrf.mxu0
      %v1928 = vadd.f32 %v1885, %v1927
      %v1929 = vpop.f32.mrf.mxu0
      %1930 = vdwg.mxu0
      %1931 = vmatpush.bf16.msra.mxu0 0
      %1932 = vmatpush.bf16.msra.mxu0 0
      %1933 = vmatpush.bf16.msra.mxu0 0
      %1934 = vmatpush.bf16.msra.mxu0 0
      %1935 = vmatpush.bf16.msra.mxu0 0
      %1936 = vmatpush.bf16.msra.mxu0 0
      %1937 = vmatpush.bf16.msra.mxu0 0
      %1938 = vmatpush.bf16.msra.mxu0 %v1916
      %1939 = vmatmul.bf16.gmra.mxu0 %v1910
      %v1940 = vpop.f32.mrf.mxu0
      %v1941 = vadd.f32 %v1898, %v1940
      %v1942 = vpop.f32.mrf.mxu0
      %1943 = vdwg.mxu0
      %s1944 = scalar_lea.vmem %s7, 28
      %v1945 = vld [vmem:[%s1944] sm:$0xf]
      %1946 = vrot.lane.b32.xlu0 %v1798, 112
      %v1947 = vpop.permute.xlu0 %1946
      %1948 = vrot.lane.b32.xlu0 %v1799, 112
      %v1949 = vpop.permute.xlu0 %1948
      %1950 = vrot.lane.b32.xlu0 %v1800, 112
      %v1951 = vpop.permute.xlu0 %1950
      %v1952 = vsel %vm1509, %v1947, %v1949
      %v1953 = vsel %vm1509, %v1949, %v1951
      %v1955 = vsel %vm416, %v1945, 0
      %v1958 = vsel %vm420, %v1952, 0
      %v1961 = vsel %vm420, %v1953, 0
      %1963 = vmatpush.bf16.msra.mxu0 0
      %1964 = vmatpush.bf16.msra.mxu0 0
      %1965 = vmatpush.bf16.msra.mxu0 0
      %1966 = vmatpush.bf16.msra.mxu0 0
      %1967 = vmatpush.bf16.msra.mxu0 0
      %1968 = vmatpush.bf16.msra.mxu0 0
      %1969 = vmatpush.bf16.msra.mxu0 0
      %1970 = vmatpush.bf16.msra.mxu0 %v1958
      %1971 = vmatmul.bf16.gmra.mxu0 %v1955
      %v1972 = vpop.f32.mrf.mxu0
      %v1973 = vadd.f32 0.0, %v1972
      %v1974 = vpop.f32.mrf.mxu0
      %1975 = vdwg.mxu0
      %1976 = vmatpush.bf16.msra.mxu0 0
      %1977 = vmatpush.bf16.msra.mxu0 0
      %1978 = vmatpush.bf16.msra.mxu0 0
      %1979 = vmatpush.bf16.msra.mxu0 0
      %1980 = vmatpush.bf16.msra.mxu0 0
      %1981 = vmatpush.bf16.msra.mxu0 0
      %1982 = vmatpush.bf16.msra.mxu0 0
      %1983 = vmatpush.bf16.msra.mxu0 %v1961
      %1984 = vmatmul.bf16.gmra.mxu0 %v1955
      %v1985 = vpop.f32.mrf.mxu0
      %v1986 = vadd.f32 0.0, %v1985
      %v1987 = vpop.f32.mrf.mxu0
      %1988 = vdwg.mxu0
      %v1989 = vadd.f32 %v1928, %v1973
      %v1990 = vadd.f32 %v1941, %v1986
      %v1991 = vadd.f32 %v1854, %v1989
      %v1992 = vadd.f32 %v1855, %v1990
      %s1993 = scalar_lea.vmem %s7, 8
      %v1994 = vld [vmem:[%s1993] sm:$0xf]
      %s1995 = scalar_lea.vmem %s7, 20
      %v1996 = vld [vmem:[%s1995] sm:$0xf]
      %1997 = vrot.lane.b32.xlu0 %v1798, 127
      %v1998 = vpop.permute.xlu0 %1997
      %1999 = vrot.lane.b32.xlu0 %v1799, 127
      %v2000 = vpop.permute.xlu0 %1999
      %2001 = vrot.lane.b32.xlu0 %v1800, 127
      %v2002 = vpop.permute.xlu0 %2001
      %v2003 = vsel %vm1557, %v1998, %v2000
      %v2004 = vsel %vm1557, %v2000, %v2002
      %v2006 = vsel %vm416, %v1996, 0
      %v2009 = vsel %vm420, %v2003, 0
      %v2012 = vsel %vm420, %v2004, 0
      %2014 = vmatpush.bf16.msra.mxu0 0
      %2015 = vmatpush.bf16.msra.mxu0 0
      %2016 = vmatpush.bf16.msra.mxu0 0
      %2017 = vmatpush.bf16.msra.mxu0 0
      %2018 = vmatpush.bf16.msra.mxu0 0
      %2019 = vmatpush.bf16.msra.mxu0 0
      %2020 = vmatpush.bf16.msra.mxu0 0
      %2021 = vmatpush.bf16.msra.mxu0 %v2009
      %2022 = vmatmul.bf16.gmra.mxu0 %v2006
      %v2023 = vpop.f32.mrf.mxu0
      %v2024 = vadd.f32 0.0, %v2023
      %v2025 = vpop.f32.mrf.mxu0
      %2026 = vdwg.mxu0
      %2027 = vmatpush.bf16.msra.mxu0 0
      %2028 = vmatpush.bf16.msra.mxu0 0
      %2029 = vmatpush.bf16.msra.mxu0 0
      %2030 = vmatpush.bf16.msra.mxu0 0
      %2031 = vmatpush.bf16.msra.mxu0 0
      %2032 = vmatpush.bf16.msra.mxu0 0
      %2033 = vmatpush.bf16.msra.mxu0 0
      %2034 = vmatpush.bf16.msra.mxu0 %v2012
      %2035 = vmatmul.bf16.gmra.mxu0 %v2006
      %v2036 = vpop.f32.mrf.mxu0
      %v2037 = vadd.f32 0.0, %v2036
      %v2038 = vpop.f32.mrf.mxu0
      %2039 = vdwg.mxu0
      %2040 = vrot.lane.b32.xlu0 %v1700, 15
      %v2041 = vpop.permute.xlu0 %2040
      %2042 = vrot.lane.b32.xlu0 %v1701, 15
      %v2043 = vpop.permute.xlu0 %2042
      %2044 = vrot.lane.b32.xlu0 %v1702, 15
      %v2045 = vpop.permute.xlu0 %2044
      %v2046 = vsel %vm1597, %v2041, %v2043
      %v2047 = vsel %vm1597, %v2043, %v2045
      %v2049 = vsel %vm416, %v1994, 0
      %v2052 = vsel %vm420, %v2046, 0
      %v2055 = vsel %vm420, %v2047, 0
      %2057 = vmatpush.bf16.msra.mxu0 0
      %2058 = vmatpush.bf16.msra.mxu0 0
      %2059 = vmatpush.bf16.msra.mxu0 0
      %2060 = vmatpush.bf16.msra.mxu0 0
      %2061 = vmatpush.bf16.msra.mxu0 0
      %2062 = vmatpush.bf16.msra.mxu0 0
      %2063 = vmatpush.bf16.msra.mxu0 0
      %2064 = vmatpush.bf16.msra.mxu0 %v2052
      %2065 = vmatmul.bf16.gmra.mxu0 %v2049
      %v2066 = vpop.f32.mrf.mxu0
      %v2067 = vadd.f32 %v2024, %v2066
      %v2068 = vpop.f32.mrf.mxu0
      %2069 = vdwg.mxu0
      %2070 = vmatpush.bf16.msra.mxu0 0
      %2071 = vmatpush.bf16.msra.mxu0 0
      %2072 = vmatpush.bf16.msra.mxu0 0
      %2073 = vmatpush.bf16.msra.mxu0 0
      %2074 = vmatpush.bf16.msra.mxu0 0
      %2075 = vmatpush.bf16.msra.mxu0 0
      %2076 = vmatpush.bf16.msra.mxu0 0
      %2077 = vmatpush.bf16.msra.mxu0 %v2055
      %2078 = vmatmul.bf16.gmra.mxu0 %v2049
      %v2079 = vpop.f32.mrf.mxu0
      %v2080 = vadd.f32 %v2037, %v2079
      %v2081 = vpop.f32.mrf.mxu0
      %2082 = vdwg.mxu0
      %s2083 = scalar_lea.vmem %s7, 32
      %v2084 = vld [vmem:[%s2083] sm:$0xf]
      %2085 = vrot.lane.b32.xlu0 %v1798, 111
      %v2086 = vpop.permute.xlu0 %2085
      %2087 = vrot.lane.b32.xlu0 %v1799, 111
      %v2088 = vpop.permute.xlu0 %2087
      %2089 = vrot.lane.b32.xlu0 %v1800, 111
      %v2090 = vpop.permute.xlu0 %2089
      %v2091 = vsel %vm1639, %v2086, %v2088
      %v2092 = vsel %vm1639, %v2088, %v2090
      %v2094 = vsel %vm416, %v2084, 0
      %v2097 = vsel %vm420, %v2091, 0
      %v2100 = vsel %vm420, %v2092, 0
      %2102 = vmatpush.bf16.msra.mxu0 0
      %2103 = vmatpush.bf16.msra.mxu0 0
      %2104 = vmatpush.bf16.msra.mxu0 0
      %2105 = vmatpush.bf16.msra.mxu0 0
      %2106 = vmatpush.bf16.msra.mxu0 0
      %2107 = vmatpush.bf16.msra.mxu0 0
      %2108 = vmatpush.bf16.msra.mxu0 0
      %2109 = vmatpush.bf16.msra.mxu0 %v2097
      %2110 = vmatmul.bf16.gmra.mxu0 %v2094
      %v2111 = vpop.f32.mrf.mxu0
      %v2112 = vadd.f32 0.0, %v2111
      %v2113 = vpop.f32.mrf.mxu0
      %2114 = vdwg.mxu0
      %2115 = vmatpush.bf16.msra.mxu0 0
      %2116 = vmatpush.bf16.msra.mxu0 0
      %2117 = vmatpush.bf16.msra.mxu0 0
      %2118 = vmatpush.bf16.msra.mxu0 0
      %2119 = vmatpush.bf16.msra.mxu0 0
      %2120 = vmatpush.bf16.msra.mxu0 0
      %2121 = vmatpush.bf16.msra.mxu0 0
      %2122 = vmatpush.bf16.msra.mxu0 %v2100
      %2123 = vmatmul.bf16.gmra.mxu0 %v2094
      %v2124 = vpop.f32.mrf.mxu0
      %v2125 = vadd.f32 0.0, %v2124
      %v2126 = vpop.f32.mrf.mxu0
      %2127 = vdwg.mxu0
      %v2128 = vadd.f32 %v2067, %v2112
      %v2129 = vadd.f32 %v2080, %v2125
      %v2130 = vld [vmem:[%s1675] ss:$2 sm:$0x3]
      %v2132 = vperm.slane %v2130, 0
      %v2133 = vperm.slane %v2130, 1
      %v2136 = vmul.f32 %v2128, %v2132
      %v2137 = vmul.f32 %v2129, %v2133
      %v2138 = vadd.f32 %v1991, %v2136
      %v2139 = vadd.f32 %v1992, %v2137
      %v2140 = vmax.f32 %v2138, 0.0
      %v2141 = vmax.f32 %v2139, 0.0
      %2142 = vst [vmem:[%s325] sm:$0xff] %v2140
      %2143 = vst [vmem:[%s325 + $0x8] sm:$0xff] %v2141
      %p2144 = scmp.lt.s32.totalorder %s19, 1
      %s2145 = scalar_select %p2144, %s19, 1
      %s2146 = smul.addr %s2145, 2
      %s2147 = smul.addr %s2146, 8
      %s2148 = scalar_lea.vmem %s8, %s2147
      // Predicated region
      $region53: #{upblock_forward.1} parent=51 // pred_check
        %p2149 = pneg %p215
      $region54: #{upblock_forward.1} parent=51 // pred_check_branch
        %2151 = sbr.rel (%p2149) target = $region56
      $region55: #{upblock_forward.1} parent=51 // pred_region
        _
      $region56: #{upblock_forward.1} parent=51 // pred_fallthru
        _
    $region52: #{upblock_forward.1} parent=5 // pred_fallthru
      _
    %p2152 = scmp.le.s32.totalorder 2, %s14
    // Predicated region
    $region57: #{upblock_forward.1} parent=5 // pred_check
      %p2153 = pneg %p2152
    $region58: #{upblock_forward.1} parent=5 // pred_check_branch
      %2155 = sbr.rel (%p2153) target = $region60
    $region59: #{upblock_forward.1} parent=5 // pred_region
      %s2156 = ssub.s32 %s14, 2
      // Predicated region
      $region61: #{upblock_forward.1} parent=59 // pred_check
        %p2157 = pneg %p221
      $region62: #{upblock_forward.1} parent=59 // pred_check_branch
        %2159 = sbr.rel (%p2157) target = $region64
      $region63: #{upblock_forward.1} parent=59 // pred_region
        %p2160 = scmp.lt.s32.totalorder %s20, 1
        %s2161 = scalar_select %p2160, %s20, 1
        %s2162 = smul.addr %s2161, 2
        %s2163 = smul.addr %s2162, 8
        %s2164 = scalar_lea.vmem %s8, %s2163
      $region64: #{upblock_forward.1} parent=59 // pred_fallthru
        _
    $region60: #{upblock_forward.1} parent=5 // pred_fallthru
      _
  $region6: #{upblock_forward.1} parent=0 // loop_footer
    %s18 = sadd.s32 1, %s14
  $region7: #{upblock_forward.1} parent=0 // loop_footer_branch
    %13 = sbr.rel target = $region3
  $region8: #{upblock_forward.1} parent=0 // loop_exit
    _

</llo_original>
